<compile_context>
chip_gen: v6e
topology: v6e:2x2x1
jax: 0.10.0
libtpu: 0.0.40
codegen_flags: <defaults>
</compile_context>

<pallas_src>
import jax
import jax.numpy as jnp
from jax.experimental import pallas as pl
from jax.experimental.pallas import tpu as pltpu


def _round_up(x: int, m: int) -> int:
    return ((x + m - 1) // m) * m


# ---------------- Pallas kernel (fused conv + bias + ReLU + 2x2 max-pool) ----------------

def _conv_relu_pool_kernel(p00_ref, p01_ref, p10_ref, p11_ref, w_ref, b_ref, o_ref):
    # Four (tm, Kp) @ (Kp, N) matmuls on the MXU (one per pooling-window corner),
    # elementwise max, then bias + ReLU on the VPU, lane-dense store.
    # max_i(relu(x_i + b)) == relu(max_i(x_i) + b) since the bias is shared and ReLU is monotone.
    w = w_ref[...]
    m = jnp.dot(p00_ref[...], w, preferred_element_type=jnp.float32)
    for p_ref in (p01_ref, p10_ref, p11_ref):
        m = jnp.maximum(m, jnp.dot(p_ref[...], w, preferred_element_type=jnp.float32))
    o_ref[...] = jnp.maximum(m + b_ref[...], 0.0).astype(o_ref.dtype)


# ---------------- Per-layer wrapper ----------------

def conv3x3_relu_maxpool(x_nhwc, w_oihw, bias, *, out_dtype=jnp.bfloat16,
                         mxu_dtype=jnp.bfloat16, tile_m=1024):
    """Conv3x3 (padding=1) + ReLU + MaxPool2d(2) fused into one Pallas call.

    Output rows pack `pack = 128 // Cout` pooled pixels so the 128-lane store carries no padding.
    """
    B, H, W, Cin = x_nhwc.shape
    Cout = w_oihw.shape[0]
    Hp, Wp = H // 2, W // 2                  # MaxPool2d(2) floor semantics
    M = B * Hp * Wp                          # pooled output pixels
    K = 9 * Cin
    pack = max(1, 128 // Cout)               # pooled pixels packed per output row
    Kp = pack * K                            # packed LHS width
    Np = pack * Cout                         # real output lanes
    N = _round_up(Np, 128)                   # lane-dense store width (== Np for 16/32/64)
    M_pad = _round_up(M, pack)
    Mp = M_pad // pack                       # packed output rows

    # --- XLA glue: zero-pad + per-corner im2col, `pack` pixels concatenated per row ---
    xp = jnp.pad(x_nhwc, ((0, 0), (1, 1), (1, 1), (0, 0)))
    corners = []
    for py in range(2):
        for px in range(2):
            taps = [xp[:, py + dy::2, px + dx::2, :][:, :Hp, :Wp, :]
                    for dy in range(3) for dx in range(3)]
            c = jnp.stack(taps, axis=3).reshape(M, K)
            c = jnp.pad(c, ((0, M_pad - M), (0, 0))).reshape(Mp, Kp)
            corners.append(c.astype(mxu_dtype))

    # Weight (Cout, Cin, 3, 3) -> ((dy, dx, cin), Cout) -> block-diag (Kp, Np) -> pad to N lanes.
    w_mat = jnp.transpose(w_oihw, (2, 3, 1, 0)).reshape(K, Cout)
    w_blk = jnp.kron(jnp.eye(pack, dtype=w_mat.dtype), w_mat)              # (Kp, Np)
    w_blk = jnp.pad(w_blk, ((0, 0), (0, N - Np))).astype(mxu_dtype)        # (Kp, N)
    b_row = jnp.pad(jnp.tile(bias.astype(jnp.float32), pack).reshape(1, Np),
                    ((0, 0), (0, N - Np)))                                 # (1, N)

    # --- Pallas call: packed-M tiled over a parallel 1-D grid; >=2 steps when possible ---
    if Mp <= 8:
        tm = Mp                                             # single full block
    else:
        tm = min(tile_m, _round_up(pl.cdiv(Mp, 2), 8))      # at least 2 grid steps
    grid = (pl.cdiv(Mp, tm),)
    row_spec = pl.BlockSpec((tm, Kp), lambda i: (i, 0))

    out_itemsize = jnp.dtype(out_dtype).itemsize
    bytes_accessed = ((4 * Mp * Kp + Kp * N) * jnp.dtype(mxu_dtype).itemsize
                      + N * 4 + Mp * N * out_itemsize)
    cost = pl.CostEstimate(flops=2 * 4 * Mp * Kp * N, transcendentals=0,
                           bytes_accessed=bytes_accessed)

    out = pl.pallas_call(
        _conv_relu_pool_kernel,
        out_shape=jax.ShapeDtypeStruct((Mp, N), out_dtype),
        grid=grid,
        in_specs=[row_spec, row_spec, row_spec, row_spec,
                  pl.BlockSpec((Kp, N), lambda i: (0, 0)),
                  pl.BlockSpec((1, N), lambda i: (0, 0))],
        out_specs=pl.BlockSpec((tm, N), lambda i: (i, 0)),
        compiler_params=pltpu.CompilerParams(
            dimension_semantics=("parallel",),
            vmem_limit_bytes=32 * 1024 * 1024),
        cost_estimate=cost,
    )(*corners, w_blk, b_row)

    # Unpack: (Mp, N) -> (M, Cout) -> (B, Hp, Wp, Cout); padded rows/lanes sliced off.
    out = out[:, :Np].reshape(M_pad, Cout)[:M]
    return out.reshape(B, Hp, Wp, Cout)


# ---------------- Model ----------------

def init_params(feature_dim: int = 64, seed: int = 0):
    """Deterministic synthetic weights (PyTorch Conv2d-style uniform init)."""
    key = jax.random.PRNGKey(seed)
    shapes = [(16, 1, 3, 3), (32, 16, 3, 3), (feature_dim, 32, 3, 3)]
    params = []
    for shp in shapes:
        key, kw, kb = jax.random.split(key, 3)
        fan_in = shp[1] * shp[2] * shp[3]
        bound = 1.0 / (fan_in ** 0.5)
        w = jax.random.uniform(kw, shp, jnp.float32, -bound, bound)
        b = jax.random.uniform(kb, (shp[0],), jnp.float32, -bound, bound)
        params.append((w, b))
    return params


@jax.jit
def mnist_feature_extractor(x_nchw, params):
    """Forward pass: (B, 1, 28, 28) NCHW -> (B, feature_dim * 3 * 3)."""
    x = jnp.transpose(x_nchw, (0, 2, 3, 1))            # NCHW -> NHWC
    n_layers = len(params)
    for idx, (w, b) in enumerate(params):
        # Intermediate layers store bf16 (next layer casts to bf16 anyway); final layer f32.
        dt = jnp.float32 if idx == n_layers - 1 else jnp.bfloat16
        x = conv3x3_relu_maxpool(x, w, b, out_dtype=dt)
    B = x.shape[0]
    # Flatten in PyTorch NCHW order to match x.view(B, -1).
    return jnp.transpose(x, (0, 3, 1, 2)).reshape(B, -1)


# ---------------- Pure-JAX reference for self-check ----------------

def _reference(x_nchw, params):
    x = x_nchw
    for w, b in params:
        x = jax.lax.conv_general_dilated(
            x, w, window_strides=(1, 1), padding=((1, 1), (1, 1)),
            dimension_numbers=("NCHW", "OIHW", "NCHW"))
        x = jnp.maximum(x + b[None, :, None, None], 0.0)
        x = jax.lax.reduce_window(x, -jnp.inf, jax.lax.max,
                                  (1, 1, 2, 2), (1, 1, 2, 2), "VALID")
    return x.reshape(x.shape[0], -1)


if __name__ == "__main__":
    key = jax.random.PRNGKey(0)
    x = jax.random.normal(key, (2, 1, 28, 28), jnp.float32)  # MNIST-shaped input
    params = init_params(feature_dim=64, seed=0)

    out = jax.block_until_ready(mnist_feature_extractor(x, params))
    assert out.shape == (2, 64 * 3 * 3), out.shape

    ref = _reference(x, params)
    max_err = float(jnp.max(jnp.abs(out - ref)))
    # bf16 MXU inputs / bf16 intermediate stores with f32 accumulation -> loosened tolerance.
    assert jnp.allclose(out, ref, atol=3e-2, rtol=3e-2), max_err

    print("KERNEL_OK")
</pallas_src>

<mosaic_0001>
module attributes {stable_mosaic.version = 11 : i64} {
  func.func @_conv_relu_pool_kernel(%arg0: i32, %arg1: memref<32x72xbf16, #tpu.memory_space<vmem>>, %arg2: memref<32x72xbf16, #tpu.memory_space<vmem>>, %arg3: memref<32x72xbf16, #tpu.memory_space<vmem>>, %arg4: memref<32x72xbf16, #tpu.memory_space<vmem>>, %arg5: memref<72x128xbf16, #tpu.memory_space<vmem>>, %arg6: memref<1x128xf32, #tpu.memory_space<vmem>>, %arg7: memref<32x128xbf16, #tpu.memory_space<vmem>>) attributes {dimension_semantics = [#tpu.dimension_semantics<parallel>], iteration_bounds = array<i64: 2>, scalar_prefetch = 0 : i64, scratch_operands = 0 : i64, tpu.core_type = #tpu.core_type<tc>, window_params = [{transform_indices = @transform_0, window_bounds = array<i64: 32, 72>}, {transform_indices = @transform_1, window_bounds = array<i64: 32, 72>}, {transform_indices = @transform_2, window_bounds = array<i64: 32, 72>}, {transform_indices = @transform_3, window_bounds = array<i64: 32, 72>}, {pipeline_mode = #tpu.pipeline_mode<synchronous>, transform_indices = @transform_4, window_bounds = array<i64: 72, 128>}, {pipeline_mode = #tpu.pipeline_mode<synchronous>, transform_indices = @transform_5, window_bounds = array<i64: 1, 128>}, {transform_indices = @transform_6, window_bounds = array<i64: 32, 128>}]} {
    %c0 = arith.constant 0 : index
    %c0_0 = arith.constant 0 : index
    %0 = vector.load %arg5[%c0, %c0_0] : memref<72x128xbf16, #tpu.memory_space<vmem>>, vector<72x128xbf16>
    %c0_1 = arith.constant 0 : index
    %c0_2 = arith.constant 0 : index
    %1 = vector.load %arg1[%c0_1, %c0_2] : memref<32x72xbf16, #tpu.memory_space<vmem>>, vector<32x72xbf16>
    %cst = arith.constant dense<0.000000e+00> : vector<32x128xf32>
    %2 = tpu.matmul %1, %0, %cst {dimension_numbers = #tpu.dot_dimension_numbers<[1], [0], [0], [1], [0, 0, 1, 1], [], []>} : vector<32x72xbf16>, vector<72x128xbf16>, vector<32x128xf32> -> vector<32x128xf32>
    %c0_3 = arith.constant 0 : index
    %c0_4 = arith.constant 0 : index
    %3 = vector.load %arg2[%c0_3, %c0_4] : memref<32x72xbf16, #tpu.memory_space<vmem>>, vector<32x72xbf16>
    %cst_5 = arith.constant dense<0.000000e+00> : vector<32x128xf32>
    %4 = tpu.matmul %3, %0, %cst_5 {dimension_numbers = #tpu.dot_dimension_numbers<[1], [0], [0], [1], [0, 0, 1, 1], [], []>} : vector<32x72xbf16>, vector<72x128xbf16>, vector<32x128xf32> -> vector<32x128xf32>
    %5 = arith.maximumf %2, %4 : vector<32x128xf32>
    %c0_6 = arith.constant 0 : index
    %c0_7 = arith.constant 0 : index
    %6 = vector.load %arg3[%c0_6, %c0_7] : memref<32x72xbf16, #tpu.memory_space<vmem>>, vector<32x72xbf16>
    %cst_8 = arith.constant dense<0.000000e+00> : vector<32x128xf32>
    %7 = tpu.matmul %6, %0, %cst_8 {dimension_numbers = #tpu.dot_dimension_numbers<[1], [0], [0], [1], [0, 0, 1, 1], [], []>} : vector<32x72xbf16>, vector<72x128xbf16>, vector<32x128xf32> -> vector<32x128xf32>
    %8 = arith.maximumf %5, %7 : vector<32x128xf32>
    %c0_9 = arith.constant 0 : index
    %c0_10 = arith.constant 0 : index
    %9 = vector.load %arg4[%c0_9, %c0_10] : memref<32x72xbf16, #tpu.memory_space<vmem>>, vector<32x72xbf16>
    %cst_11 = arith.constant dense<0.000000e+00> : vector<32x128xf32>
    %10 = tpu.matmul %9, %0, %cst_11 {dimension_numbers = #tpu.dot_dimension_numbers<[1], [0], [0], [1], [0, 0, 1, 1], [], []>} : vector<32x72xbf16>, vector<72x128xbf16>, vector<32x128xf32> -> vector<32x128xf32>
    %11 = arith.maximumf %8, %10 : vector<32x128xf32>
    %c0_12 = arith.constant 0 : index
    %c0_13 = arith.constant 0 : index
    %12 = vector.load %arg6[%c0_12, %c0_13] : memref<1x128xf32, #tpu.memory_space<vmem>>, vector<1x128xf32>
    %13 = vector.broadcast %12 : vector<1x128xf32> to vector<32x128xf32>
    %14 = arith.addf %11, %13 : vector<32x128xf32>
    %cst_14 = arith.constant 0.000000e+00 : f32
    %15 = vector.broadcast %cst_14 : f32 to vector<32x128xf32>
    %16 = arith.maximumf %14, %15 : vector<32x128xf32>
    %17 = arith.truncf %16 : vector<32x128xf32> to vector<32x128xbf16>
    %c0_15 = arith.constant 0 : index
    %c0_16 = arith.constant 0 : index
    %18 = vector.load %arg7[%c0_15, %c0_16] : memref<32x128xbf16, #tpu.memory_space<vmem>>, vector<32x128xbf16>
    tpu.vector_store %arg7[%c0_15, %c0_16], %17 {strides = array<i32>} : memref<32x128xbf16, #tpu.memory_space<vmem>>, vector<32x128xbf16>,
    return
  }
  func.func @transform_0(%arg0: i32) -> (i32, i32) {
    %c0_i32 = arith.constant 0 : i32
    %c0_i32_0 = arith.constant 0 : i32
    return %arg0, %c0_i32 : i32, i32
  }
  func.func @transform_1(%arg0: i32) -> (i32, i32) {
    %c0_i32 = arith.constant 0 : i32
    %c0_i32_0 = arith.constant 0 : i32
    return %arg0, %c0_i32 : i32, i32
  }
  func.func @transform_2(%arg0: i32) -> (i32, i32) {
    %c0_i32 = arith.constant 0 : i32
    %c0_i32_0 = arith.constant 0 : i32
    return %arg0, %c0_i32 : i32, i32
  }
  func.func @transform_3(%arg0: i32) -> (i32, i32) {
    %c0_i32 = arith.constant 0 : i32
    %c0_i32_0 = arith.constant 0 : i32
    return %arg0, %c0_i32 : i32, i32
  }
  func.func @transform_4(%arg0: i32) -> (i32, i32) {
    %c0_i32 = arith.constant 0 : i32
    %c0_i32_0 = arith.constant 0 : i32
    %c0_i32_1 = arith.constant 0 : i32
    return %c0_i32, %c0_i32_0 : i32, i32
  }
  func.func @transform_5(%arg0: i32) -> (i32, i32) {
    %c0_i32 = arith.constant 0 : i32
    %c0_i32_0 = arith.constant 0 : i32
    %c0_i32_1 = arith.constant 0 : i32
    return %c0_i32, %c0_i32_0 : i32, i32
  }
  func.func @transform_6(%arg0: i32) -> (i32, i32) {
    %c0_i32 = arith.constant 0 : i32
    %c0_i32_0 = arith.constant 0 : i32
    return %arg0, %c0_i32 : i32, i32
  }
}

module attributes {stable_mosaic.version = 11 : i64} {
  func.func @_conv_relu_pool_kernel(%arg0: i32, %arg1: memref<16x576xbf16, #tpu.memory_space<vmem>>, %arg2: memref<16x576xbf16, #tpu.memory_space<vmem>>, %arg3: memref<16x576xbf16, #tpu.memory_space<vmem>>, %arg4: memref<16x576xbf16, #tpu.memory_space<vmem>>, %arg5: memref<576x128xbf16, #tpu.memory_space<vmem>>, %arg6: memref<1x128xf32, #tpu.memory_space<vmem>>, %arg7: memref<16x128xbf16, #tpu.memory_space<vmem>>) attributes {dimension_semantics = [#tpu.dimension_semantics<parallel>], iteration_bounds = array<i64: 2>, scalar_prefetch = 0 : i64, scratch_operands = 0 : i64, tpu.core_type = #tpu.core_type<tc>, window_params = [{transform_indices = @transform_0, window_bounds = array<i64: 16, 576>}, {transform_indices = @transform_1, window_bounds = array<i64: 16, 576>}, {transform_indices = @transform_2, window_bounds = array<i64: 16, 576>}, {transform_indices = @transform_3, window_bounds = array<i64: 16, 576>}, {pipeline_mode = #tpu.pipeline_mode<synchronous>, transform_indices = @transform_4, window_bounds = array<i64: 576, 128>}, {pipeline_mode = #tpu.pipeline_mode<synchronous>, transform_indices = @transform_5, window_bounds = array<i64: 1, 128>}, {transform_indices = @transform_6, window_bounds = array<i64: 16, 128>}]} {
    %c0 = arith.constant 0 : index
    %c0_0 = arith.constant 0 : index
    %0 = vector.load %arg5[%c0, %c0_0] : memref<576x128xbf16, #tpu.memory_space<vmem>>, vector<576x128xbf16>
    %c0_1 = arith.constant 0 : index
    %c0_2 = arith.constant 0 : index
    %1 = vector.load %arg1[%c0_1, %c0_2] : memref<16x576xbf16, #tpu.memory_space<vmem>>, vector<16x576xbf16>
    %cst = arith.constant dense<0.000000e+00> : vector<16x128xf32>
    %2 = tpu.matmul %1, %0, %cst {dimension_numbers = #tpu.dot_dimension_numbers<[1], [0], [0], [1], [0, 0, 1, 1], [], []>} : vector<16x576xbf16>, vector<576x128xbf16>, vector<16x128xf32> -> vector<16x128xf32>
    %c0_3 = arith.constant 0 : index
    %c0_4 = arith.constant 0 : index
    %3 = vector.load %arg2[%c0_3, %c0_4] : memref<16x576xbf16, #tpu.memory_space<vmem>>, vector<16x576xbf16>
    %cst_5 = arith.constant dense<0.000000e+00> : vector<16x128xf32>
    %4 = tpu.matmul %3, %0, %cst_5 {dimension_numbers = #tpu.dot_dimension_numbers<[1], [0], [0], [1], [0, 0, 1, 1], [], []>} : vector<16x576xbf16>, vector<576x128xbf16>, vector<16x128xf32> -> vector<16x128xf32>
    %5 = arith.maximumf %2, %4 : vector<16x128xf32>
    %c0_6 = arith.constant 0 : index
    %c0_7 = arith.constant 0 : index
    %6 = vector.load %arg3[%c0_6, %c0_7] : memref<16x576xbf16, #tpu.memory_space<vmem>>, vector<16x576xbf16>
    %cst_8 = arith.constant dense<0.000000e+00> : vector<16x128xf32>
    %7 = tpu.matmul %6, %0, %cst_8 {dimension_numbers = #tpu.dot_dimension_numbers<[1], [0], [0], [1], [0, 0, 1, 1], [], []>} : vector<16x576xbf16>, vector<576x128xbf16>, vector<16x128xf32> -> vector<16x128xf32>
    %8 = arith.maximumf %5, %7 : vector<16x128xf32>
    %c0_9 = arith.constant 0 : index
    %c0_10 = arith.constant 0 : index
    %9 = vector.load %arg4[%c0_9, %c0_10] : memref<16x576xbf16, #tpu.memory_space<vmem>>, vector<16x576xbf16>
    %cst_11 = arith.constant dense<0.000000e+00> : vector<16x128xf32>
    %10 = tpu.matmul %9, %0, %cst_11 {dimension_numbers = #tpu.dot_dimension_numbers<[1], [0], [0], [1], [0, 0, 1, 1], [], []>} : vector<16x576xbf16>, vector<576x128xbf16>, vector<16x128xf32> -> vector<16x128xf32>
    %11 = arith.maximumf %8, %10 : vector<16x128xf32>
    %c0_12 = arith.constant 0 : index
    %c0_13 = arith.constant 0 : index
    %12 = vector.load %arg6[%c0_12, %c0_13] : memref<1x128xf32, #tpu.memory_space<vmem>>, vector<1x128xf32>
    %13 = vector.broadcast %12 : vector<1x128xf32> to vector<16x128xf32>
    %14 = arith.addf %11, %13 : vector<16x128xf32>
    %cst_14 = arith.constant 0.000000e+00 : f32
    %15 = vector.broadcast %cst_14 : f32 to vector<16x128xf32>
    %16 = arith.maximumf %14, %15 : vector<16x128xf32>
    %17 = arith.truncf %16 : vector<16x128xf32> to vector<16x128xbf16>
    %c0_15 = arith.constant 0 : index
    %c0_16 = arith.constant 0 : index
    %18 = vector.load %arg7[%c0_15, %c0_16] : memref<16x128xbf16, #tpu.memory_space<vmem>>, vector<16x128xbf16>
    tpu.vector_store %arg7[%c0_15, %c0_16], %17 {strides = array<i32>} : memref<16x128xbf16, #tpu.memory_space<vmem>>, vector<16x128xbf16>,
    return
  }
  func.func @transform_0(%arg0: i32) -> (i32, i32) {
    %c0_i32 = arith.constant 0 : i32
    %c0_i32_0 = arith.constant 0 : i32
    return %arg0, %c0_i32 : i32, i32
  }
  func.func @transform_1(%arg0: i32) -> (i32, i32) {
    %c0_i32 = arith.constant 0 : i32
    %c0_i32_0 = arith.constant 0 : i32
    return %arg0, %c0_i32 : i32, i32
  }
  func.func @transform_2(%arg0: i32) -> (i32, i32) {
    %c0_i32 = arith.constant 0 : i32
    %c0_i32_0 = arith.constant 0 : i32
    return %arg0, %c0_i32 : i32, i32
  }
  func.func @transform_3(%arg0: i32) -> (i32, i32) {
    %c0_i32 = arith.constant 0 : i32
    %c0_i32_0 = arith.constant 0 : i32
    return %arg0, %c0_i32 : i32, i32
  }
  func.func @transform_4(%arg0: i32) -> (i32, i32) {
    %c0_i32 = arith.constant 0 : i32
    %c0_i32_0 = arith.constant 0 : i32
    %c0_i32_1 = arith.constant 0 : i32
    return %c0_i32, %c0_i32_0 : i32, i32
  }
  func.func @transform_5(%arg0: i32) -> (i32, i32) {
    %c0_i32 = arith.constant 0 : i32
    %c0_i32_0 = arith.constant 0 : i32
    %c0_i32_1 = arith.constant 0 : i32
    return %c0_i32, %c0_i32_0 : i32, i32
  }
  func.func @transform_6(%arg0: i32) -> (i32, i32) {
    %c0_i32 = arith.constant 0 : i32
    %c0_i32_0 = arith.constant 0 : i32
    return %arg0, %c0_i32 : i32, i32
  }
}

module attributes {stable_mosaic.version = 11 : i64} {
  func.func @_conv_relu_pool_kernel(%arg0: i32, %arg1: memref<8x576xbf16, #tpu.memory_space<vmem>>, %arg2: memref<8x576xbf16, #tpu.memory_space<vmem>>, %arg3: memref<8x576xbf16, #tpu.memory_space<vmem>>, %arg4: memref<8x576xbf16, #tpu.memory_space<vmem>>, %arg5: memref<576x128xbf16, #tpu.memory_space<vmem>>, %arg6: memref<1x128xf32, #tpu.memory_space<vmem>>, %arg7: memref<8x128xf32, #tpu.memory_space<vmem>>) attributes {dimension_semantics = [#tpu.dimension_semantics<parallel>], iteration_bounds = array<i64: 2>, scalar_prefetch = 0 : i64, scratch_operands = 0 : i64, tpu.core_type = #tpu.core_type<tc>, window_params = [{transform_indices = @transform_0, window_bounds = array<i64: 8, 576>}, {transform_indices = @transform_1, window_bounds = array<i64: 8, 576>}, {transform_indices = @transform_2, window_bounds = array<i64: 8, 576>}, {transform_indices = @transform_3, window_bounds = array<i64: 8, 576>}, {pipeline_mode = #tpu.pipeline_mode<synchronous>, transform_indices = @transform_4, window_bounds = array<i64: 576, 128>}, {pipeline_mode = #tpu.pipeline_mode<synchronous>, transform_indices = @transform_5, window_bounds = array<i64: 1, 128>}, {transform_indices = @transform_6, window_bounds = array<i64: 8, 128>}]} {
    %c0 = arith.constant 0 : index
    %c0_0 = arith.constant 0 : index
    %0 = vector.load %arg5[%c0, %c0_0] : memref<576x128xbf16, #tpu.memory_space<vmem>>, vector<576x128xbf16>
    %c0_1 = arith.constant 0 : index
    %c0_2 = arith.constant 0 : index
    %1 = vector.load %arg1[%c0_1, %c0_2] : memref<8x576xbf16, #tpu.memory_space<vmem>>, vector<8x576xbf16>
    %cst = arith.constant dense<0.000000e+00> : vector<8x128xf32>
    %2 = tpu.matmul %1, %0, %cst {dimension_numbers = #tpu.dot_dimension_numbers<[1], [0], [0], [1], [0, 0, 1, 1], [], []>} : vector<8x576xbf16>, vector<576x128xbf16>, vector<8x128xf32> -> vector<8x128xf32>
    %c0_3 = arith.constant 0 : index
    %c0_4 = arith.constant 0 : index
    %3 = vector.load %arg2[%c0_3, %c0_4] : memref<8x576xbf16, #tpu.memory_space<vmem>>, vector<8x576xbf16>
    %cst_5 = arith.constant dense<0.000000e+00> : vector<8x128xf32>
    %4 = tpu.matmul %3, %0, %cst_5 {dimension_numbers = #tpu.dot_dimension_numbers<[1], [0], [0], [1], [0, 0, 1, 1], [], []>} : vector<8x576xbf16>, vector<576x128xbf16>, vector<8x128xf32> -> vector<8x128xf32>
    %5 = arith.maximumf %2, %4 : vector<8x128xf32>
    %c0_6 = arith.constant 0 : index
    %c0_7 = arith.constant 0 : index
    %6 = vector.load %arg3[%c0_6, %c0_7] : memref<8x576xbf16, #tpu.memory_space<vmem>>, vector<8x576xbf16>
    %cst_8 = arith.constant dense<0.000000e+00> : vector<8x128xf32>
    %7 = tpu.matmul %6, %0, %cst_8 {dimension_numbers = #tpu.dot_dimension_numbers<[1], [0], [0], [1], [0, 0, 1, 1], [], []>} : vector<8x576xbf16>, vector<576x128xbf16>, vector<8x128xf32> -> vector<8x128xf32>
    %8 = arith.maximumf %5, %7 : vector<8x128xf32>
    %c0_9 = arith.constant 0 : index
    %c0_10 = arith.constant 0 : index
    %9 = vector.load %arg4[%c0_9, %c0_10] : memref<8x576xbf16, #tpu.memory_space<vmem>>, vector<8x576xbf16>
    %cst_11 = arith.constant dense<0.000000e+00> : vector<8x128xf32>
    %10 = tpu.matmul %9, %0, %cst_11 {dimension_numbers = #tpu.dot_dimension_numbers<[1], [0], [0], [1], [0, 0, 1, 1], [], []>} : vector<8x576xbf16>, vector<576x128xbf16>, vector<8x128xf32> -> vector<8x128xf32>
    %11 = arith.maximumf %8, %10 : vector<8x128xf32>
    %c0_12 = arith.constant 0 : index
    %c0_13 = arith.constant 0 : index
    %12 = vector.load %arg6[%c0_12, %c0_13] : memref<1x128xf32, #tpu.memory_space<vmem>>, vector<1x128xf32>
    %13 = vector.broadcast %12 : vector<1x128xf32> to vector<8x128xf32>
    %14 = arith.addf %11, %13 : vector<8x128xf32>
    %cst_14 = arith.constant 0.000000e+00 : f32
    %15 = vector.broadcast %cst_14 : f32 to vector<8x128xf32>
    %16 = arith.maximumf %14, %15 : vector<8x128xf32>
    %c0_15 = arith.constant 0 : index
    %c0_16 = arith.constant 0 : index
    %17 = vector.load %arg7[%c0_15, %c0_16] : memref<8x128xf32, #tpu.memory_space<vmem>>, vector<8x128xf32>
    tpu.vector_store %arg7[%c0_15, %c0_16], %16 {strides = array<i32>} : memref<8x128xf32, #tpu.memory_space<vmem>>, vector<8x128xf32>,
    return
  }
  func.func @transform_0(%arg0: i32) -> (i32, i32) {
    %c0_i32 = arith.constant 0 : i32
    %c0_i32_0 = arith.constant 0 : i32
    return %arg0, %c0_i32 : i32, i32
  }
  func.func @transform_1(%arg0: i32) -> (i32, i32) {
    %c0_i32 = arith.constant 0 : i32
    %c0_i32_0 = arith.constant 0 : i32
    return %arg0, %c0_i32 : i32, i32
  }
  func.func @transform_2(%arg0: i32) -> (i32, i32) {
    %c0_i32 = arith.constant 0 : i32
    %c0_i32_0 = arith.constant 0 : i32
    return %arg0, %c0_i32 : i32, i32
  }
  func.func @transform_3(%arg0: i32) -> (i32, i32) {
    %c0_i32 = arith.constant 0 : i32
    %c0_i32_0 = arith.constant 0 : i32
    return %arg0, %c0_i32 : i32, i32
  }
  func.func @transform_4(%arg0: i32) -> (i32, i32) {
    %c0_i32 = arith.constant 0 : i32
    %c0_i32_0 = arith.constant 0 : i32
    %c0_i32_1 = arith.constant 0 : i32
    return %c0_i32, %c0_i32_0 : i32, i32
  }
  func.func @transform_5(%arg0: i32) -> (i32, i32) {
    %c0_i32 = arith.constant 0 : i32
    %c0_i32_0 = arith.constant 0 : i32
    %c0_i32_1 = arith.constant 0 : i32
    return %c0_i32, %c0_i32_0 : i32, i32
  }
  func.func @transform_6(%arg0: i32) -> (i32, i32) {
    %c0_i32 = arith.constant 0 : i32
    %c0_i32_0 = arith.constant 0 : i32
    return %arg0, %c0_i32 : i32, i32
  }
}

</mosaic_0001>

<llo_original>
// kernel: mul.4
$region0: #{mul.4}
  %s0 = inlined_call_operand.vmem [shape: f32[3,3,16], index: 0, kind: input, shape index: {}]
  %s1 = inlined_call_operand.vmem [shape: f32[9,16], index: 1, kind: output, shape index: {}]
  $region1: #{mul.4} parent=0
    #allocation0 [shape = 'u8[12288]{0}', space=vmem, size = 0x3000, scoped, tag = 'scoped mem for input reshape']
    %s3 = sshll.u32 1, 4
    %s4 = ssub.s32 %s3, 1
    %s5 = smul.addr 4, 2
    %s6 = scalar_lea.vmem %s0, %s5
    %v7 = vld [vmem:[%s6] sm:%s4]
    %s8 = scalar_lea.vmem [#allocation0], 16
    %9 = vst [vmem:[%s8] sm:%s4] %v7
    %s10 = scalar_lea.vmem %s0, 4
    %v11 = vld [vmem:[%s10] sm:%s4]
    %s12 = scalar_lea.vmem [#allocation0], 8
    %13 = vst [vmem:[%s12] sm:%s4] %v11
    %v14 = vld [vmem:[%s0] sm:%s4]
    %15 = vst [vmem:[#allocation0] sm:%s4] %v14
    %v16 = vld [vmem:[#allocation0] sm:$0x7]
    %vm17 = vcmask 130048
    %18 = vst.msk [vmem:[%s1] sm:$0x7] %vm17, %v16
    %s19 = scalar_lea.vmem [#allocation0], 8
    %v20 = vld [vmem:[%s19] sm:$0x7]
    %vm21 = vcmask 130048
    %s22 = scalar_lea.vmem %s1, 3
    %23 = vst.msk [vmem:[%s22] sm:$0x7] %vm21, %v20
    %s24 = scalar_lea.vmem [#allocation0], 16
    %v25 = vld [vmem:[%s24] sm:$0x7]
    %vm26 = vcmask 130048
    %s27 = scalar_lea.vmem %s1, 6
    %28 = vst.msk [vmem:[%s27] sm:$0x7] %vm26, %v25

// kernel: tile.18
$region0: #{tile.18}
  #allocation0 [shape = 's32[1]{0}', space=sflag, size = 0x4, scoped, tag = 'scoped memory for tile.18']
  %s0 = inlined_call_operand.vmem [shape: f32[16], index: 0, kind: input, shape index: {}]
  %s1 = inlined_call_operand.vmem [shape: f32[8,16], index: 1, kind: output, shape index: {}]
  // Predicated region
  $region2: #{tile.18} parent=0 // pred_check
    _
  $region3: #{tile.18} parent=0 // pred_check_branch
    %3 = sbr.rel (0) target = $region5
  $region4: #{tile.18} parent=0 // pred_region
    _
  $region5: #{tile.18} parent=0 // pred_fallthru
    _
  %v4 = vld [vmem:[%s0] ss:$0 sm:$0xff]
  %5 = vst [vmem:[%s1] sm:$0xff] %v4

// kernel: tile.19
$region0: #{tile.19}
  %s0 = inlined_call_operand.vmem [shape: f32[8,16], index: 0, kind: input, shape index: {}]
  %s1 = inlined_call_operand.vmem [shape: f32[1,128], index: 1, kind: output, shape index: {}]
  $region1: #{tile.19} parent=0
    #allocation0 [shape = 'u8[4096]{0}', space=vmem, size = 0x1000, scoped, tag = 'scoped mem for output reshape']
    %v2 = vld [vmem:[%s0] sm:$0x1]
    %vm3 = vcmask 130048
    %4 = vst.msk [vmem:[#allocation0] sm:$0x1] %vm3, %v2
    %s5 = scalar_lea.vmem %s0, 7
    %v6 = vld [vmem:[%s5] sm:$0x1]
    %7 = vrot.lane.b32.xlu0 %v6, 112
    %v8 = vpop.permute.xlu0 %7
    %vm9 = vcmask 1048448
    %10 = vst.msk [vmem:[#allocation0] sm:$0x1] %vm9, %v8
    %s11 = scalar_lea.vmem %s0, 6
    %v12 = vld [vmem:[%s11] sm:$0x1]
    %13 = vrot.lane.b32.xlu0 %v12, 96
    %v14 = vpop.permute.xlu0 %13
    %vm15 = vcmask 917248
    %16 = vst.msk [vmem:[#allocation0] sm:$0x1] %vm15, %v14
    %s17 = scalar_lea.vmem %s0, 5
    %v18 = vld [vmem:[%s17] sm:$0x1]
    %19 = vrot.lane.b32.xlu0 %v18, 80
    %v20 = vpop.permute.xlu0 %19
    %vm21 = vcmask 786048
    %22 = vst.msk [vmem:[#allocation0] sm:$0x1] %vm21, %v20
    %s23 = scalar_lea.vmem %s0, 4
    %v24 = vld [vmem:[%s23] sm:$0x1]
    %25 = vrot.lane.b32.xlu0 %v24, 64
    %v26 = vpop.permute.xlu0 %25
    %vm27 = vcmask 654848
    %28 = vst.msk [vmem:[#allocation0] sm:$0x1] %vm27, %v26
    %s29 = scalar_lea.vmem %s0, 3
    %v30 = vld [vmem:[%s29] sm:$0x1]
    %31 = vrot.lane.b32.xlu0 %v30, 48
    %v32 = vpop.permute.xlu0 %31
    %vm33 = vcmask 523648
    %34 = vst.msk [vmem:[#allocation0] sm:$0x1] %vm33, %v32
    %s35 = scalar_lea.vmem %s0, 2
    %v36 = vld [vmem:[%s35] sm:$0x1]
    %37 = vrot.lane.b32.xlu0 %v36, 32
    %v38 = vpop.permute.xlu0 %37
    %vm39 = vcmask 392448
    %40 = vst.msk [vmem:[#allocation0] sm:$0x1] %vm39, %v38
    %s41 = scalar_lea.vmem %s0, 1
    %v42 = vld [vmem:[%s41] sm:$0x1]
    %43 = vrot.lane.b32.xlu0 %v42, 16
    %v44 = vpop.permute.xlu0 %43
    %vm45 = vcmask 261248
    %46 = vst.msk [vmem:[#allocation0] sm:$0x1] %vm45, %v44
    %s48 = sshll.u32 1, 1
    %s49 = ssub.s32 %s48, 1
    %v51 = vld [vmem:[#allocation0] sm:%s49]
    %s52 = sshll.u32 1, 1
    %s53 = ssub.s32 %s52, 1
    %54 = vst [vmem:[%s1] sm:%s53] %v51

// kernel: mnist_feature_extractor.3
$region0: #{mnist_feature_extractor.3}
  #allocation0 [shape = 'u32[]', space=smem, size = 0x4, offset = 0x4, fixed_abs, tag = 'smem constant byte address 0x4 - core index']
  #allocation1 [shape = 'u32[144,128]{1,0:T(1,128)}', space=vmem, size = 0x12000, scoped, tag = 'internal scratch']
  %s0 = inlined_call_operand.vmem [shape: bf16[49,72], index: 0, kind: input, shape index: {}]
  %s1 = inlined_call_operand.vmem [shape: bf16[49,72], index: 1, kind: input, shape index: {}]
  %s2 = inlined_call_operand.vmem [shape: bf16[49,72], index: 2, kind: input, shape index: {}]
  %s3 = inlined_call_operand.vmem [shape: bf16[49,72], index: 3, kind: input, shape index: {}]
  %s4 = inlined_call_operand.vmem [shape: bf16[72,128], index: 4, kind: input, shape index: {}]
  %s5 = inlined_call_operand.vmem [shape: f32[1,128], index: 5, kind: input, shape index: {}]
  %s6 = inlined_call_operand.vmem [shape: bf16[49,128], index: 6, kind: output, shape index: {}]
  %s7 = sld [smem:[#allocation0]]
  $region101: #{mnist_feature_extractor.3} parent=0
    _
  %s9 = ssub.s32 1, %s7
  %s10 = scalar_select 0, %s9, %s7
  $region1: #{mnist_feature_extractor.3} parent=0
    #allocation2 [shape = 'u8[16384]{0}', space=vmem, size = 0x4000, scoped, tag = 'output window, operand 0']
    loop: start=0, step=1, limit=4
    $region2: #{mnist_feature_extractor.3} parent=1 // loop_pre_header
      _
    $region3: #{mnist_feature_extractor.3} parent=1 // loop_header
      %s12 = sphi 0, %s16
      %p13 = scmp.ge.s32.totalorder %s12, 4
      %s22 = sphi 0, %s24
      %s25 = sphi 0, %s22
      %s26 = sphi 0, %s25
      %s42 = sphi 0, %s26
      %s48 = sphi 0, %s50
      %s51 = sphi 0, %s48
      %s52 = sphi 0, %s51
      %s68 = sphi 0, %s52
      %s74 = sphi 0, %s76
      %s77 = sphi 0, %s74
      %s78 = sphi 0, %s77
      %s94 = sphi 0, %s78
      %s100 = sphi 0, %s102
      %s103 = sphi 0, %s100
      %s104 = sphi 0, %s103
      %s120 = sphi 0, %s104
      %s124 = sphi 0, %s124
      %s126 = sphi 0, %s124
      %s127 = sphi 0, %s126
      %s141 = sphi 0, %s127
      %s145 = sphi 0, %s145
      %s147 = sphi 0, %s145
      %s148 = sphi 0, %s147
      %s162 = sphi 0, %s148
      %s168 = sphi 0, %s170
      %s171 = sphi 0, %s168
      %s172 = sphi 0, %s171
      %s188 = sphi 0, %s172
    $region4: #{mnist_feature_extractor.3} parent=1 // loop_header_branch
      %15 = sbr.rel (%p13) target = $region8
    $region5: #{mnist_feature_extractor.3} parent=1 // loop_body
      %s17 = ssub.s32 %s12, 1
      %s18 = ssub.s32 %s12, 2
      %s19 = sadd.s32 %s12, 1
      %s20 = ssub.s32 %s12, %s19
      %p21 = scmp.eq.s32.totalorder %s20, 0
      %s23 = sadd.s32 %s22, 1
      %s24 = scalar_select %p21, %s22, %s23
      %p27 = pneg %p21
      %p28 = scmp.eq.s32.totalorder %s12, 1
      %p29 = por %p27, %p28
      %p30 = scmp.ne.s32.totalorder %s22, %s25
      %p31 = scmp.eq.s32.totalorder %s12, 0
      %p32 = por %p30, %p31
      %p33 = scmp.ne.s32.totalorder %s22, %s25
      %p34 = scmp.eq.s32.totalorder %s17, 1
      %p35 = por %p33, %p34
      %p36 = scmp.ne.s32.totalorder %s25, %s26
      %p37 = scmp.eq.s32.totalorder %s17, 0
      %p38 = por %p36, %p37
      %p39 = scmp.ne.s32.totalorder %s25, %s26
      %p40 = scmp.eq.s32.totalorder %s18, 1
      %p41 = por %p39, %p40
      %p43 = scmp.ne.s32.totalorder %s26, %s42
      %p44 = scmp.eq.s32.totalorder %s18, 0
      %p45 = por %p43, %p44
      %s46 = ssub.s32 %s12, %s19
      %p47 = scmp.eq.s32.totalorder %s46, 0
      %s49 = sadd.s32 %s48, 1
      %s50 = scalar_select %p47, %s48, %s49
      %p53 = pneg %p47
      %p54 = scmp.eq.s32.totalorder %s12, 1
      %p55 = por %p53, %p54
      %p56 = scmp.ne.s32.totalorder %s48, %s51
      %p57 = scmp.eq.s32.totalorder %s12, 0
      %p58 = por %p56, %p57
      %p59 = scmp.ne.s32.totalorder %s48, %s51
      %p60 = scmp.eq.s32.totalorder %s17, 1
      %p61 = por %p59, %p60
      %p62 = scmp.ne.s32.totalorder %s51, %s52
      %p63 = scmp.eq.s32.totalorder %s17, 0
      %p64 = por %p62, %p63
      %p65 = scmp.ne.s32.totalorder %s51, %s52
      %p66 = scmp.eq.s32.totalorder %s18, 1
      %p67 = por %p65, %p66
      %p69 = scmp.ne.s32.totalorder %s52, %s68
      %p70 = scmp.eq.s32.totalorder %s18, 0
      %p71 = por %p69, %p70
      %s72 = ssub.s32 %s12, %s19
      %p73 = scmp.eq.s32.totalorder %s72, 0
      %s75 = sadd.s32 %s74, 1
      %s76 = scalar_select %p73, %s74, %s75
      %p79 = pneg %p73
      %p80 = scmp.eq.s32.totalorder %s12, 1
      %p81 = por %p79, %p80
      %p82 = scmp.ne.s32.totalorder %s74, %s77
      %p83 = scmp.eq.s32.totalorder %s12, 0
      %p84 = por %p82, %p83
      %p85 = scmp.ne.s32.totalorder %s74, %s77
      %p86 = scmp.eq.s32.totalorder %s17, 1
      %p87 = por %p85, %p86
      %p88 = scmp.ne.s32.totalorder %s77, %s78
      %p89 = scmp.eq.s32.totalorder %s17, 0
      %p90 = por %p88, %p89
      %p91 = scmp.ne.s32.totalorder %s77, %s78
      %p92 = scmp.eq.s32.totalorder %s18, 1
      %p93 = por %p91, %p92
      %p95 = scmp.ne.s32.totalorder %s78, %s94
      %p96 = scmp.eq.s32.totalorder %s18, 0
      %p97 = por %p95, %p96
      %s98 = ssub.s32 %s12, %s19
      %p99 = scmp.eq.s32.totalorder %s98, 0
      %s101 = sadd.s32 %s100, 1
      %s102 = scalar_select %p99, %s100, %s101
      %p105 = pneg %p99
      %p106 = scmp.eq.s32.totalorder %s12, 1
      %p107 = por %p105, %p106
      %p108 = scmp.ne.s32.totalorder %s100, %s103
      %p109 = scmp.eq.s32.totalorder %s12, 0
      %p110 = por %p108, %p109
      %p111 = scmp.ne.s32.totalorder %s100, %s103
      %p112 = scmp.eq.s32.totalorder %s17, 1
      %p113 = por %p111, %p112
      %p114 = scmp.ne.s32.totalorder %s103, %s104
      %p115 = scmp.eq.s32.totalorder %s17, 0
      %p116 = por %p114, %p115
      %p117 = scmp.ne.s32.totalorder %s103, %s104
      %p118 = scmp.eq.s32.totalorder %s18, 1
      %p119 = por %p117, %p118
      %p121 = scmp.ne.s32.totalorder %s104, %s120
      %p122 = scmp.eq.s32.totalorder %s18, 0
      %p123 = por %p121, %p122
      %s125 = sadd.s32 %s124, 1
      %p128 = scmp.eq.s32.totalorder %s12, 1
      %p129 = scmp.ne.s32.totalorder %s124, %s126
      %p130 = scmp.eq.s32.totalorder %s12, 0
      %p131 = por %p129, %p130
      %p132 = scmp.ne.s32.totalorder %s124, %s126
      %p133 = scmp.eq.s32.totalorder %s17, 1
      %p134 = por %p132, %p133
      %p135 = scmp.ne.s32.totalorder %s126, %s127
      %p136 = scmp.eq.s32.totalorder %s17, 0
      %p137 = por %p135, %p136
      %p138 = scmp.ne.s32.totalorder %s126, %s127
      %p139 = scmp.eq.s32.totalorder %s18, 1
      %p140 = por %p138, %p139
      %p142 = scmp.ne.s32.totalorder %s127, %s141
      %p143 = scmp.eq.s32.totalorder %s18, 0
      %p144 = por %p142, %p143
      %s146 = sadd.s32 %s145, 1
      %p149 = scmp.eq.s32.totalorder %s12, 1
      %p150 = scmp.ne.s32.totalorder %s145, %s147
      %p151 = scmp.eq.s32.totalorder %s12, 0
      %p152 = por %p150, %p151
      %p153 = scmp.ne.s32.totalorder %s145, %s147
      %p154 = scmp.eq.s32.totalorder %s17, 1
      %p155 = por %p153, %p154
      %p156 = scmp.ne.s32.totalorder %s147, %s148
      %p157 = scmp.eq.s32.totalorder %s17, 0
      %p158 = por %p156, %p157
      %p159 = scmp.ne.s32.totalorder %s147, %s148
      %p160 = scmp.eq.s32.totalorder %s18, 1
      %p161 = por %p159, %p160
      %p163 = scmp.ne.s32.totalorder %s148, %s162
      %p164 = scmp.eq.s32.totalorder %s18, 0
      %p165 = por %p163, %p164
      %s166 = ssub.s32 %s12, %s19
      %p167 = scmp.eq.s32.totalorder %s166, 0
      %s169 = sadd.s32 %s168, 1
      %s170 = scalar_select %p167, %s168, %s169
      %p173 = pneg %p167
      %p174 = scmp.eq.s32.totalorder %s12, 1
      %p175 = por %p173, %p174
      %p176 = scmp.ne.s32.totalorder %s168, %s171
      %p177 = scmp.eq.s32.totalorder %s12, 0
      %p178 = por %p176, %p177
      %p179 = scmp.ne.s32.totalorder %s168, %s171
      %p180 = scmp.eq.s32.totalorder %s17, 1
      %p181 = por %p179, %p180
      %p182 = scmp.ne.s32.totalorder %s171, %s172
      %p183 = scmp.eq.s32.totalorder %s17, 0
      %p184 = por %p182, %p183
      %p185 = scmp.ne.s32.totalorder %s171, %s172
      %p186 = scmp.eq.s32.totalorder %s18, 1
      %p187 = por %p185, %p186
      %p189 = scmp.ne.s32.totalorder %s172, %s188
      %p190 = scmp.eq.s32.totalorder %s18, 0
      %p191 = por %p189, %p190
      %p192 = scmp.le.s32.totalorder 1, %s12
      %p193 = scmp.lt.s32.totalorder %s12, 3
      %p194 = pnand %p192, %p193
      %p195 = pneg %p194
      // Predicated region
      $region9: #{mnist_feature_extractor.3} parent=5 // pred_check
        _
      $region10: #{mnist_feature_extractor.3} parent=5 // pred_check_branch
        %197 = sbr.rel (%p194) target = $region12
      $region11: #{mnist_feature_extractor.3} parent=5 // pred_region
        %s198 = ssub.s32 %s12, 1
        // Predicated region
        $region13: #{mnist_feature_extractor.3} parent=11 // pred_check
          %p199 = pneg %p137
        $region14: #{mnist_feature_extractor.3} parent=11 // pred_check_branch
          %201 = sbr.rel (%p199) target = $region16
        $region15: #{mnist_feature_extractor.3} parent=11 // pred_region
          _
        $region16: #{mnist_feature_extractor.3} parent=11 // pred_fallthru
          _
        // Predicated region
        $region17: #{mnist_feature_extractor.3} parent=11 // pred_check
          %p202 = pneg %p158
        $region18: #{mnist_feature_extractor.3} parent=11 // pred_check_branch
          %204 = sbr.rel (%p202) target = $region20
        $region19: #{mnist_feature_extractor.3} parent=11 // pred_region
          _
        $region20: #{mnist_feature_extractor.3} parent=11 // pred_fallthru
          _
      $region12: #{mnist_feature_extractor.3} parent=5 // pred_fallthru
        _
      %p205 = scmp.lt.s32.totalorder %s12, 2
      // Predicated region
      $region21: #{mnist_feature_extractor.3} parent=5 // pred_check
        %p206 = pneg %p205
      $region22: #{mnist_feature_extractor.3} parent=5 // pred_check_branch
        %208 = sbr.rel (%p206) target = $region24
      $region23: #{mnist_feature_extractor.3} parent=5 // pred_region
        // Predicated region
        $region25: #{mnist_feature_extractor.3} parent=23 // pred_check
          %p209 = pneg %p32
        $region26: #{mnist_feature_extractor.3} parent=23 // pred_check_branch
          %211 = sbr.rel (%p209) target = $region28
        $region27: #{mnist_feature_extractor.3} parent=23 // pred_region
          %s212 = smul.u32 4, %s12
          %s213 = ssub.s32 7, %s212
          %p214 = scmp.lt.s32.totalorder %s213, 4
          %s215 = scalar_select %p214, %s213, 4
          %s216 = smul.u32 64, %s215
          %p217 = scmp.lt.s32.totalorder %s212, 6
          %s218 = scalar_select %p217, %s212, 6
          %s219 = smul.addr %s218, 4
          %s220 = scalar_lea.vmem %s0, %s219
          %s221 = smul.u32 4, %s12
          %s222 = ssub.s32 7, %s221
          %p223 = scmp.lt.s32.totalorder %s222, 4
          %s224 = scalar_select %p223, %s222, 4
          %s225 = smul.u32 64, %s224
        $region28: #{mnist_feature_extractor.3} parent=23 // pred_fallthru
          _
        // Predicated region
        $region29: #{mnist_feature_extractor.3} parent=23 // pred_check
          %p226 = pneg %p58
        $region30: #{mnist_feature_extractor.3} parent=23 // pred_check_branch
          %228 = sbr.rel (%p226) target = $region32
        $region31: #{mnist_feature_extractor.3} parent=23 // pred_region
          %s229 = smul.u32 4, %s12
          %s230 = ssub.s32 7, %s229
          %p231 = scmp.lt.s32.totalorder %s230, 4
          %s232 = scalar_select %p231, %s230, 4
          %s233 = smul.u32 64, %s232
          %p234 = scmp.lt.s32.totalorder %s229, 6
          %s235 = scalar_select %p234, %s229, 6
          %s236 = smul.addr %s235, 4
          %s237 = scalar_lea.vmem %s1, %s236
          %s238 = smul.u32 4, %s12
          %s239 = ssub.s32 7, %s238
          %p240 = scmp.lt.s32.totalorder %s239, 4
          %s241 = scalar_select %p240, %s239, 4
          %s242 = smul.u32 64, %s241
        $region32: #{mnist_feature_extractor.3} parent=23 // pred_fallthru
          _
        // Predicated region
        $region33: #{mnist_feature_extractor.3} parent=23 // pred_check
          %p243 = pneg %p84
        $region34: #{mnist_feature_extractor.3} parent=23 // pred_check_branch
          %245 = sbr.rel (%p243) target = $region36
        $region35: #{mnist_feature_extractor.3} parent=23 // pred_region
          %s246 = smul.u32 4, %s12
          %s247 = ssub.s32 7, %s246
          %p248 = scmp.lt.s32.totalorder %s247, 4
          %s249 = scalar_select %p248, %s247, 4
          %s250 = smul.u32 64, %s249
          %p251 = scmp.lt.s32.totalorder %s246, 6
          %s252 = scalar_select %p251, %s246, 6
          %s253 = smul.addr %s252, 4
          %s254 = scalar_lea.vmem %s2, %s253
          %s255 = smul.u32 4, %s12
          %s256 = ssub.s32 7, %s255
          %p257 = scmp.lt.s32.totalorder %s256, 4
          %s258 = scalar_select %p257, %s256, 4
          %s259 = smul.u32 64, %s258
        $region36: #{mnist_feature_extractor.3} parent=23 // pred_fallthru
          _
        // Predicated region
        $region37: #{mnist_feature_extractor.3} parent=23 // pred_check
          %p260 = pneg %p110
        $region38: #{mnist_feature_extractor.3} parent=23 // pred_check_branch
          %262 = sbr.rel (%p260) target = $region40
        $region39: #{mnist_feature_extractor.3} parent=23 // pred_region
          %s263 = smul.u32 4, %s12
          %s264 = ssub.s32 7, %s263
          %p265 = scmp.lt.s32.totalorder %s264, 4
          %s266 = scalar_select %p265, %s264, 4
          %s267 = smul.u32 64, %s266
          %p268 = scmp.lt.s32.totalorder %s263, 6
          %s269 = scalar_select %p268, %s263, 6
          %s270 = smul.addr %s269, 4
          %s271 = scalar_lea.vmem %s3, %s270
          %s272 = smul.u32 4, %s12
          %s273 = ssub.s32 7, %s272
          %p274 = scmp.lt.s32.totalorder %s273, 4
          %s275 = scalar_select %p274, %s273, 4
          %s276 = smul.u32 64, %s275
        $region40: #{mnist_feature_extractor.3} parent=23 // pred_fallthru
          _
      $region24: #{mnist_feature_extractor.3} parent=5 // pred_fallthru
        _
      %p277 = scmp.le.s32.totalorder 1, %s12
      %p278 = scmp.lt.s32.totalorder %s12, 3
      %p279 = pnand %p277, %p278
      %p280 = pneg %p279
      // Predicated region
      $region41: #{mnist_feature_extractor.3} parent=5 // pred_check
        _
      $region42: #{mnist_feature_extractor.3} parent=5 // pred_check_branch
        %282 = sbr.rel (%p279) target = $region44
      $region43: #{mnist_feature_extractor.3} parent=5 // pred_region
        %s283 = ssub.s32 %s12, 1
        %s284 = smul.u32 4, %s17
        %s285 = ssub.s32 7, %s284
        %p286 = scmp.lt.s32.totalorder %s285, 4
        %s287 = scalar_select %p286, %s285, 4
        %s288 = smul.u32 64, %s287
        %p289 = scmp.lt.s32.totalorder %s284, 6
        %s290 = scalar_select %p289, %s284, 6
        %s291 = smul.addr %s290, 4
        %s292 = scalar_lea.vmem %s0, %s291
        %p293 = pneg %p38
        %p294 = pneg %p35
        %s295 = smul.u32 4, %s17
        %s296 = ssub.s32 7, %s295
        %p297 = scmp.lt.s32.totalorder %s296, 4
        %s298 = scalar_select %p297, %s296, 4
        %s299 = smul.u32 64, %s298
        %p300 = scmp.lt.s32.totalorder %s295, 6
        %s301 = scalar_select %p300, %s295, 6
        %s302 = smul.addr %s301, 4
        %s303 = scalar_lea.vmem %s1, %s302
        %p304 = pneg %p64
        %p305 = pneg %p61
        %s306 = smul.u32 4, %s17
        %s307 = ssub.s32 7, %s306
        %p308 = scmp.lt.s32.totalorder %s307, 4
        %s309 = scalar_select %p308, %s307, 4
        %s310 = smul.u32 64, %s309
        %p311 = scmp.lt.s32.totalorder %s306, 6
        %s312 = scalar_select %p311, %s306, 6
        %s313 = smul.addr %s312, 4
        %s314 = scalar_lea.vmem %s2, %s313
        %p315 = pneg %p90
        %p316 = pneg %p87
        %s317 = smul.u32 4, %s17
        %s318 = ssub.s32 7, %s317
        %p319 = scmp.lt.s32.totalorder %s318, 4
        %s320 = scalar_select %p319, %s318, 4
        %s321 = smul.u32 64, %s320
        %p322 = scmp.lt.s32.totalorder %s317, 6
        %s323 = scalar_select %p322, %s317, 6
        %s324 = smul.addr %s323, 4
        %s325 = scalar_lea.vmem %s3, %s324
        %p326 = pneg %p116
        %p327 = pneg %p113
        %p328 = pneg %p137
        %p329 = pneg %p134
        %p330 = pneg %p158
        %p331 = pneg %p155
        %p332 = pneg %p184
        %p333 = pneg %p181
        %s334 = sand.u32 %s171, 1
        %s335 = sand.u32 %s171, 1
        %s336 = smul.addr %s335, 16
        %s337 = scalar_lea.vmem [#allocation2], %s336
        %s338 = smul.u32 4, %s17
        %s339 = ssub.s32 7, %s338
        %p340 = scmp.lt.s32.totalorder %s339, 4
        %s341 = scalar_select %p340, %s339, 4
        %s342 = smul.u32 64, %s341
        %p343 = scmp.lt.s32.totalorder %s338, 6
        %s344 = scalar_select %p343, %s338, 6
        %s345 = smul.addr %s344, 4
        %s346 = scalar_lea.vmem %s0, %s345
        %s347 = smul.u32 4, %s17
        %s348 = ssub.s32 7, %s347
        %p349 = scmp.lt.s32.totalorder %s348, 4
        %s350 = scalar_select %p349, %s348, 4
        %s351 = smul.u32 64, %s350
        %s352 = smul.u32 4, %s17
        %s353 = ssub.s32 7, %s352
        %p354 = scmp.lt.s32.totalorder %s353, 4
        %s355 = scalar_select %p354, %s353, 4
        %s356 = smul.u32 64, %s355
        %p357 = scmp.lt.s32.totalorder %s352, 6
        %s358 = scalar_select %p357, %s352, 6
        %s359 = smul.addr %s358, 4
        %s360 = scalar_lea.vmem %s1, %s359
        %s361 = smul.u32 4, %s17
        %s362 = ssub.s32 7, %s361
        %p363 = scmp.lt.s32.totalorder %s362, 4
        %s364 = scalar_select %p363, %s362, 4
        %s365 = smul.u32 64, %s364
        %s366 = smul.u32 4, %s17
        %s367 = ssub.s32 7, %s366
        %p368 = scmp.lt.s32.totalorder %s367, 4
        %s369 = scalar_select %p368, %s367, 4
        %s370 = smul.u32 64, %s369
        %p371 = scmp.lt.s32.totalorder %s366, 6
        %s372 = scalar_select %p371, %s366, 6
        %s373 = smul.addr %s372, 4
        %s374 = scalar_lea.vmem %s2, %s373
        %s375 = smul.u32 4, %s17
        %s376 = ssub.s32 7, %s375
        %p377 = scmp.lt.s32.totalorder %s376, 4
        %s378 = scalar_select %p377, %s376, 4
        %s379 = smul.u32 64, %s378
        %s380 = smul.u32 4, %s17
        %s381 = ssub.s32 7, %s380
        %p382 = scmp.lt.s32.totalorder %s381, 4
        %s383 = scalar_select %p382, %s381, 4
        %s384 = smul.u32 64, %s383
        %p385 = scmp.lt.s32.totalorder %s380, 6
        %s386 = scalar_select %p385, %s380, 6
        %s387 = smul.addr %s386, 4
        %s388 = scalar_lea.vmem %s3, %s387
        %s389 = smul.u32 4, %s17
        %s390 = ssub.s32 7, %s389
        %p391 = scmp.lt.s32.totalorder %s390, 4
        %s392 = scalar_select %p391, %s390, 4
        %s393 = smul.u32 64, %s392
        %s394 = smul.u32 4, %s17
        %s395 = ssub.s32 7, %s394
        %p396 = scmp.lt.s32.totalorder %s395, 4
        %s397 = scalar_select %p396, %s395, 4
        %s398 = smul.u32 64, %s397
        %v400 = vld [vmem:[%s4] sm:$0xf]
        %v401 = vld [vmem:[%s4 + $0x4] sm:$0xf]
        %v402 = vld [vmem:[%s4 + $0x8] sm:$0xf]
        %v403 = vld [vmem:[%s4 + $0xc] sm:$0xf]
        %v404 = vld [vmem:[%s4 + $0x10] sm:$0xf]
        %v405 = vld [vmem:[%s4 + $0x14] sm:$0xf]
        %v406 = vld [vmem:[%s4 + $0x18] sm:$0xf]
        %v407 = vld [vmem:[%s4 + $0x1c] sm:$0xf]
        %v408 = vld [vmem:[%s4 + $0x20] sm:$0xf]
        %v409 = vld [vmem:[%s346] sm:$0xf]
        %v410 = vld [vmem:[%s346 + $0x4] sm:$0xf]
        %v411 = vld [vmem:[%s346 + $0x8] sm:$0xf]
        %v412 = vld [vmem:[%s346 + $0xc] sm:$0xf]
        %v417 = vunpack.c.l.b16 %v409
        %v418 = vunpack.c.l.b16 %v410
        %v419 = vunpack.c.l.b16 %v411
        %v420 = vunpack.c.l.b16 %v412
        %v421 = vpack.c.b16 %v418, %v417
        %v422 = vpack.c.b16 %v420, %v419
        %v432 = vunpack.c.l.b16 %v400
        %v433 = vunpack.c.l.b16 %v401
        %v434 = vunpack.c.l.b16 %v402
        %v435 = vunpack.c.l.b16 %v403
        %v436 = vunpack.c.l.b16 %v404
        %v437 = vunpack.c.l.b16 %v405
        %v438 = vunpack.c.l.b16 %v406
        %v439 = vunpack.c.l.b16 %v407
        %v440 = vunpack.c.l.b16 %v408
        %v441 = vpack.c.b16 %v433, %v432
        %v442 = vpack.c.b16 %v435, %v434
        %v443 = vpack.c.b16 %v437, %v436
        %v444 = vpack.c.b16 %v439, %v438
        %v445 = vpack.c.b16 %v440, %v440
        %vm450 = vcmask 588800
        %v452 = vsel %vm450, %v421, 0
        %v455 = vsel %vm450, %v422, 0
        %vm457 = vcmask 1043456
        %v459 = vsel %vm457, %v445, 0
        %461 = vmatprep.subr.bf16.mxu0 0
        %462 = vmatpush1.bf16.msra.mxu0 0
        %463 = vmatprep.subr.bf16.mxu0 0
        %464 = vmatpush1.bf16.msra.mxu0 0
        %465 = vmatprep.subr.bf16.mxu0 0
        %466 = vmatpush1.bf16.msra.mxu0 0
        %467 = vmatprep.subr.bf16.mxu0 0
        %468 = vmatpush1.bf16.msra.mxu0 %v459
        %469 = vmatprep.subr.bf16.mxu0 0
        %470 = vmatpush1.bf16.msra.mxu0 %v444
        %471 = vmatprep.subr.bf16.mxu0 0
        %472 = vmatpush1.bf16.msra.mxu0 %v443
        %473 = vmatprep.subr.bf16.mxu0 0
        %474 = vmatpush1.bf16.msra.mxu0 %v442
        %475 = vmatprep.subr.bf16.mxu0 0
        %476 = vmatpush1.bf16.msra.mxu0 %v441
        %477 = vmatprep.subr.bf16.mxu0 0
        %478 = vmatpush2.bf16.msra.mxu0 0
        %479 = vmatprep.subr.bf16.mxu0 0
        %480 = vmatpush2.bf16.msra.mxu0 0
        %481 = vmatprep.subr.bf16.mxu0 0
        %482 = vmatpush2.bf16.msra.mxu0 0
        %483 = vmatprep.subr.bf16.mxu0 0
        %484 = vmatpush2.bf16.msra.mxu0 0
        %485 = vmatprep.subr.bf16.mxu0 0
        %486 = vmatpush2.bf16.msra.mxu0 0
        %487 = vmatprep.subr.bf16.mxu0 0
        %488 = vmatpush2.bf16.msra.mxu0 0
        %489 = vmatprep.subr.bf16.mxu0 0
        %490 = vmatpush2.bf16.msra.mxu0 0
        %491 = vmatprep.subr.bf16.mxu0 0
        %492 = vmatpush2.bf16.msra.mxu0 0
        %493 = vmatprep.mubr.bf16.mxu0 0
        %494 = vmatmul.mubr.bf16.gmra.mxu0 %v452
        %v495 = vpop.f32.mrf.mxu0
        %v496 = vadd.f32 0.0, %v495
        %v497 = vpop.f32.mrf.mxu0
        %v498 = vpop.f32.mrf.mxu0
        %v499 = vadd.f32 0.0, %v498
        %v500 = vpop.f32.mrf.mxu0
        %501 = vmatprep.mubr.bf16.mxu0 0
        %502 = vmatmul.mubr.bf16.gmra.mxu0 %v455
        %v503 = vpop.f32.mrf.mxu0
        %v504 = vadd.f32 0.0, %v503
        %v505 = vpop.f32.mrf.mxu0
        %v506 = vpop.f32.mrf.mxu0
        %v507 = vadd.f32 0.0, %v506
        %v508 = vpop.f32.mrf.mxu0
        %509 = vdwg.mxu0
        %v510 = vld [vmem:[%s360] sm:$0xf]
        %v511 = vld [vmem:[%s360 + $0x4] sm:$0xf]
        %v512 = vld [vmem:[%s360 + $0x8] sm:$0xf]
        %v513 = vld [vmem:[%s360 + $0xc] sm:$0xf]
        %v518 = vunpack.c.l.b16 %v510
        %v519 = vunpack.c.l.b16 %v511
        %v520 = vunpack.c.l.b16 %v512
        %v521 = vunpack.c.l.b16 %v513
        %v522 = vpack.c.b16 %v519, %v518
        %v523 = vpack.c.b16 %v521, %v520
        %v525 = vsel %vm450, %v522, 0
        %v528 = vsel %vm450, %v523, 0
        %530 = vmatprep.subr.bf16.mxu0 0
        %531 = vmatpush1.bf16.msra.mxu0 0
        %532 = vmatprep.subr.bf16.mxu0 0
        %533 = vmatpush1.bf16.msra.mxu0 0
        %534 = vmatprep.subr.bf16.mxu0 0
        %535 = vmatpush1.bf16.msra.mxu0 0
        %536 = vmatprep.subr.bf16.mxu0 0
        %537 = vmatpush1.bf16.msra.mxu0 %v459
        %538 = vmatprep.subr.bf16.mxu0 0
        %539 = vmatpush1.bf16.msra.mxu0 %v444
        %540 = vmatprep.subr.bf16.mxu0 0
        %541 = vmatpush1.bf16.msra.mxu0 %v443
        %542 = vmatprep.subr.bf16.mxu0 0
        %543 = vmatpush1.bf16.msra.mxu0 %v442
        %544 = vmatprep.subr.bf16.mxu0 0
        %545 = vmatpush1.bf16.msra.mxu0 %v441
        %546 = vmatprep.subr.bf16.mxu0 0
        %547 = vmatpush2.bf16.msra.mxu0 0
        %548 = vmatprep.subr.bf16.mxu0 0
        %549 = vmatpush2.bf16.msra.mxu0 0
        %550 = vmatprep.subr.bf16.mxu0 0
        %551 = vmatpush2.bf16.msra.mxu0 0
        %552 = vmatprep.subr.bf16.mxu0 0
        %553 = vmatpush2.bf16.msra.mxu0 0
        %554 = vmatprep.subr.bf16.mxu0 0
        %555 = vmatpush2.bf16.msra.mxu0 0
        %556 = vmatprep.subr.bf16.mxu0 0
        %557 = vmatpush2.bf16.msra.mxu0 0
        %558 = vmatprep.subr.bf16.mxu0 0
        %559 = vmatpush2.bf16.msra.mxu0 0
        %560 = vmatprep.subr.bf16.mxu0 0
        %561 = vmatpush2.bf16.msra.mxu0 0
        %562 = vmatprep.mubr.bf16.mxu0 0
        %563 = vmatmul.mubr.bf16.gmra.mxu0 %v525
        %v564 = vpop.f32.mrf.mxu0
        %v565 = vadd.f32 0.0, %v564
        %v566 = vpop.f32.mrf.mxu0
        %v567 = vpop.f32.mrf.mxu0
        %v568 = vadd.f32 0.0, %v567
        %v569 = vpop.f32.mrf.mxu0
        %570 = vmatprep.mubr.bf16.mxu0 0
        %571 = vmatmul.mubr.bf16.gmra.mxu0 %v528
        %v572 = vpop.f32.mrf.mxu0
        %v573 = vadd.f32 0.0, %v572
        %v574 = vpop.f32.mrf.mxu0
        %v575 = vpop.f32.mrf.mxu0
        %v576 = vadd.f32 0.0, %v575
        %v577 = vpop.f32.mrf.mxu0
        %578 = vdwg.mxu0
        %v579 = vmax.f32 %v496, %v565
        %v580 = vmax.f32 %v499, %v568
        %v581 = vmax.f32 %v504, %v573
        %v582 = vmax.f32 %v507, %v576
        %v583 = vld [vmem:[%s374] sm:$0xf]
        %v584 = vld [vmem:[%s374 + $0x4] sm:$0xf]
        %v585 = vld [vmem:[%s374 + $0x8] sm:$0xf]
        %v586 = vld [vmem:[%s374 + $0xc] sm:$0xf]
        %v591 = vunpack.c.l.b16 %v583
        %v592 = vunpack.c.l.b16 %v584
        %v593 = vunpack.c.l.b16 %v585
        %v594 = vunpack.c.l.b16 %v586
        %v595 = vpack.c.b16 %v592, %v591
        %v596 = vpack.c.b16 %v594, %v593
        %v598 = vsel %vm450, %v595, 0
        %v601 = vsel %vm450, %v596, 0
        %603 = vmatprep.subr.bf16.mxu0 0
        %604 = vmatpush1.bf16.msra.mxu0 0
        %605 = vmatprep.subr.bf16.mxu0 0
        %606 = vmatpush1.bf16.msra.mxu0 0
        %607 = vmatprep.subr.bf16.mxu0 0
        %608 = vmatpush1.bf16.msra.mxu0 0
        %609 = vmatprep.subr.bf16.mxu0 0
        %610 = vmatpush1.bf16.msra.mxu0 %v459
        %611 = vmatprep.subr.bf16.mxu0 0
        %612 = vmatpush1.bf16.msra.mxu0 %v444
        %613 = vmatprep.subr.bf16.mxu0 0
        %614 = vmatpush1.bf16.msra.mxu0 %v443
        %615 = vmatprep.subr.bf16.mxu0 0
        %616 = vmatpush1.bf16.msra.mxu0 %v442
        %617 = vmatprep.subr.bf16.mxu0 0
        %618 = vmatpush1.bf16.msra.mxu0 %v441
        %619 = vmatprep.subr.bf16.mxu0 0
        %620 = vmatpush2.bf16.msra.mxu0 0
        %621 = vmatprep.subr.bf16.mxu0 0
        %622 = vmatpush2.bf16.msra.mxu0 0
        %623 = vmatprep.subr.bf16.mxu0 0
        %624 = vmatpush2.bf16.msra.mxu0 0
        %625 = vmatprep.subr.bf16.mxu0 0
        %626 = vmatpush2.bf16.msra.mxu0 0
        %627 = vmatprep.subr.bf16.mxu0 0
        %628 = vmatpush2.bf16.msra.mxu0 0
        %629 = vmatprep.subr.bf16.mxu0 0
        %630 = vmatpush2.bf16.msra.mxu0 0
        %631 = vmatprep.subr.bf16.mxu0 0
        %632 = vmatpush2.bf16.msra.mxu0 0
        %633 = vmatprep.subr.bf16.mxu0 0
        %634 = vmatpush2.bf16.msra.mxu0 0
        %635 = vmatprep.mubr.bf16.mxu0 0
        %636 = vmatmul.mubr.bf16.gmra.mxu0 %v598
        %v637 = vpop.f32.mrf.mxu0
        %v638 = vadd.f32 0.0, %v637
        %v639 = vpop.f32.mrf.mxu0
        %v640 = vpop.f32.mrf.mxu0
        %v641 = vadd.f32 0.0, %v640
        %v642 = vpop.f32.mrf.mxu0
        %643 = vmatprep.mubr.bf16.mxu0 0
        %644 = vmatmul.mubr.bf16.gmra.mxu0 %v601
        %v645 = vpop.f32.mrf.mxu0
        %v646 = vadd.f32 0.0, %v645
        %v647 = vpop.f32.mrf.mxu0
        %v648 = vpop.f32.mrf.mxu0
        %v649 = vadd.f32 0.0, %v648
        %v650 = vpop.f32.mrf.mxu0
        %651 = vdwg.mxu0
        %v652 = vmax.f32 %v579, %v638
        %v653 = vmax.f32 %v580, %v641
        %v654 = vmax.f32 %v581, %v646
        %v655 = vmax.f32 %v582, %v649
        %v656 = vld [vmem:[%s388] sm:$0xf]
        %v657 = vld [vmem:[%s388 + $0x4] sm:$0xf]
        %v658 = vld [vmem:[%s388 + $0x8] sm:$0xf]
        %v659 = vld [vmem:[%s388 + $0xc] sm:$0xf]
        %v664 = vunpack.c.l.b16 %v656
        %v665 = vunpack.c.l.b16 %v657
        %v666 = vunpack.c.l.b16 %v658
        %v667 = vunpack.c.l.b16 %v659
        %v668 = vpack.c.b16 %v665, %v664
        %v669 = vpack.c.b16 %v667, %v666
        %v671 = vsel %vm450, %v668, 0
        %v674 = vsel %vm450, %v669, 0
        %676 = vmatprep.subr.bf16.mxu0 0
        %677 = vmatpush1.bf16.msra.mxu0 0
        %678 = vmatprep.subr.bf16.mxu0 0
        %679 = vmatpush1.bf16.msra.mxu0 0
        %680 = vmatprep.subr.bf16.mxu0 0
        %681 = vmatpush1.bf16.msra.mxu0 0
        %682 = vmatprep.subr.bf16.mxu0 0
        %683 = vmatpush1.bf16.msra.mxu0 %v459
        %684 = vmatprep.subr.bf16.mxu0 0
        %685 = vmatpush1.bf16.msra.mxu0 %v444
        %686 = vmatprep.subr.bf16.mxu0 0
        %687 = vmatpush1.bf16.msra.mxu0 %v443
        %688 = vmatprep.subr.bf16.mxu0 0
        %689 = vmatpush1.bf16.msra.mxu0 %v442
        %690 = vmatprep.subr.bf16.mxu0 0
        %691 = vmatpush1.bf16.msra.mxu0 %v441
        %692 = vmatprep.subr.bf16.mxu0 0
        %693 = vmatpush2.bf16.msra.mxu0 0
        %694 = vmatprep.subr.bf16.mxu0 0
        %695 = vmatpush2.bf16.msra.mxu0 0
        %696 = vmatprep.subr.bf16.mxu0 0
        %697 = vmatpush2.bf16.msra.mxu0 0
        %698 = vmatprep.subr.bf16.mxu0 0
        %699 = vmatpush2.bf16.msra.mxu0 0
        %700 = vmatprep.subr.bf16.mxu0 0
        %701 = vmatpush2.bf16.msra.mxu0 0
        %702 = vmatprep.subr.bf16.mxu0 0
        %703 = vmatpush2.bf16.msra.mxu0 0
        %704 = vmatprep.subr.bf16.mxu0 0
        %705 = vmatpush2.bf16.msra.mxu0 0
        %706 = vmatprep.subr.bf16.mxu0 0
        %707 = vmatpush2.bf16.msra.mxu0 0
        %708 = vmatprep.mubr.bf16.mxu0 0
        %709 = vmatmul.mubr.bf16.gmra.mxu0 %v671
        %v710 = vpop.f32.mrf.mxu0
        %v711 = vadd.f32 0.0, %v710
        %v712 = vpop.f32.mrf.mxu0
        %v713 = vpop.f32.mrf.mxu0
        %v714 = vadd.f32 0.0, %v713
        %v715 = vpop.f32.mrf.mxu0
        %716 = vmatprep.mubr.bf16.mxu0 0
        %717 = vmatmul.mubr.bf16.gmra.mxu0 %v674
        %v718 = vpop.f32.mrf.mxu0
        %v719 = vadd.f32 0.0, %v718
        %v720 = vpop.f32.mrf.mxu0
        %v721 = vpop.f32.mrf.mxu0
        %v722 = vadd.f32 0.0, %v721
        %v723 = vpop.f32.mrf.mxu0
        %724 = vdwg.mxu0
        %v725 = vmax.f32 %v652, %v711
        %v726 = vmax.f32 %v653, %v714
        %v727 = vmax.f32 %v654, %v719
        %v728 = vmax.f32 %v655, %v722
        %v729 = vld [vmem:[%s5] sm:$0x1]
        %v731 = vlaneseq
        %v732 = vshrl.u32 %v731, 7
        %v733 = vsub.s32 0, %v732
        %v734 = vrot.slane %v729, %v733
        %v736 = vadd.f32 %v725, %v734
        %v737 = vadd.f32 %v726, %v734
        %v738 = vadd.f32 %v727, %v734
        %v739 = vadd.f32 %v728, %v734
        %v740 = vmax.f32 %v736, 0.0
        %v741 = vmax.f32 %v737, 0.0
        %v742 = vmax.f32 %v738, 0.0
        %v743 = vmax.f32 %v739, 0.0
        %v744 = vpack.c.bf16 %v741, %v740
        %v745 = vpack.c.bf16 %v743, %v742
        %v748 = vunpack.c.l.b16 %v744
        %v749 = vunpack.c.h.b16 %v744
        %v750 = vunpack.c.l.b16 %v745
        %v751 = vunpack.c.h.b16 %v745
        %v752 = vpack.c.b16 %v748, %v748
        %v753 = vpack.c.b16 %v749, %v749
        %v754 = vpack.c.b16 %v750, %v750
        %v755 = vpack.c.b16 %v751, %v751
        %760 = vst [vmem:[%s337] sm:$0xf] %v752
        %761 = vst [vmem:[%s337 + $0x4] sm:$0xf] %v753
        %762 = vst [vmem:[%s337 + $0x8] sm:$0xf] %v754
        %763 = vst [vmem:[%s337 + $0xc] sm:$0xf] %v755
        %s764 = sand.u32 %s171, 1
        %s765 = sand.u32 %s171, 1
        %s766 = smul.addr %s765, 16
        %s767 = scalar_lea.vmem [#allocation2], %s766
        // Predicated region
        $region45: #{mnist_feature_extractor.3} parent=43 // pred_check
          %p768 = pneg %p181
        $region46: #{mnist_feature_extractor.3} parent=43 // pred_check_branch
          %770 = sbr.rel (%p768) target = $region48
        $region47: #{mnist_feature_extractor.3} parent=43 // pred_region
          %s771 = smul.u32 4, %s17
          %s772 = ssub.s32 7, %s771
          %p773 = scmp.lt.s32.totalorder %s772, 4
          %s774 = scalar_select %p773, %s772, 4
          %s775 = smul.u32 64, %s774
          %p776 = scmp.ne.s32.totalorder 0, %s775
          %s777 = smul.addr %s771, 4
          %s778 = scalar_lea.vmem %s6, %s777
          // Predicated region
          $region49: #{mnist_feature_extractor.3} parent=47 // pred_check
            %p779 = pneg %p776
          $region50: #{mnist_feature_extractor.3} parent=47 // pred_check_branch
            %781 = sbr.rel (%p779) target = $region52
          $region51: #{mnist_feature_extractor.3} parent=47 // pred_region
            // Predicated region
            $region53: #{mnist_feature_extractor.3} parent=51 // pred_check
              _
            $region54: #{mnist_feature_extractor.3} parent=51 // pred_check_branch
              %783 = sbr.rel target = $region56
            $region55: #{mnist_feature_extractor.3} parent=51 // pred_region
              // Predicated region
              $region75: #{mnist_feature_extractor.3} parent=55 // pred_check
                _
              $region76: #{mnist_feature_extractor.3} parent=55 // pred_check_branch
                %839 = sbr.rel (0) target = $region78
              $region77: #{mnist_feature_extractor.3} parent=55 // pred_region
                %s841 = ssub.s32 16, 1
                %s842 = sshrl.u32 %s774, 2
                // While loop
                $region79: #{mnist_feature_extractor.3} parent=77 // loop_pre_header
                  _
                $region80: #{mnist_feature_extractor.3} parent=77 // loop_header
                  %s844 = sphi 0, %s846
                  %p845 = scmp.ge.s32.totalorder %s844, %s842
                  %s849 = sphi 0, %s862
                  %s850 = sphi %s767, %s865
                  %s851 = sphi %s778, %s866
                $region81: #{mnist_feature_extractor.3} parent=77 // loop_header_branch
                  %848 = sbr.rel (%p845) target = $region85
                $region82: #{mnist_feature_extractor.3} parent=77 // loop_body
                  %v852 = vld [vmem:[%s850] sm:%s841]
                  %853 = vst [vmem:[%s851] sm:%s841] %v852
                  %v854 = vld [vmem:[%s850 + $0x4] sm:%s841]
                  %855 = vst [vmem:[%s851 + $0x4] sm:%s841] %v854
                  %v856 = vld [vmem:[%s850 + $0x8] sm:%s841]
                  %857 = vst [vmem:[%s851 + $0x8] sm:%s841] %v856
                  %v858 = vld [vmem:[%s850 + $0xc] sm:%s841]
                  %859 = vst [vmem:[%s851 + $0xc] sm:%s841] %v858
                  %s860 = sadd.s32 1, %s849
                  %p861 = scmp.ge.s32.totalorder %s860, %s842
                  %s862 = scalar_select %p861, 0, %s860
                  %s863 = smul.u32 %s862, 16
                  %s864 = smul.u32 %s862, 16
                  %s865 = scalar_lea.vmem %s767, %s863 [#allocation2]
                  %s866 = scalar_lea.vmem %s778, %s864
                $region83: #{mnist_feature_extractor.3} parent=77 // loop_footer
                  %s846 = sadd.s32 %s844, 1
                $region84: #{mnist_feature_extractor.3} parent=77 // loop_footer_branch
                  %843 = sbr.rel target = $region80
                $region85: #{mnist_feature_extractor.3} parent=77 // loop_exit
                  _
                %s867 = sshrl.u32 %s774, 2
                %s868 = sand.u32 %s774, 3
                %s869 = smul.u32 %s867, 4
                %s870 = smul.u32 4, %s869
                %s871 = scalar_lea.vmem %s767, %s870 [#allocation2]
                %s872 = smul.u32 4, %s869
                %s873 = scalar_lea.vmem %s778, %s872
                // While loop
                $region86: #{mnist_feature_extractor.3} parent=77 // loop_pre_header
                  _
                $region87: #{mnist_feature_extractor.3} parent=77 // loop_header
                  %s875 = sphi 0, %s877
                  %p876 = scmp.ge.s32.totalorder %s875, %s868
                  %s880 = sphi 0, %s887
                  %s881 = sphi %s871, %s890
                  %s882 = sphi %s873, %s891
                $region88: #{mnist_feature_extractor.3} parent=77 // loop_header_branch
                  %879 = sbr.rel (%p876) target = $region92
                $region89: #{mnist_feature_extractor.3} parent=77 // loop_body
                  %v883 = vld [vmem:[%s881] sm:%s841]
                  %884 = vst [vmem:[%s882] sm:%s841] %v883
                  %s885 = sadd.s32 1, %s880
                  %p886 = scmp.ge.s32.totalorder %s885, %s868
                  %s887 = scalar_select %p886, 0, %s885
                  %s888 = smul.u32 %s887, 4
                  %s889 = smul.u32 %s887, 4
                  %s890 = scalar_lea.vmem %s871, %s888 [#allocation2]
                  %s891 = scalar_lea.vmem %s873, %s889
                $region90: #{mnist_feature_extractor.3} parent=77 // loop_footer
                  %s877 = sadd.s32 %s875, 1
                $region91: #{mnist_feature_extractor.3} parent=77 // loop_footer_branch
                  %874 = sbr.rel target = $region87
                $region92: #{mnist_feature_extractor.3} parent=77 // loop_exit
                  _
              $region78: #{mnist_feature_extractor.3} parent=55 // pred_fallthru
                _
            $region56: #{mnist_feature_extractor.3} parent=51 // pred_fallthru
              _
            // Predicated region
            $region57: #{mnist_feature_extractor.3} parent=51 // pred_check
              _
            $region58: #{mnist_feature_extractor.3} parent=51 // pred_check_branch
              %785 = sbr.rel (0) target = $region60
            $region59: #{mnist_feature_extractor.3} parent=51 // pred_region
              %s787 = ssub.s32 16, 1
              %s788 = sshrl.u32 %s774, 2
              // While loop
              $region61: #{mnist_feature_extractor.3} parent=59 // loop_pre_header
                _
              $region62: #{mnist_feature_extractor.3} parent=59 // loop_header
                %s790 = sphi 0, %s792
                %p791 = scmp.ge.s32.totalorder %s790, %s788
                %s795 = sphi 0, %s808
                %s796 = sphi %s767, %s811
                %s797 = sphi %s778, %s812
              $region63: #{mnist_feature_extractor.3} parent=59 // loop_header_branch
                %794 = sbr.rel (%p791) target = $region67
              $region64: #{mnist_feature_extractor.3} parent=59 // loop_body
                %v798 = vld [vmem:[%s796] sm:%s787]
                %799 = vst [vmem:[%s797] sm:%s787] %v798
                %v800 = vld [vmem:[%s796 + $0x4] sm:%s787]
                %801 = vst [vmem:[%s797 + $0x4] sm:%s787] %v800
                %v802 = vld [vmem:[%s796 + $0x8] sm:%s787]
                %803 = vst [vmem:[%s797 + $0x8] sm:%s787] %v802
                %v804 = vld [vmem:[%s796 + $0xc] sm:%s787]
                %805 = vst [vmem:[%s797 + $0xc] sm:%s787] %v804
                %s806 = sadd.s32 1, %s795
                %p807 = scmp.ge.s32.totalorder %s806, %s788
                %s808 = scalar_select %p807, 0, %s806
                %s809 = smul.u32 %s808, 16
                %s810 = smul.u32 %s808, 16
                %s811 = scalar_lea.vmem %s767, %s809 [#allocation2]
                %s812 = scalar_lea.vmem %s778, %s810
              $region65: #{mnist_feature_extractor.3} parent=59 // loop_footer
                %s792 = sadd.s32 %s790, 1
              $region66: #{mnist_feature_extractor.3} parent=59 // loop_footer_branch
                %789 = sbr.rel target = $region62
              $region67: #{mnist_feature_extractor.3} parent=59 // loop_exit
                _
              %s813 = sshrl.u32 %s774, 2
              %s814 = sand.u32 %s774, 3
              %s815 = smul.u32 %s813, 4
              %s816 = smul.u32 4, %s815
              %s817 = scalar_lea.vmem %s767, %s816 [#allocation2]
              %s818 = smul.u32 4, %s815
              %s819 = scalar_lea.vmem %s778, %s818
              // While loop
              $region68: #{mnist_feature_extractor.3} parent=59 // loop_pre_header
                _
              $region69: #{mnist_feature_extractor.3} parent=59 // loop_header
                %s821 = sphi 0, %s823
                %p822 = scmp.ge.s32.totalorder %s821, %s814
                %s826 = sphi 0, %s833
                %s827 = sphi %s817, %s836
                %s828 = sphi %s819, %s837
              $region70: #{mnist_feature_extractor.3} parent=59 // loop_header_branch
                %825 = sbr.rel (%p822) target = $region74
              $region71: #{mnist_feature_extractor.3} parent=59 // loop_body
                %v829 = vld [vmem:[%s827] sm:%s787]
                %830 = vst [vmem:[%s828] sm:%s787] %v829
                %s831 = sadd.s32 1, %s826
                %p832 = scmp.ge.s32.totalorder %s831, %s814
                %s833 = scalar_select %p832, 0, %s831
                %s834 = smul.u32 %s833, 4
                %s835 = smul.u32 %s833, 4
                %s836 = scalar_lea.vmem %s817, %s834 [#allocation2]
                %s837 = scalar_lea.vmem %s819, %s835
              $region72: #{mnist_feature_extractor.3} parent=59 // loop_footer
                %s823 = sadd.s32 %s821, 1
              $region73: #{mnist_feature_extractor.3} parent=59 // loop_footer_branch
                %820 = sbr.rel target = $region69
              $region74: #{mnist_feature_extractor.3} parent=59 // loop_exit
                _
            $region60: #{mnist_feature_extractor.3} parent=51 // pred_fallthru
              _
          $region52: #{mnist_feature_extractor.3} parent=47 // pred_fallthru
            _
          %892 = vnop
        $region48: #{mnist_feature_extractor.3} parent=43 // pred_fallthru
          _
      $region44: #{mnist_feature_extractor.3} parent=5 // pred_fallthru
        _
      %p893 = scmp.le.s32.totalorder 2, %s12
      // Predicated region
      $region93: #{mnist_feature_extractor.3} parent=5 // pred_check
        %p894 = pneg %p893
      $region94: #{mnist_feature_extractor.3} parent=5 // pred_check_branch
        %896 = sbr.rel (%p894) target = $region96
      $region95: #{mnist_feature_extractor.3} parent=5 // pred_region
        %s897 = ssub.s32 %s12, 2
        // Predicated region
        $region97: #{mnist_feature_extractor.3} parent=95 // pred_check
          %p898 = pneg %p187
        $region98: #{mnist_feature_extractor.3} parent=95 // pred_check_branch
          %900 = sbr.rel (%p898) target = $region100
        $region99: #{mnist_feature_extractor.3} parent=95 // pred_region
          %s901 = sand.u32 %s172, 1
          %s902 = sand.u32 %s172, 1
          %s903 = smul.addr %s902, 16
          %s904 = scalar_lea.vmem [#allocation2], %s903
        $region100: #{mnist_feature_extractor.3} parent=95 // pred_fallthru
          _
      $region96: #{mnist_feature_extractor.3} parent=5 // pred_fallthru
        _
    $region6: #{mnist_feature_extractor.3} parent=1 // loop_footer
      %s16 = sadd.s32 1, %s12
    $region7: #{mnist_feature_extractor.3} parent=1 // loop_footer_branch
      %11 = sbr.rel target = $region3
    $region8: #{mnist_feature_extractor.3} parent=1 // loop_exit
      _

// kernel: tile.23
$region0: #{tile.23}
  #allocation0 [shape = 's32[1]{0}', space=sflag, size = 0x4, scoped, tag = 'scoped memory for tile.23']
  %s0 = inlined_call_operand.vmem [shape: f32[32], index: 0, kind: input, shape index: {}]
  %s1 = inlined_call_operand.vmem [shape: f32[4,32], index: 1, kind: output, shape index: {}]
  // Predicated region
  $region2: #{tile.23} parent=0 // pred_check
    _
  $region3: #{tile.23} parent=0 // pred_check_branch
    %3 = sbr.rel (0) target = $region5
  $region4: #{tile.23} parent=0 // pred_region
    _
  $region5: #{tile.23} parent=0 // pred_fallthru
    _
  %v4 = vld [vmem:[%s0] ss:$0 sm:$0xff]
  %5 = vst [vmem:[%s1] sm:$0xf] %v4

// kernel: tile.24
$region0: #{tile.24}
  %s0 = inlined_call_operand.vmem [shape: f32[4,32], index: 0, kind: input, shape index: {}]
  %s1 = inlined_call_operand.vmem [shape: f32[1,128], index: 1, kind: output, shape index: {}]
  $region1: #{tile.24} parent=0
    #allocation0 [shape = 'u8[4096]{0}', space=vmem, size = 0x1000, scoped, tag = 'scoped mem for output reshape']
    #allocation1 [shape = 'u8[4096]{0}', space=vmem, size = 0x1000, scoped, tag = 'scoped mem for input reshape']
    %s3 = sshll.u32 1, 4
    %s4 = ssub.s32 %s3, 1
    %v5 = vld [vmem:[%s0] sm:%s4]
    %6 = vst [vmem:[#allocation1] sm:%s4] %v5
    %v7 = vld [vmem:[#allocation1] sm:$0x1]
    %vm8 = vcmask 261120
    %9 = vst.msk [vmem:[#allocation0] sm:$0x1] %vm8, %v7
    %s10 = scalar_lea.vmem [#allocation1], 3
    %v11 = vld [vmem:[%s10] sm:$0x1]
    %12 = vrot.lane.b32.xlu0 %v11, 96
    %v13 = vpop.permute.xlu0 %12
    %vm14 = vcmask 1048320
    %15 = vst.msk [vmem:[#allocation0] sm:$0x1] %vm14, %v13
    %s16 = scalar_lea.vmem [#allocation1], 2
    %v17 = vld [vmem:[%s16] sm:$0x1]
    %18 = vrot.lane.b32.xlu0 %v17, 64
    %v19 = vpop.permute.xlu0 %18
    %vm20 = vcmask 785920
    %21 = vst.msk [vmem:[#allocation0] sm:$0x1] %vm20, %v19
    %s22 = scalar_lea.vmem [#allocation1], 1
    %v23 = vld [vmem:[%s22] sm:$0x1]
    %24 = vrot.lane.b32.xlu0 %v23, 32
    %v25 = vpop.permute.xlu0 %24
    %vm26 = vcmask 523520
    %27 = vst.msk [vmem:[#allocation0] sm:$0x1] %vm26, %v25
    %s29 = sshll.u32 1, 1
    %s30 = ssub.s32 %s29, 1
    %v32 = vld [vmem:[#allocation0] sm:%s30]
    %s33 = sshll.u32 1, 1
    %s34 = ssub.s32 %s33, 1
    %35 = vst [vmem:[%s1] sm:%s34] %v32

// kernel: mnist_feature_extractor.4
$region0: #{mnist_feature_extractor.4}
  #allocation0 [shape = 'u32[]', space=smem, size = 0x4, offset = 0x4, fixed_abs, tag = 'smem constant byte address 0x4 - core index']
  #allocation1 [shape = 'u32[144,128]{1,0:T(1,128)}', space=vmem, size = 0x12000, scoped, tag = 'internal scratch']
  %s0 = inlined_call_operand.vmem [shape: bf16[25,576], index: 0, kind: input, shape index: {}]
  %s1 = inlined_call_operand.vmem [shape: bf16[25,576], index: 1, kind: input, shape index: {}]
  %s2 = inlined_call_operand.vmem [shape: bf16[25,576], index: 2, kind: input, shape index: {}]
  %s3 = inlined_call_operand.vmem [shape: bf16[25,576], index: 3, kind: input, shape index: {}]
  %s4 = inlined_call_operand.vmem [shape: bf16[576,128], index: 4, kind: input, shape index: {}]
  %s5 = inlined_call_operand.vmem [shape: f32[1,128], index: 5, kind: input, shape index: {}]
  %s6 = inlined_call_operand.vmem [shape: bf16[25,128], index: 6, kind: output, shape index: {}]
  %s7 = sld [smem:[#allocation0]]
  $region57: #{mnist_feature_extractor.4} parent=0
    _
  %s9 = ssub.s32 1, %s7
  %s10 = scalar_select 0, %s9, %s7
  loop: start=0, step=1, limit=4
  $region2: #{mnist_feature_extractor.4} parent=0 // loop_pre_header
    _
  $region3: #{mnist_feature_extractor.4} parent=0 // loop_header
    %s12 = sphi 0, %s16
    %p13 = scmp.ge.s32.totalorder %s12, 4
    %s22 = sphi 0, %s24
    %s25 = sphi 0, %s22
    %s26 = sphi 0, %s25
    %s42 = sphi 0, %s26
    %s48 = sphi 0, %s50
    %s51 = sphi 0, %s48
    %s52 = sphi 0, %s51
    %s68 = sphi 0, %s52
    %s74 = sphi 0, %s76
    %s77 = sphi 0, %s74
    %s78 = sphi 0, %s77
    %s94 = sphi 0, %s78
    %s100 = sphi 0, %s102
    %s103 = sphi 0, %s100
    %s104 = sphi 0, %s103
    %s120 = sphi 0, %s104
    %s124 = sphi 0, %s124
    %s126 = sphi 0, %s124
    %s127 = sphi 0, %s126
    %s141 = sphi 0, %s127
    %s145 = sphi 0, %s145
    %s147 = sphi 0, %s145
    %s148 = sphi 0, %s147
    %s162 = sphi 0, %s148
    %s168 = sphi 0, %s170
    %s171 = sphi 0, %s168
    %s172 = sphi 0, %s171
    %s188 = sphi 0, %s172
  $region4: #{mnist_feature_extractor.4} parent=0 // loop_header_branch
    %15 = sbr.rel (%p13) target = $region8
  $region5: #{mnist_feature_extractor.4} parent=0 // loop_body
    %s17 = ssub.s32 %s12, 1
    %s18 = ssub.s32 %s12, 2
    %s19 = sadd.s32 %s12, 1
    %s20 = ssub.s32 %s12, %s19
    %p21 = scmp.eq.s32.totalorder %s20, 0
    %s23 = sadd.s32 %s22, 1
    %s24 = scalar_select %p21, %s22, %s23
    %p27 = pneg %p21
    %p28 = scmp.eq.s32.totalorder %s12, 1
    %p29 = por %p27, %p28
    %p30 = scmp.ne.s32.totalorder %s22, %s25
    %p31 = scmp.eq.s32.totalorder %s12, 0
    %p32 = por %p30, %p31
    %p33 = scmp.ne.s32.totalorder %s22, %s25
    %p34 = scmp.eq.s32.totalorder %s17, 1
    %p35 = por %p33, %p34
    %p36 = scmp.ne.s32.totalorder %s25, %s26
    %p37 = scmp.eq.s32.totalorder %s17, 0
    %p38 = por %p36, %p37
    %p39 = scmp.ne.s32.totalorder %s25, %s26
    %p40 = scmp.eq.s32.totalorder %s18, 1
    %p41 = por %p39, %p40
    %p43 = scmp.ne.s32.totalorder %s26, %s42
    %p44 = scmp.eq.s32.totalorder %s18, 0
    %p45 = por %p43, %p44
    %s46 = ssub.s32 %s12, %s19
    %p47 = scmp.eq.s32.totalorder %s46, 0
    %s49 = sadd.s32 %s48, 1
    %s50 = scalar_select %p47, %s48, %s49
    %p53 = pneg %p47
    %p54 = scmp.eq.s32.totalorder %s12, 1
    %p55 = por %p53, %p54
    %p56 = scmp.ne.s32.totalorder %s48, %s51
    %p57 = scmp.eq.s32.totalorder %s12, 0
    %p58 = por %p56, %p57
    %p59 = scmp.ne.s32.totalorder %s48, %s51
    %p60 = scmp.eq.s32.totalorder %s17, 1
    %p61 = por %p59, %p60
    %p62 = scmp.ne.s32.totalorder %s51, %s52
    %p63 = scmp.eq.s32.totalorder %s17, 0
    %p64 = por %p62, %p63
    %p65 = scmp.ne.s32.totalorder %s51, %s52
    %p66 = scmp.eq.s32.totalorder %s18, 1
    %p67 = por %p65, %p66
    %p69 = scmp.ne.s32.totalorder %s52, %s68
    %p70 = scmp.eq.s32.totalorder %s18, 0
    %p71 = por %p69, %p70
    %s72 = ssub.s32 %s12, %s19
    %p73 = scmp.eq.s32.totalorder %s72, 0
    %s75 = sadd.s32 %s74, 1
    %s76 = scalar_select %p73, %s74, %s75
    %p79 = pneg %p73
    %p80 = scmp.eq.s32.totalorder %s12, 1
    %p81 = por %p79, %p80
    %p82 = scmp.ne.s32.totalorder %s74, %s77
    %p83 = scmp.eq.s32.totalorder %s12, 0
    %p84 = por %p82, %p83
    %p85 = scmp.ne.s32.totalorder %s74, %s77
    %p86 = scmp.eq.s32.totalorder %s17, 1
    %p87 = por %p85, %p86
    %p88 = scmp.ne.s32.totalorder %s77, %s78
    %p89 = scmp.eq.s32.totalorder %s17, 0
    %p90 = por %p88, %p89
    %p91 = scmp.ne.s32.totalorder %s77, %s78
    %p92 = scmp.eq.s32.totalorder %s18, 1
    %p93 = por %p91, %p92
    %p95 = scmp.ne.s32.totalorder %s78, %s94
    %p96 = scmp.eq.s32.totalorder %s18, 0
    %p97 = por %p95, %p96
    %s98 = ssub.s32 %s12, %s19
    %p99 = scmp.eq.s32.totalorder %s98, 0
    %s101 = sadd.s32 %s100, 1
    %s102 = scalar_select %p99, %s100, %s101
    %p105 = pneg %p99
    %p106 = scmp.eq.s32.totalorder %s12, 1
    %p107 = por %p105, %p106
    %p108 = scmp.ne.s32.totalorder %s100, %s103
    %p109 = scmp.eq.s32.totalorder %s12, 0
    %p110 = por %p108, %p109
    %p111 = scmp.ne.s32.totalorder %s100, %s103
    %p112 = scmp.eq.s32.totalorder %s17, 1
    %p113 = por %p111, %p112
    %p114 = scmp.ne.s32.totalorder %s103, %s104
    %p115 = scmp.eq.s32.totalorder %s17, 0
    %p116 = por %p114, %p115
    %p117 = scmp.ne.s32.totalorder %s103, %s104
    %p118 = scmp.eq.s32.totalorder %s18, 1
    %p119 = por %p117, %p118
    %p121 = scmp.ne.s32.totalorder %s104, %s120
    %p122 = scmp.eq.s32.totalorder %s18, 0
    %p123 = por %p121, %p122
    %s125 = sadd.s32 %s124, 1
    %p128 = scmp.eq.s32.totalorder %s12, 1
    %p129 = scmp.ne.s32.totalorder %s124, %s126
    %p130 = scmp.eq.s32.totalorder %s12, 0
    %p131 = por %p129, %p130
    %p132 = scmp.ne.s32.totalorder %s124, %s126
    %p133 = scmp.eq.s32.totalorder %s17, 1
    %p134 = por %p132, %p133
    %p135 = scmp.ne.s32.totalorder %s126, %s127
    %p136 = scmp.eq.s32.totalorder %s17, 0
    %p137 = por %p135, %p136
    %p138 = scmp.ne.s32.totalorder %s126, %s127
    %p139 = scmp.eq.s32.totalorder %s18, 1
    %p140 = por %p138, %p139
    %p142 = scmp.ne.s32.totalorder %s127, %s141
    %p143 = scmp.eq.s32.totalorder %s18, 0
    %p144 = por %p142, %p143
    %s146 = sadd.s32 %s145, 1
    %p149 = scmp.eq.s32.totalorder %s12, 1
    %p150 = scmp.ne.s32.totalorder %s145, %s147
    %p151 = scmp.eq.s32.totalorder %s12, 0
    %p152 = por %p150, %p151
    %p153 = scmp.ne.s32.totalorder %s145, %s147
    %p154 = scmp.eq.s32.totalorder %s17, 1
    %p155 = por %p153, %p154
    %p156 = scmp.ne.s32.totalorder %s147, %s148
    %p157 = scmp.eq.s32.totalorder %s17, 0
    %p158 = por %p156, %p157
    %p159 = scmp.ne.s32.totalorder %s147, %s148
    %p160 = scmp.eq.s32.totalorder %s18, 1
    %p161 = por %p159, %p160
    %p163 = scmp.ne.s32.totalorder %s148, %s162
    %p164 = scmp.eq.s32.totalorder %s18, 0
    %p165 = por %p163, %p164
    %s166 = ssub.s32 %s12, %s19
    %p167 = scmp.eq.s32.totalorder %s166, 0
    %s169 = sadd.s32 %s168, 1
    %s170 = scalar_select %p167, %s168, %s169
    %p173 = pneg %p167
    %p174 = scmp.eq.s32.totalorder %s12, 1
    %p175 = por %p173, %p174
    %p176 = scmp.ne.s32.totalorder %s168, %s171
    %p177 = scmp.eq.s32.totalorder %s12, 0
    %p178 = por %p176, %p177
    %p179 = scmp.ne.s32.totalorder %s168, %s171
    %p180 = scmp.eq.s32.totalorder %s17, 1
    %p181 = por %p179, %p180
    %p182 = scmp.ne.s32.totalorder %s171, %s172
    %p183 = scmp.eq.s32.totalorder %s17, 0
    %p184 = por %p182, %p183
    %p185 = scmp.ne.s32.totalorder %s171, %s172
    %p186 = scmp.eq.s32.totalorder %s18, 1
    %p187 = por %p185, %p186
    %p189 = scmp.ne.s32.totalorder %s172, %s188
    %p190 = scmp.eq.s32.totalorder %s18, 0
    %p191 = por %p189, %p190
    %p192 = scmp.le.s32.totalorder 1, %s12
    %p193 = scmp.lt.s32.totalorder %s12, 3
    %p194 = pnand %p192, %p193
    %p195 = pneg %p194
    // Predicated region
    $region9: #{mnist_feature_extractor.4} parent=5 // pred_check
      _
    $region10: #{mnist_feature_extractor.4} parent=5 // pred_check_branch
      %197 = sbr.rel (%p194) target = $region12
    $region11: #{mnist_feature_extractor.4} parent=5 // pred_region
      %s198 = ssub.s32 %s12, 1
      // Predicated region
      $region13: #{mnist_feature_extractor.4} parent=11 // pred_check
        %p199 = pneg %p137
      $region14: #{mnist_feature_extractor.4} parent=11 // pred_check_branch
        %201 = sbr.rel (%p199) target = $region16
      $region15: #{mnist_feature_extractor.4} parent=11 // pred_region
        _
      $region16: #{mnist_feature_extractor.4} parent=11 // pred_fallthru
        _
      // Predicated region
      $region17: #{mnist_feature_extractor.4} parent=11 // pred_check
        %p202 = pneg %p158
      $region18: #{mnist_feature_extractor.4} parent=11 // pred_check_branch
        %204 = sbr.rel (%p202) target = $region20
      $region19: #{mnist_feature_extractor.4} parent=11 // pred_region
        _
      $region20: #{mnist_feature_extractor.4} parent=11 // pred_fallthru
        _
    $region12: #{mnist_feature_extractor.4} parent=5 // pred_fallthru
      _
    %p205 = scmp.lt.s32.totalorder %s12, 2
    // Predicated region
    $region21: #{mnist_feature_extractor.4} parent=5 // pred_check
      %p206 = pneg %p205
    $region22: #{mnist_feature_extractor.4} parent=5 // pred_check_branch
      %208 = sbr.rel (%p206) target = $region24
    $region23: #{mnist_feature_extractor.4} parent=5 // pred_region
      // Predicated region
      $region25: #{mnist_feature_extractor.4} parent=23 // pred_check
        %p209 = pneg %p32
      $region26: #{mnist_feature_extractor.4} parent=23 // pred_check_branch
        %211 = sbr.rel (%p209) target = $region28
      $region27: #{mnist_feature_extractor.4} parent=23 // pred_region
        %s212 = smul.u32 2, %s12
        %p213 = scmp.lt.s32.totalorder %s212, 3
        %s214 = scalar_select %p213, %s212, 3
        %s215 = smul.addr %s214, 5
        %s216 = smul.addr %s215, 4
        %s217 = scalar_lea.vmem %s0, %s216
        %s218 = smul.u32 2, %s12
      $region28: #{mnist_feature_extractor.4} parent=23 // pred_fallthru
        _
      // Predicated region
      $region29: #{mnist_feature_extractor.4} parent=23 // pred_check
        %p219 = pneg %p58
      $region30: #{mnist_feature_extractor.4} parent=23 // pred_check_branch
        %221 = sbr.rel (%p219) target = $region32
      $region31: #{mnist_feature_extractor.4} parent=23 // pred_region
        %s222 = smul.u32 2, %s12
        %p223 = scmp.lt.s32.totalorder %s222, 3
        %s224 = scalar_select %p223, %s222, 3
        %s225 = smul.addr %s224, 5
        %s226 = smul.addr %s225, 4
        %s227 = scalar_lea.vmem %s1, %s226
        %s228 = smul.u32 2, %s12
      $region32: #{mnist_feature_extractor.4} parent=23 // pred_fallthru
        _
      // Predicated region
      $region33: #{mnist_feature_extractor.4} parent=23 // pred_check
        %p229 = pneg %p84
      $region34: #{mnist_feature_extractor.4} parent=23 // pred_check_branch
        %231 = sbr.rel (%p229) target = $region36
      $region35: #{mnist_feature_extractor.4} parent=23 // pred_region
        %s232 = smul.u32 2, %s12
        %p233 = scmp.lt.s32.totalorder %s232, 3
        %s234 = scalar_select %p233, %s232, 3
        %s235 = smul.addr %s234, 5
        %s236 = smul.addr %s235, 4
        %s237 = scalar_lea.vmem %s2, %s236
        %s238 = smul.u32 2, %s12
      $region36: #{mnist_feature_extractor.4} parent=23 // pred_fallthru
        _
      // Predicated region
      $region37: #{mnist_feature_extractor.4} parent=23 // pred_check
        %p239 = pneg %p110
      $region38: #{mnist_feature_extractor.4} parent=23 // pred_check_branch
        %241 = sbr.rel (%p239) target = $region40
      $region39: #{mnist_feature_extractor.4} parent=23 // pred_region
        %s242 = smul.u32 2, %s12
        %p243 = scmp.lt.s32.totalorder %s242, 3
        %s244 = scalar_select %p243, %s242, 3
        %s245 = smul.addr %s244, 5
        %s246 = smul.addr %s245, 4
        %s247 = scalar_lea.vmem %s3, %s246
        %s248 = smul.u32 2, %s12
      $region40: #{mnist_feature_extractor.4} parent=23 // pred_fallthru
        _
    $region24: #{mnist_feature_extractor.4} parent=5 // pred_fallthru
      _
    %p249 = scmp.le.s32.totalorder 1, %s12
    %p250 = scmp.lt.s32.totalorder %s12, 3
    %p251 = pnand %p249, %p250
    %p252 = pneg %p251
    // Predicated region
    $region41: #{mnist_feature_extractor.4} parent=5 // pred_check
      _
    $region42: #{mnist_feature_extractor.4} parent=5 // pred_check_branch
      %254 = sbr.rel (%p251) target = $region44
    $region43: #{mnist_feature_extractor.4} parent=5 // pred_region
      %s255 = ssub.s32 %s12, 1
      %s256 = smul.u32 2, %s17
      %p257 = scmp.lt.s32.totalorder %s256, 3
      %s258 = scalar_select %p257, %s256, 3
      %s259 = smul.addr %s258, 5
      %s260 = smul.addr %s259, 4
      %s261 = scalar_lea.vmem %s0, %s260
      %p262 = pneg %p38
      %p263 = pneg %p35
      %s264 = smul.u32 2, %s17
      %p265 = scmp.lt.s32.totalorder %s264, 3
      %s266 = scalar_select %p265, %s264, 3
      %s267 = smul.addr %s266, 5
      %s268 = smul.addr %s267, 4
      %s269 = scalar_lea.vmem %s1, %s268
      %p270 = pneg %p64
      %p271 = pneg %p61
      %s272 = smul.u32 2, %s17
      %p273 = scmp.lt.s32.totalorder %s272, 3
      %s274 = scalar_select %p273, %s272, 3
      %s275 = smul.addr %s274, 5
      %s276 = smul.addr %s275, 4
      %s277 = scalar_lea.vmem %s2, %s276
      %p278 = pneg %p90
      %p279 = pneg %p87
      %s280 = smul.u32 2, %s17
      %p281 = scmp.lt.s32.totalorder %s280, 3
      %s282 = scalar_select %p281, %s280, 3
      %s283 = smul.addr %s282, 5
      %s284 = smul.addr %s283, 4
      %s285 = scalar_lea.vmem %s3, %s284
      %p286 = pneg %p116
      %p287 = pneg %p113
      %p288 = pneg %p137
      %p289 = pneg %p134
      %p290 = pneg %p158
      %p291 = pneg %p155
      %p292 = pneg %p184
      %p293 = pneg %p181
      %s294 = smul.u32 2, %s17
      %p295 = scmp.lt.s32.totalorder %s294, 3
      %s296 = scalar_select %p295, %s294, 3
      %s297 = smul.addr %s296, 4
      %s298 = scalar_lea.vmem %s6, %s297
      %s299 = smul.u32 2, %s17
      %p300 = scmp.lt.s32.totalorder %s299, 3
      %s301 = scalar_select %p300, %s299, 3
      %s302 = smul.addr %s301, 5
      %s303 = smul.addr %s302, 4
      %s304 = scalar_lea.vmem %s0, %s303
      %s305 = smul.u32 2, %s17
      %s306 = smul.u32 2, %s17
      %p307 = scmp.lt.s32.totalorder %s306, 3
      %s308 = scalar_select %p307, %s306, 3
      %s309 = smul.addr %s308, 5
      %s310 = smul.addr %s309, 4
      %s311 = scalar_lea.vmem %s1, %s310
      %s312 = smul.u32 2, %s17
      %s313 = smul.u32 2, %s17
      %p314 = scmp.lt.s32.totalorder %s313, 3
      %s315 = scalar_select %p314, %s313, 3
      %s316 = smul.addr %s315, 5
      %s317 = smul.addr %s316, 4
      %s318 = scalar_lea.vmem %s2, %s317
      %s319 = smul.u32 2, %s17
      %s320 = smul.u32 2, %s17
      %p321 = scmp.lt.s32.totalorder %s320, 3
      %s322 = scalar_select %p321, %s320, 3
      %s323 = smul.addr %s322, 5
      %s324 = smul.addr %s323, 4
      %s325 = scalar_lea.vmem %s3, %s324
      %s326 = smul.u32 2, %s17
      %s327 = smul.u32 2, %s17
      %p328 = scmp.lt.s32.totalorder %s327, 3
      %s329 = scalar_select %p328, %s327, 3
      %s330 = smul.addr %s329, 4
      %s331 = scalar_lea.vmem %s6, %s330
      %s332 = smul.u32 2, %s17
      %v334 = vld [vmem:[%s4] sm:$0xf]
      %v335 = vld [vmem:[%s4 + $0x4] sm:$0xf]
      %v336 = vld [vmem:[%s4 + $0x8] sm:$0xf]
      %v337 = vld [vmem:[%s4 + $0xc] sm:$0xf]
      %v338 = vld [vmem:[%s4 + $0x10] sm:$0xf]
      %v339 = vld [vmem:[%s4 + $0x14] sm:$0xf]
      %v340 = vld [vmem:[%s4 + $0x18] sm:$0xf]
      %v341 = vld [vmem:[%s4 + $0x1c] sm:$0xf]
      %v342 = vld [vmem:[%s4 + $0x20] sm:$0xf]
      %v343 = vld [vmem:[%s4 + $0x24] sm:$0xf]
      %v344 = vld [vmem:[%s4 + $0x28] sm:$0xf]
      %v345 = vld [vmem:[%s4 + $0x2c] sm:$0xf]
      %v346 = vld [vmem:[%s4 + $0x30] sm:$0xf]
      %v347 = vld [vmem:[%s4 + $0x34] sm:$0xf]
      %v348 = vld [vmem:[%s4 + $0x38] sm:$0xf]
      %v349 = vld [vmem:[%s4 + $0x3c] sm:$0xf]
      %v350 = vld [vmem:[%s4 + $0x40] sm:$0xf]
      %v351 = vld [vmem:[%s4 + $0x44] sm:$0xf]
      %v352 = vld [vmem:[%s4 + $0x48] sm:$0xf]
      %v353 = vld [vmem:[%s4 + $0x4c] sm:$0xf]
      %v354 = vld [vmem:[%s4 + $0x50] sm:$0xf]
      %v355 = vld [vmem:[%s4 + $0x54] sm:$0xf]
      %v356 = vld [vmem:[%s4 + $0x58] sm:$0xf]
      %v357 = vld [vmem:[%s4 + $0x5c] sm:$0xf]
      %v358 = vld [vmem:[%s4 + $0x60] sm:$0xf]
      %v359 = vld [vmem:[%s4 + $0x64] sm:$0xf]
      %v360 = vld [vmem:[%s4 + $0x68] sm:$0xf]
      %v361 = vld [vmem:[%s4 + $0x6c] sm:$0xf]
      %v362 = vld [vmem:[%s4 + $0x70] sm:$0xf]
      %v363 = vld [vmem:[%s4 + $0x74] sm:$0xf]
      %v364 = vld [vmem:[%s4 + $0x78] sm:$0xf]
      %v365 = vld [vmem:[%s4 + $0x7c] sm:$0xf]
      %v366 = vld [vmem:[%s4 + $0x80] sm:$0xf]
      %v367 = vld [vmem:[%s4 + $0x84] sm:$0xf]
      %v368 = vld [vmem:[%s4 + $0x88] sm:$0xf]
      %v369 = vld [vmem:[%s4 + $0x8c] sm:$0xf]
      %v370 = vld [vmem:[%s4 + $0x90] sm:$0xf]
      %v371 = vld [vmem:[%s4 + $0x94] sm:$0xf]
      %v372 = vld [vmem:[%s4 + $0x98] sm:$0xf]
      %v373 = vld [vmem:[%s4 + $0x9c] sm:$0xf]
      %v374 = vld [vmem:[%s4 + $0xa0] sm:$0xf]
      %v375 = vld [vmem:[%s4 + $0xa4] sm:$0xf]
      %v376 = vld [vmem:[%s4 + $0xa8] sm:$0xf]
      %v377 = vld [vmem:[%s4 + $0xac] sm:$0xf]
      %v378 = vld [vmem:[%s4 + $0xb0] sm:$0xf]
      %v379 = vld [vmem:[%s4 + $0xb4] sm:$0xf]
      %v380 = vld [vmem:[%s4 + $0xb8] sm:$0xf]
      %v381 = vld [vmem:[%s4 + $0xbc] sm:$0xf]
      %v382 = vld [vmem:[%s4 + $0xc0] sm:$0xf]
      %v383 = vld [vmem:[%s4 + $0xc4] sm:$0xf]
      %v384 = vld [vmem:[%s4 + $0xc8] sm:$0xf]
      %v385 = vld [vmem:[%s4 + $0xcc] sm:$0xf]
      %v386 = vld [vmem:[%s4 + $0xd0] sm:$0xf]
      %v387 = vld [vmem:[%s4 + $0xd4] sm:$0xf]
      %v388 = vld [vmem:[%s4 + $0xd8] sm:$0xf]
      %v389 = vld [vmem:[%s4 + $0xdc] sm:$0xf]
      %v390 = vld [vmem:[%s4 + $0xe0] sm:$0xf]
      %v391 = vld [vmem:[%s4 + $0xe4] sm:$0xf]
      %v392 = vld [vmem:[%s4 + $0xe8] sm:$0xf]
      %v393 = vld [vmem:[%s4 + $0xec] sm:$0xf]
      %v394 = vld [vmem:[%s4 + $0xf0] sm:$0xf]
      %v395 = vld [vmem:[%s4 + $0xf4] sm:$0xf]
      %v396 = vld [vmem:[%s4 + $0xf8] sm:$0xf]
      %v397 = vld [vmem:[%s4 + $0xfc] sm:$0xf]
      %v398 = vld [vmem:[%s4 + $0x100] sm:$0xf]
      %v399 = vld [vmem:[%s4 + $0x104] sm:$0xf]
      %v400 = vld [vmem:[%s4 + $0x108] sm:$0xf]
      %v401 = vld [vmem:[%s4 + $0x10c] sm:$0xf]
      %v402 = vld [vmem:[%s4 + $0x110] sm:$0xf]
      %v403 = vld [vmem:[%s4 + $0x114] sm:$0xf]
      %v404 = vld [vmem:[%s4 + $0x118] sm:$0xf]
      %v405 = vld [vmem:[%s4 + $0x11c] sm:$0xf]
      %v406 = vld [vmem:[%s304] sm:$0xff]
      %v407 = vld [vmem:[%s304 + $0x8] sm:$0xff]
      %v408 = vld [vmem:[%s304 + $0x10] sm:$0xf]
      %v409 = vld [vmem:[%s304 + $0x14] sm:$0xff]
      %v410 = vld [vmem:[%s304 + $0x1c] sm:$0xff]
      %v411 = vld [vmem:[%s304 + $0x24] sm:$0xf]
      %v418 = vunpack.c.l.b16 %v406
      %v419 = vunpack.c.h.b16 %v406
      %v420 = vunpack.c.l.b16 %v407
      %v421 = vunpack.c.h.b16 %v407
      %v422 = vunpack.c.l.b16 %v408
      %v423 = vunpack.c.l.b16 %v409
      %v424 = vunpack.c.h.b16 %v409
      %v425 = vunpack.c.l.b16 %v410
      %v426 = vunpack.c.h.b16 %v410
      %v427 = vunpack.c.l.b16 %v411
      %v428 = vpack.c.b16 %v423, %v418
      %v429 = vpack.c.b16 %v424, %v419
      %v430 = vpack.c.b16 %v425, %v420
      %v431 = vpack.c.b16 %v426, %v421
      %v432 = vpack.c.b16 %v427, %v422
      %v509 = vunpack.c.l.b16 %v334
      %v510 = vunpack.c.l.b16 %v335
      %v511 = vunpack.c.l.b16 %v336
      %v512 = vunpack.c.l.b16 %v337
      %v513 = vunpack.c.l.b16 %v338
      %v514 = vunpack.c.l.b16 %v339
      %v515 = vunpack.c.l.b16 %v340
      %v516 = vunpack.c.l.b16 %v341
      %v517 = vunpack.c.l.b16 %v342
      %v518 = vunpack.c.l.b16 %v343
      %v519 = vunpack.c.l.b16 %v344
      %v520 = vunpack.c.l.b16 %v345
      %v521 = vunpack.c.l.b16 %v346
      %v522 = vunpack.c.l.b16 %v347
      %v523 = vunpack.c.l.b16 %v348
      %v524 = vunpack.c.l.b16 %v349
      %v525 = vunpack.c.l.b16 %v350
      %v526 = vunpack.c.l.b16 %v351
      %v527 = vunpack.c.l.b16 %v352
      %v528 = vunpack.c.l.b16 %v353
      %v529 = vunpack.c.l.b16 %v354
      %v530 = vunpack.c.l.b16 %v355
      %v531 = vunpack.c.l.b16 %v356
      %v532 = vunpack.c.l.b16 %v357
      %v533 = vunpack.c.l.b16 %v358
      %v534 = vunpack.c.l.b16 %v359
      %v535 = vunpack.c.l.b16 %v360
      %v536 = vunpack.c.l.b16 %v361
      %v537 = vunpack.c.l.b16 %v362
      %v538 = vunpack.c.l.b16 %v363
      %v539 = vunpack.c.l.b16 %v364
      %v540 = vunpack.c.l.b16 %v365
      %v541 = vunpack.c.l.b16 %v366
      %v542 = vunpack.c.l.b16 %v367
      %v543 = vunpack.c.l.b16 %v368
      %v544 = vunpack.c.l.b16 %v369
      %v545 = vunpack.c.l.b16 %v370
      %v546 = vunpack.c.l.b16 %v371
      %v547 = vunpack.c.l.b16 %v372
      %v548 = vunpack.c.l.b16 %v373
      %v549 = vunpack.c.l.b16 %v374
      %v550 = vunpack.c.l.b16 %v375
      %v551 = vunpack.c.l.b16 %v376
      %v552 = vunpack.c.l.b16 %v377
      %v553 = vunpack.c.l.b16 %v378
      %v554 = vunpack.c.l.b16 %v379
      %v555 = vunpack.c.l.b16 %v380
      %v556 = vunpack.c.l.b16 %v381
      %v557 = vunpack.c.l.b16 %v382
      %v558 = vunpack.c.l.b16 %v383
      %v559 = vunpack.c.l.b16 %v384
      %v560 = vunpack.c.l.b16 %v385
      %v561 = vunpack.c.l.b16 %v386
      %v562 = vunpack.c.l.b16 %v387
      %v563 = vunpack.c.l.b16 %v388
      %v564 = vunpack.c.l.b16 %v389
      %v565 = vunpack.c.l.b16 %v390
      %v566 = vunpack.c.l.b16 %v391
      %v567 = vunpack.c.l.b16 %v392
      %v568 = vunpack.c.l.b16 %v393
      %v569 = vunpack.c.l.b16 %v394
      %v570 = vunpack.c.l.b16 %v395
      %v571 = vunpack.c.l.b16 %v396
      %v572 = vunpack.c.l.b16 %v397
      %v573 = vunpack.c.l.b16 %v398
      %v574 = vunpack.c.l.b16 %v399
      %v575 = vunpack.c.l.b16 %v400
      %v576 = vunpack.c.l.b16 %v401
      %v577 = vunpack.c.l.b16 %v402
      %v578 = vunpack.c.l.b16 %v403
      %v579 = vunpack.c.l.b16 %v404
      %v580 = vunpack.c.l.b16 %v405
      %v581 = vpack.c.b16 %v510, %v509
      %v582 = vpack.c.b16 %v512, %v511
      %v583 = vpack.c.b16 %v514, %v513
      %v584 = vpack.c.b16 %v516, %v515
      %v585 = vpack.c.b16 %v518, %v517
      %v586 = vpack.c.b16 %v520, %v519
      %v587 = vpack.c.b16 %v522, %v521
      %v588 = vpack.c.b16 %v524, %v523
      %v589 = vpack.c.b16 %v526, %v525
      %v590 = vpack.c.b16 %v528, %v527
      %v591 = vpack.c.b16 %v530, %v529
      %v592 = vpack.c.b16 %v532, %v531
      %v593 = vpack.c.b16 %v534, %v533
      %v594 = vpack.c.b16 %v536, %v535
      %v595 = vpack.c.b16 %v538, %v537
      %v596 = vpack.c.b16 %v540, %v539
      %v597 = vpack.c.b16 %v542, %v541
      %v598 = vpack.c.b16 %v544, %v543
      %v599 = vpack.c.b16 %v546, %v545
      %v600 = vpack.c.b16 %v548, %v547
      %v601 = vpack.c.b16 %v550, %v549
      %v602 = vpack.c.b16 %v552, %v551
      %v603 = vpack.c.b16 %v554, %v553
      %v604 = vpack.c.b16 %v556, %v555
      %v605 = vpack.c.b16 %v558, %v557
      %v606 = vpack.c.b16 %v560, %v559
      %v607 = vpack.c.b16 %v562, %v561
      %v608 = vpack.c.b16 %v564, %v563
      %v609 = vpack.c.b16 %v566, %v565
      %v610 = vpack.c.b16 %v568, %v567
      %v611 = vpack.c.b16 %v570, %v569
      %v612 = vpack.c.b16 %v572, %v571
      %v613 = vpack.c.b16 %v574, %v573
      %v614 = vpack.c.b16 %v576, %v575
      %v615 = vpack.c.b16 %v578, %v577
      %v616 = vpack.c.b16 %v580, %v579
      %vm653 = vcmask 523264
      %v655 = vsel %vm653, %v432, 0
      %657 = vmatprep.subr.bf16.mxu0 0
      %658 = vmatpush1.bf16.msra.mxu0 %v588
      %659 = vmatprep.subr.bf16.mxu0 0
      %660 = vmatpush1.bf16.msra.mxu0 %v587
      %661 = vmatprep.subr.bf16.mxu0 0
      %662 = vmatpush1.bf16.msra.mxu0 %v586
      %663 = vmatprep.subr.bf16.mxu0 0
      %664 = vmatpush1.bf16.msra.mxu0 %v585
      %665 = vmatprep.subr.bf16.mxu0 0
      %666 = vmatpush1.bf16.msra.mxu0 %v584
      %667 = vmatprep.subr.bf16.mxu0 0
      %668 = vmatpush1.bf16.msra.mxu0 %v583
      %669 = vmatprep.subr.bf16.mxu0 0
      %670 = vmatpush1.bf16.msra.mxu0 %v582
      %671 = vmatprep.subr.bf16.mxu0 0
      %672 = vmatpush1.bf16.msra.mxu0 %v581
      %673 = vmatprep.subr.bf16.mxu0 0
      %674 = vmatpush2.bf16.msra.mxu0 %v596
      %675 = vmatprep.subr.bf16.mxu0 0
      %676 = vmatpush2.bf16.msra.mxu0 %v595
      %677 = vmatprep.subr.bf16.mxu0 0
      %678 = vmatpush2.bf16.msra.mxu0 %v594
      %679 = vmatprep.subr.bf16.mxu0 0
      %680 = vmatpush2.bf16.msra.mxu0 %v593
      %681 = vmatprep.subr.bf16.mxu0 0
      %682 = vmatpush2.bf16.msra.mxu0 %v592
      %683 = vmatprep.subr.bf16.mxu0 0
      %684 = vmatpush2.bf16.msra.mxu0 %v591
      %685 = vmatprep.subr.bf16.mxu0 0
      %686 = vmatpush2.bf16.msra.mxu0 %v590
      %687 = vmatprep.subr.bf16.mxu0 0
      %688 = vmatpush2.bf16.msra.mxu0 %v589
      %689 = vmatprep.mubr.bf16.mxu0 %v429
      %690 = vmatmul.mubr.bf16.gmra.mxu0 %v428
      %v691 = vpop.f32.mrf.mxu0
      %v692 = vadd.f32 0.0, %v691
      %v693 = vpop.f32.mrf.mxu0
      %v694 = vpop.f32.mrf.mxu0
      %v695 = vadd.f32 0.0, %v694
      %v696 = vpop.f32.mrf.mxu0
      %697 = vdwg.mxu0
      %698 = vmatprep.subr.bf16.mxu0 0
      %699 = vmatpush1.bf16.msra.mxu0 %v604
      %700 = vmatprep.subr.bf16.mxu0 0
      %701 = vmatpush1.bf16.msra.mxu0 %v603
      %702 = vmatprep.subr.bf16.mxu0 0
      %703 = vmatpush1.bf16.msra.mxu0 %v602
      %704 = vmatprep.subr.bf16.mxu0 0
      %705 = vmatpush1.bf16.msra.mxu0 %v601
      %706 = vmatprep.subr.bf16.mxu0 0
      %707 = vmatpush1.bf16.msra.mxu0 %v600
      %708 = vmatprep.subr.bf16.mxu0 0
      %709 = vmatpush1.bf16.msra.mxu0 %v599
      %710 = vmatprep.subr.bf16.mxu0 0
      %711 = vmatpush1.bf16.msra.mxu0 %v598
      %712 = vmatprep.subr.bf16.mxu0 0
      %713 = vmatpush1.bf16.msra.mxu0 %v597
      %714 = vmatprep.subr.bf16.mxu0 0
      %715 = vmatpush2.bf16.msra.mxu0 %v612
      %716 = vmatprep.subr.bf16.mxu0 0
      %717 = vmatpush2.bf16.msra.mxu0 %v611
      %718 = vmatprep.subr.bf16.mxu0 0
      %719 = vmatpush2.bf16.msra.mxu0 %v610
      %720 = vmatprep.subr.bf16.mxu0 0
      %721 = vmatpush2.bf16.msra.mxu0 %v609
      %722 = vmatprep.subr.bf16.mxu0 0
      %723 = vmatpush2.bf16.msra.mxu0 %v608
      %724 = vmatprep.subr.bf16.mxu0 0
      %725 = vmatpush2.bf16.msra.mxu0 %v607
      %726 = vmatprep.subr.bf16.mxu0 0
      %727 = vmatpush2.bf16.msra.mxu0 %v606
      %728 = vmatprep.subr.bf16.mxu0 0
      %729 = vmatpush2.bf16.msra.mxu0 %v605
      %730 = vmatprep.mubr.bf16.mxu0 %v431
      %731 = vmatmul.mubr.bf16.gmra.mxu0 %v430
      %v732 = vpop.f32.mrf.mxu0
      %v733 = vadd.f32 %v692, %v732
      %v734 = vpop.f32.mrf.mxu0
      %v735 = vpop.f32.mrf.mxu0
      %v736 = vadd.f32 %v695, %v735
      %v737 = vpop.f32.mrf.mxu0
      %738 = vdwg.mxu0
      %739 = vmatprep.subr.bf16.mxu0 0
      %740 = vmatpush1.bf16.msra.mxu0 0
      %741 = vmatprep.subr.bf16.mxu0 0
      %742 = vmatpush1.bf16.msra.mxu0 0
      %743 = vmatprep.subr.bf16.mxu0 0
      %744 = vmatpush1.bf16.msra.mxu0 0
      %745 = vmatprep.subr.bf16.mxu0 0
      %746 = vmatpush1.bf16.msra.mxu0 0
      %747 = vmatprep.subr.bf16.mxu0 0
      %748 = vmatpush1.bf16.msra.mxu0 %v616
      %749 = vmatprep.subr.bf16.mxu0 0
      %750 = vmatpush1.bf16.msra.mxu0 %v615
      %751 = vmatprep.subr.bf16.mxu0 0
      %752 = vmatpush1.bf16.msra.mxu0 %v614
      %753 = vmatprep.subr.bf16.mxu0 0
      %754 = vmatpush1.bf16.msra.mxu0 %v613
      %755 = vmatprep.subr.bf16.mxu0 0
      %756 = vmatpush2.bf16.msra.mxu0 0
      %757 = vmatprep.subr.bf16.mxu0 0
      %758 = vmatpush2.bf16.msra.mxu0 0
      %759 = vmatprep.subr.bf16.mxu0 0
      %760 = vmatpush2.bf16.msra.mxu0 0
      %761 = vmatprep.subr.bf16.mxu0 0
      %762 = vmatpush2.bf16.msra.mxu0 0
      %763 = vmatprep.subr.bf16.mxu0 0
      %764 = vmatpush2.bf16.msra.mxu0 0
      %765 = vmatprep.subr.bf16.mxu0 0
      %766 = vmatpush2.bf16.msra.mxu0 0
      %767 = vmatprep.subr.bf16.mxu0 0
      %768 = vmatpush2.bf16.msra.mxu0 0
      %769 = vmatprep.subr.bf16.mxu0 0
      %770 = vmatpush2.bf16.msra.mxu0 0
      %771 = vmatprep.mubr.bf16.mxu0 0
      %772 = vmatmul.mubr.bf16.gmra.mxu0 %v655
      %v773 = vpop.f32.mrf.mxu0
      %v774 = vadd.f32 %v733, %v773
      %v775 = vpop.f32.mrf.mxu0
      %v776 = vpop.f32.mrf.mxu0
      %v777 = vadd.f32 %v736, %v776
      %v778 = vpop.f32.mrf.mxu0
      %779 = vdwg.mxu0
      %v780 = vld [vmem:[%s311] sm:$0xff]
      %v781 = vld [vmem:[%s311 + $0x8] sm:$0xff]
      %v782 = vld [vmem:[%s311 + $0x10] sm:$0xf]
      %v783 = vld [vmem:[%s311 + $0x14] sm:$0xff]
      %v784 = vld [vmem:[%s311 + $0x1c] sm:$0xff]
      %v785 = vld [vmem:[%s311 + $0x24] sm:$0xf]
      %v792 = vunpack.c.l.b16 %v780
      %v793 = vunpack.c.h.b16 %v780
      %v794 = vunpack.c.l.b16 %v781
      %v795 = vunpack.c.h.b16 %v781
      %v796 = vunpack.c.l.b16 %v782
      %v797 = vunpack.c.l.b16 %v783
      %v798 = vunpack.c.h.b16 %v783
      %v799 = vunpack.c.l.b16 %v784
      %v800 = vunpack.c.h.b16 %v784
      %v801 = vunpack.c.l.b16 %v785
      %v802 = vpack.c.b16 %v797, %v792
      %v803 = vpack.c.b16 %v798, %v793
      %v804 = vpack.c.b16 %v799, %v794
      %v805 = vpack.c.b16 %v800, %v795
      %v806 = vpack.c.b16 %v801, %v796
      %v812 = vsel %vm653, %v806, 0
      %814 = vmatprep.subr.bf16.mxu0 0
      %815 = vmatpush1.bf16.msra.mxu0 %v588
      %816 = vmatprep.subr.bf16.mxu0 0
      %817 = vmatpush1.bf16.msra.mxu0 %v587
      %818 = vmatprep.subr.bf16.mxu0 0
      %819 = vmatpush1.bf16.msra.mxu0 %v586
      %820 = vmatprep.subr.bf16.mxu0 0
      %821 = vmatpush1.bf16.msra.mxu0 %v585
      %822 = vmatprep.subr.bf16.mxu0 0
      %823 = vmatpush1.bf16.msra.mxu0 %v584
      %824 = vmatprep.subr.bf16.mxu0 0
      %825 = vmatpush1.bf16.msra.mxu0 %v583
      %826 = vmatprep.subr.bf16.mxu0 0
      %827 = vmatpush1.bf16.msra.mxu0 %v582
      %828 = vmatprep.subr.bf16.mxu0 0
      %829 = vmatpush1.bf16.msra.mxu0 %v581
      %830 = vmatprep.subr.bf16.mxu0 0
      %831 = vmatpush2.bf16.msra.mxu0 %v596
      %832 = vmatprep.subr.bf16.mxu0 0
      %833 = vmatpush2.bf16.msra.mxu0 %v595
      %834 = vmatprep.subr.bf16.mxu0 0
      %835 = vmatpush2.bf16.msra.mxu0 %v594
      %836 = vmatprep.subr.bf16.mxu0 0
      %837 = vmatpush2.bf16.msra.mxu0 %v593
      %838 = vmatprep.subr.bf16.mxu0 0
      %839 = vmatpush2.bf16.msra.mxu0 %v592
      %840 = vmatprep.subr.bf16.mxu0 0
      %841 = vmatpush2.bf16.msra.mxu0 %v591
      %842 = vmatprep.subr.bf16.mxu0 0
      %843 = vmatpush2.bf16.msra.mxu0 %v590
      %844 = vmatprep.subr.bf16.mxu0 0
      %845 = vmatpush2.bf16.msra.mxu0 %v589
      %846 = vmatprep.mubr.bf16.mxu0 %v803
      %847 = vmatmul.mubr.bf16.gmra.mxu0 %v802
      %v848 = vpop.f32.mrf.mxu0
      %v849 = vadd.f32 0.0, %v848
      %v850 = vpop.f32.mrf.mxu0
      %v851 = vpop.f32.mrf.mxu0
      %v852 = vadd.f32 0.0, %v851
      %v853 = vpop.f32.mrf.mxu0
      %854 = vdwg.mxu0
      %855 = vmatprep.subr.bf16.mxu0 0
      %856 = vmatpush1.bf16.msra.mxu0 %v604
      %857 = vmatprep.subr.bf16.mxu0 0
      %858 = vmatpush1.bf16.msra.mxu0 %v603
      %859 = vmatprep.subr.bf16.mxu0 0
      %860 = vmatpush1.bf16.msra.mxu0 %v602
      %861 = vmatprep.subr.bf16.mxu0 0
      %862 = vmatpush1.bf16.msra.mxu0 %v601
      %863 = vmatprep.subr.bf16.mxu0 0
      %864 = vmatpush1.bf16.msra.mxu0 %v600
      %865 = vmatprep.subr.bf16.mxu0 0
      %866 = vmatpush1.bf16.msra.mxu0 %v599
      %867 = vmatprep.subr.bf16.mxu0 0
      %868 = vmatpush1.bf16.msra.mxu0 %v598
      %869 = vmatprep.subr.bf16.mxu0 0
      %870 = vmatpush1.bf16.msra.mxu0 %v597
      %871 = vmatprep.subr.bf16.mxu0 0
      %872 = vmatpush2.bf16.msra.mxu0 %v612
      %873 = vmatprep.subr.bf16.mxu0 0
      %874 = vmatpush2.bf16.msra.mxu0 %v611
      %875 = vmatprep.subr.bf16.mxu0 0
      %876 = vmatpush2.bf16.msra.mxu0 %v610
      %877 = vmatprep.subr.bf16.mxu0 0
      %878 = vmatpush2.bf16.msra.mxu0 %v609
      %879 = vmatprep.subr.bf16.mxu0 0
      %880 = vmatpush2.bf16.msra.mxu0 %v608
      %881 = vmatprep.subr.bf16.mxu0 0
      %882 = vmatpush2.bf16.msra.mxu0 %v607
      %883 = vmatprep.subr.bf16.mxu0 0
      %884 = vmatpush2.bf16.msra.mxu0 %v606
      %885 = vmatprep.subr.bf16.mxu0 0
      %886 = vmatpush2.bf16.msra.mxu0 %v605
      %887 = vmatprep.mubr.bf16.mxu0 %v805
      %888 = vmatmul.mubr.bf16.gmra.mxu0 %v804
      %v889 = vpop.f32.mrf.mxu0
      %v890 = vadd.f32 %v849, %v889
      %v891 = vpop.f32.mrf.mxu0
      %v892 = vpop.f32.mrf.mxu0
      %v893 = vadd.f32 %v852, %v892
      %v894 = vpop.f32.mrf.mxu0
      %895 = vdwg.mxu0
      %896 = vmatprep.subr.bf16.mxu0 0
      %897 = vmatpush1.bf16.msra.mxu0 0
      %898 = vmatprep.subr.bf16.mxu0 0
      %899 = vmatpush1.bf16.msra.mxu0 0
      %900 = vmatprep.subr.bf16.mxu0 0
      %901 = vmatpush1.bf16.msra.mxu0 0
      %902 = vmatprep.subr.bf16.mxu0 0
      %903 = vmatpush1.bf16.msra.mxu0 0
      %904 = vmatprep.subr.bf16.mxu0 0
      %905 = vmatpush1.bf16.msra.mxu0 %v616
      %906 = vmatprep.subr.bf16.mxu0 0
      %907 = vmatpush1.bf16.msra.mxu0 %v615
      %908 = vmatprep.subr.bf16.mxu0 0
      %909 = vmatpush1.bf16.msra.mxu0 %v614
      %910 = vmatprep.subr.bf16.mxu0 0
      %911 = vmatpush1.bf16.msra.mxu0 %v613
      %912 = vmatprep.subr.bf16.mxu0 0
      %913 = vmatpush2.bf16.msra.mxu0 0
      %914 = vmatprep.subr.bf16.mxu0 0
      %915 = vmatpush2.bf16.msra.mxu0 0
      %916 = vmatprep.subr.bf16.mxu0 0
      %917 = vmatpush2.bf16.msra.mxu0 0
      %918 = vmatprep.subr.bf16.mxu0 0
      %919 = vmatpush2.bf16.msra.mxu0 0
      %920 = vmatprep.subr.bf16.mxu0 0
      %921 = vmatpush2.bf16.msra.mxu0 0
      %922 = vmatprep.subr.bf16.mxu0 0
      %923 = vmatpush2.bf16.msra.mxu0 0
      %924 = vmatprep.subr.bf16.mxu0 0
      %925 = vmatpush2.bf16.msra.mxu0 0
      %926 = vmatprep.subr.bf16.mxu0 0
      %927 = vmatpush2.bf16.msra.mxu0 0
      %928 = vmatprep.mubr.bf16.mxu0 0
      %929 = vmatmul.mubr.bf16.gmra.mxu0 %v812
      %v930 = vpop.f32.mrf.mxu0
      %v931 = vadd.f32 %v890, %v930
      %v932 = vpop.f32.mrf.mxu0
      %v933 = vpop.f32.mrf.mxu0
      %v934 = vadd.f32 %v893, %v933
      %v935 = vpop.f32.mrf.mxu0
      %936 = vdwg.mxu0
      %v937 = vmax.f32 %v774, %v931
      %v938 = vmax.f32 %v777, %v934
      %v939 = vld [vmem:[%s318] sm:$0xff]
      %v940 = vld [vmem:[%s318 + $0x8] sm:$0xff]
      %v941 = vld [vmem:[%s318 + $0x10] sm:$0xf]
      %v942 = vld [vmem:[%s318 + $0x14] sm:$0xff]
      %v943 = vld [vmem:[%s318 + $0x1c] sm:$0xff]
      %v944 = vld [vmem:[%s318 + $0x24] sm:$0xf]
      %v951 = vunpack.c.l.b16 %v939
      %v952 = vunpack.c.h.b16 %v939
      %v953 = vunpack.c.l.b16 %v940
      %v954 = vunpack.c.h.b16 %v940
      %v955 = vunpack.c.l.b16 %v941
      %v956 = vunpack.c.l.b16 %v942
      %v957 = vunpack.c.h.b16 %v942
      %v958 = vunpack.c.l.b16 %v943
      %v959 = vunpack.c.h.b16 %v943
      %v960 = vunpack.c.l.b16 %v944
      %v961 = vpack.c.b16 %v956, %v951
      %v962 = vpack.c.b16 %v957, %v952
      %v963 = vpack.c.b16 %v958, %v953
      %v964 = vpack.c.b16 %v959, %v954
      %v965 = vpack.c.b16 %v960, %v955
      %v971 = vsel %vm653, %v965, 0
      %973 = vmatprep.subr.bf16.mxu0 0
      %974 = vmatpush1.bf16.msra.mxu0 %v588
      %975 = vmatprep.subr.bf16.mxu0 0
      %976 = vmatpush1.bf16.msra.mxu0 %v587
      %977 = vmatprep.subr.bf16.mxu0 0
      %978 = vmatpush1.bf16.msra.mxu0 %v586
      %979 = vmatprep.subr.bf16.mxu0 0
      %980 = vmatpush1.bf16.msra.mxu0 %v585
      %981 = vmatprep.subr.bf16.mxu0 0
      %982 = vmatpush1.bf16.msra.mxu0 %v584
      %983 = vmatprep.subr.bf16.mxu0 0
      %984 = vmatpush1.bf16.msra.mxu0 %v583
      %985 = vmatprep.subr.bf16.mxu0 0
      %986 = vmatpush1.bf16.msra.mxu0 %v582
      %987 = vmatprep.subr.bf16.mxu0 0
      %988 = vmatpush1.bf16.msra.mxu0 %v581
      %989 = vmatprep.subr.bf16.mxu0 0
      %990 = vmatpush2.bf16.msra.mxu0 %v596
      %991 = vmatprep.subr.bf16.mxu0 0
      %992 = vmatpush2.bf16.msra.mxu0 %v595
      %993 = vmatprep.subr.bf16.mxu0 0
      %994 = vmatpush2.bf16.msra.mxu0 %v594
      %995 = vmatprep.subr.bf16.mxu0 0
      %996 = vmatpush2.bf16.msra.mxu0 %v593
      %997 = vmatprep.subr.bf16.mxu0 0
      %998 = vmatpush2.bf16.msra.mxu0 %v592
      %999 = vmatprep.subr.bf16.mxu0 0
      %1000 = vmatpush2.bf16.msra.mxu0 %v591
      %1001 = vmatprep.subr.bf16.mxu0 0
      %1002 = vmatpush2.bf16.msra.mxu0 %v590
      %1003 = vmatprep.subr.bf16.mxu0 0
      %1004 = vmatpush2.bf16.msra.mxu0 %v589
      %1005 = vmatprep.mubr.bf16.mxu0 %v962
      %1006 = vmatmul.mubr.bf16.gmra.mxu0 %v961
      %v1007 = vpop.f32.mrf.mxu0
      %v1008 = vadd.f32 0.0, %v1007
      %v1009 = vpop.f32.mrf.mxu0
      %v1010 = vpop.f32.mrf.mxu0
      %v1011 = vadd.f32 0.0, %v1010
      %v1012 = vpop.f32.mrf.mxu0
      %1013 = vdwg.mxu0
      %1014 = vmatprep.subr.bf16.mxu0 0
      %1015 = vmatpush1.bf16.msra.mxu0 %v604
      %1016 = vmatprep.subr.bf16.mxu0 0
      %1017 = vmatpush1.bf16.msra.mxu0 %v603
      %1018 = vmatprep.subr.bf16.mxu0 0
      %1019 = vmatpush1.bf16.msra.mxu0 %v602
      %1020 = vmatprep.subr.bf16.mxu0 0
      %1021 = vmatpush1.bf16.msra.mxu0 %v601
      %1022 = vmatprep.subr.bf16.mxu0 0
      %1023 = vmatpush1.bf16.msra.mxu0 %v600
      %1024 = vmatprep.subr.bf16.mxu0 0
      %1025 = vmatpush1.bf16.msra.mxu0 %v599
      %1026 = vmatprep.subr.bf16.mxu0 0
      %1027 = vmatpush1.bf16.msra.mxu0 %v598
      %1028 = vmatprep.subr.bf16.mxu0 0
      %1029 = vmatpush1.bf16.msra.mxu0 %v597
      %1030 = vmatprep.subr.bf16.mxu0 0
      %1031 = vmatpush2.bf16.msra.mxu0 %v612
      %1032 = vmatprep.subr.bf16.mxu0 0
      %1033 = vmatpush2.bf16.msra.mxu0 %v611
      %1034 = vmatprep.subr.bf16.mxu0 0
      %1035 = vmatpush2.bf16.msra.mxu0 %v610
      %1036 = vmatprep.subr.bf16.mxu0 0
      %1037 = vmatpush2.bf16.msra.mxu0 %v609
      %1038 = vmatprep.subr.bf16.mxu0 0
      %1039 = vmatpush2.bf16.msra.mxu0 %v608
      %1040 = vmatprep.subr.bf16.mxu0 0
      %1041 = vmatpush2.bf16.msra.mxu0 %v607
      %1042 = vmatprep.subr.bf16.mxu0 0
      %1043 = vmatpush2.bf16.msra.mxu0 %v606
      %1044 = vmatprep.subr.bf16.mxu0 0
      %1045 = vmatpush2.bf16.msra.mxu0 %v605
      %1046 = vmatprep.mubr.bf16.mxu0 %v964
      %1047 = vmatmul.mubr.bf16.gmra.mxu0 %v963
      %v1048 = vpop.f32.mrf.mxu0
      %v1049 = vadd.f32 %v1008, %v1048
      %v1050 = vpop.f32.mrf.mxu0
      %v1051 = vpop.f32.mrf.mxu0
      %v1052 = vadd.f32 %v1011, %v1051
      %v1053 = vpop.f32.mrf.mxu0
      %1054 = vdwg.mxu0
      %1055 = vmatprep.subr.bf16.mxu0 0
      %1056 = vmatpush1.bf16.msra.mxu0 0
      %1057 = vmatprep.subr.bf16.mxu0 0
      %1058 = vmatpush1.bf16.msra.mxu0 0
      %1059 = vmatprep.subr.bf16.mxu0 0
      %1060 = vmatpush1.bf16.msra.mxu0 0
      %1061 = vmatprep.subr.bf16.mxu0 0
      %1062 = vmatpush1.bf16.msra.mxu0 0
      %1063 = vmatprep.subr.bf16.mxu0 0
      %1064 = vmatpush1.bf16.msra.mxu0 %v616
      %1065 = vmatprep.subr.bf16.mxu0 0
      %1066 = vmatpush1.bf16.msra.mxu0 %v615
      %1067 = vmatprep.subr.bf16.mxu0 0
      %1068 = vmatpush1.bf16.msra.mxu0 %v614
      %1069 = vmatprep.subr.bf16.mxu0 0
      %1070 = vmatpush1.bf16.msra.mxu0 %v613
      %1071 = vmatprep.subr.bf16.mxu0 0
      %1072 = vmatpush2.bf16.msra.mxu0 0
      %1073 = vmatprep.subr.bf16.mxu0 0
      %1074 = vmatpush2.bf16.msra.mxu0 0
      %1075 = vmatprep.subr.bf16.mxu0 0
      %1076 = vmatpush2.bf16.msra.mxu0 0
      %1077 = vmatprep.subr.bf16.mxu0 0
      %1078 = vmatpush2.bf16.msra.mxu0 0
      %1079 = vmatprep.subr.bf16.mxu0 0
      %1080 = vmatpush2.bf16.msra.mxu0 0
      %1081 = vmatprep.subr.bf16.mxu0 0
      %1082 = vmatpush2.bf16.msra.mxu0 0
      %1083 = vmatprep.subr.bf16.mxu0 0
      %1084 = vmatpush2.bf16.msra.mxu0 0
      %1085 = vmatprep.subr.bf16.mxu0 0
      %1086 = vmatpush2.bf16.msra.mxu0 0
      %1087 = vmatprep.mubr.bf16.mxu0 0
      %1088 = vmatmul.mubr.bf16.gmra.mxu0 %v971
      %v1089 = vpop.f32.mrf.mxu0
      %v1090 = vadd.f32 %v1049, %v1089
      %v1091 = vpop.f32.mrf.mxu0
      %v1092 = vpop.f32.mrf.mxu0
      %v1093 = vadd.f32 %v1052, %v1092
      %v1094 = vpop.f32.mrf.mxu0
      %1095 = vdwg.mxu0
      %v1096 = vmax.f32 %v937, %v1090
      %v1097 = vmax.f32 %v938, %v1093
      %v1098 = vld [vmem:[%s325] sm:$0xff]
      %v1099 = vld [vmem:[%s325 + $0x8] sm:$0xff]
      %v1100 = vld [vmem:[%s325 + $0x10] sm:$0xf]
      %v1101 = vld [vmem:[%s325 + $0x14] sm:$0xff]
      %v1102 = vld [vmem:[%s325 + $0x1c] sm:$0xff]
      %v1103 = vld [vmem:[%s325 + $0x24] sm:$0xf]
      %v1110 = vunpack.c.l.b16 %v1098
      %v1111 = vunpack.c.h.b16 %v1098
      %v1112 = vunpack.c.l.b16 %v1099
      %v1113 = vunpack.c.h.b16 %v1099
      %v1114 = vunpack.c.l.b16 %v1100
      %v1115 = vunpack.c.l.b16 %v1101
      %v1116 = vunpack.c.h.b16 %v1101
      %v1117 = vunpack.c.l.b16 %v1102
      %v1118 = vunpack.c.h.b16 %v1102
      %v1119 = vunpack.c.l.b16 %v1103
      %v1120 = vpack.c.b16 %v1115, %v1110
      %v1121 = vpack.c.b16 %v1116, %v1111
      %v1122 = vpack.c.b16 %v1117, %v1112
      %v1123 = vpack.c.b16 %v1118, %v1113
      %v1124 = vpack.c.b16 %v1119, %v1114
      %v1130 = vsel %vm653, %v1124, 0
      %1132 = vmatprep.subr.bf16.mxu0 0
      %1133 = vmatpush1.bf16.msra.mxu0 %v588
      %1134 = vmatprep.subr.bf16.mxu0 0
      %1135 = vmatpush1.bf16.msra.mxu0 %v587
      %1136 = vmatprep.subr.bf16.mxu0 0
      %1137 = vmatpush1.bf16.msra.mxu0 %v586
      %1138 = vmatprep.subr.bf16.mxu0 0
      %1139 = vmatpush1.bf16.msra.mxu0 %v585
      %1140 = vmatprep.subr.bf16.mxu0 0
      %1141 = vmatpush1.bf16.msra.mxu0 %v584
      %1142 = vmatprep.subr.bf16.mxu0 0
      %1143 = vmatpush1.bf16.msra.mxu0 %v583
      %1144 = vmatprep.subr.bf16.mxu0 0
      %1145 = vmatpush1.bf16.msra.mxu0 %v582
      %1146 = vmatprep.subr.bf16.mxu0 0
      %1147 = vmatpush1.bf16.msra.mxu0 %v581
      %1148 = vmatprep.subr.bf16.mxu0 0
      %1149 = vmatpush2.bf16.msra.mxu0 %v596
      %1150 = vmatprep.subr.bf16.mxu0 0
      %1151 = vmatpush2.bf16.msra.mxu0 %v595
      %1152 = vmatprep.subr.bf16.mxu0 0
      %1153 = vmatpush2.bf16.msra.mxu0 %v594
      %1154 = vmatprep.subr.bf16.mxu0 0
      %1155 = vmatpush2.bf16.msra.mxu0 %v593
      %1156 = vmatprep.subr.bf16.mxu0 0
      %1157 = vmatpush2.bf16.msra.mxu0 %v592
      %1158 = vmatprep.subr.bf16.mxu0 0
      %1159 = vmatpush2.bf16.msra.mxu0 %v591
      %1160 = vmatprep.subr.bf16.mxu0 0
      %1161 = vmatpush2.bf16.msra.mxu0 %v590
      %1162 = vmatprep.subr.bf16.mxu0 0
      %1163 = vmatpush2.bf16.msra.mxu0 %v589
      %1164 = vmatprep.mubr.bf16.mxu0 %v1121
      %1165 = vmatmul.mubr.bf16.gmra.mxu0 %v1120
      %v1166 = vpop.f32.mrf.mxu0
      %v1167 = vadd.f32 0.0, %v1166
      %v1168 = vpop.f32.mrf.mxu0
      %v1169 = vpop.f32.mrf.mxu0
      %v1170 = vadd.f32 0.0, %v1169
      %v1171 = vpop.f32.mrf.mxu0
      %1172 = vdwg.mxu0
      %1173 = vmatprep.subr.bf16.mxu0 0
      %1174 = vmatpush1.bf16.msra.mxu0 %v604
      %1175 = vmatprep.subr.bf16.mxu0 0
      %1176 = vmatpush1.bf16.msra.mxu0 %v603
      %1177 = vmatprep.subr.bf16.mxu0 0
      %1178 = vmatpush1.bf16.msra.mxu0 %v602
      %1179 = vmatprep.subr.bf16.mxu0 0
      %1180 = vmatpush1.bf16.msra.mxu0 %v601
      %1181 = vmatprep.subr.bf16.mxu0 0
      %1182 = vmatpush1.bf16.msra.mxu0 %v600
      %1183 = vmatprep.subr.bf16.mxu0 0
      %1184 = vmatpush1.bf16.msra.mxu0 %v599
      %1185 = vmatprep.subr.bf16.mxu0 0
      %1186 = vmatpush1.bf16.msra.mxu0 %v598
      %1187 = vmatprep.subr.bf16.mxu0 0
      %1188 = vmatpush1.bf16.msra.mxu0 %v597
      %1189 = vmatprep.subr.bf16.mxu0 0
      %1190 = vmatpush2.bf16.msra.mxu0 %v612
      %1191 = vmatprep.subr.bf16.mxu0 0
      %1192 = vmatpush2.bf16.msra.mxu0 %v611
      %1193 = vmatprep.subr.bf16.mxu0 0
      %1194 = vmatpush2.bf16.msra.mxu0 %v610
      %1195 = vmatprep.subr.bf16.mxu0 0
      %1196 = vmatpush2.bf16.msra.mxu0 %v609
      %1197 = vmatprep.subr.bf16.mxu0 0
      %1198 = vmatpush2.bf16.msra.mxu0 %v608
      %1199 = vmatprep.subr.bf16.mxu0 0
      %1200 = vmatpush2.bf16.msra.mxu0 %v607
      %1201 = vmatprep.subr.bf16.mxu0 0
      %1202 = vmatpush2.bf16.msra.mxu0 %v606
      %1203 = vmatprep.subr.bf16.mxu0 0
      %1204 = vmatpush2.bf16.msra.mxu0 %v605
      %1205 = vmatprep.mubr.bf16.mxu0 %v1123
      %1206 = vmatmul.mubr.bf16.gmra.mxu0 %v1122
      %v1207 = vpop.f32.mrf.mxu0
      %v1208 = vadd.f32 %v1167, %v1207
      %v1209 = vpop.f32.mrf.mxu0
      %v1210 = vpop.f32.mrf.mxu0
      %v1211 = vadd.f32 %v1170, %v1210
      %v1212 = vpop.f32.mrf.mxu0
      %1213 = vdwg.mxu0
      %1214 = vmatprep.subr.bf16.mxu0 0
      %1215 = vmatpush1.bf16.msra.mxu0 0
      %1216 = vmatprep.subr.bf16.mxu0 0
      %1217 = vmatpush1.bf16.msra.mxu0 0
      %1218 = vmatprep.subr.bf16.mxu0 0
      %1219 = vmatpush1.bf16.msra.mxu0 0
      %1220 = vmatprep.subr.bf16.mxu0 0
      %1221 = vmatpush1.bf16.msra.mxu0 0
      %1222 = vmatprep.subr.bf16.mxu0 0
      %1223 = vmatpush1.bf16.msra.mxu0 %v616
      %1224 = vmatprep.subr.bf16.mxu0 0
      %1225 = vmatpush1.bf16.msra.mxu0 %v615
      %1226 = vmatprep.subr.bf16.mxu0 0
      %1227 = vmatpush1.bf16.msra.mxu0 %v614
      %1228 = vmatprep.subr.bf16.mxu0 0
      %1229 = vmatpush1.bf16.msra.mxu0 %v613
      %1230 = vmatprep.subr.bf16.mxu0 0
      %1231 = vmatpush2.bf16.msra.mxu0 0
      %1232 = vmatprep.subr.bf16.mxu0 0
      %1233 = vmatpush2.bf16.msra.mxu0 0
      %1234 = vmatprep.subr.bf16.mxu0 0
      %1235 = vmatpush2.bf16.msra.mxu0 0
      %1236 = vmatprep.subr.bf16.mxu0 0
      %1237 = vmatpush2.bf16.msra.mxu0 0
      %1238 = vmatprep.subr.bf16.mxu0 0
      %1239 = vmatpush2.bf16.msra.mxu0 0
      %1240 = vmatprep.subr.bf16.mxu0 0
      %1241 = vmatpush2.bf16.msra.mxu0 0
      %1242 = vmatprep.subr.bf16.mxu0 0
      %1243 = vmatpush2.bf16.msra.mxu0 0
      %1244 = vmatprep.subr.bf16.mxu0 0
      %1245 = vmatpush2.bf16.msra.mxu0 0
      %1246 = vmatprep.mubr.bf16.mxu0 0
      %1247 = vmatmul.mubr.bf16.gmra.mxu0 %v1130
      %v1248 = vpop.f32.mrf.mxu0
      %v1249 = vadd.f32 %v1208, %v1248
      %v1250 = vpop.f32.mrf.mxu0
      %v1251 = vpop.f32.mrf.mxu0
      %v1252 = vadd.f32 %v1211, %v1251
      %v1253 = vpop.f32.mrf.mxu0
      %1254 = vdwg.mxu0
      %v1255 = vmax.f32 %v1096, %v1249
      %v1256 = vmax.f32 %v1097, %v1252
      %v1257 = vld [vmem:[%s5] sm:$0x1]
      %v1259 = vlaneseq
      %v1260 = vshrl.u32 %v1259, 7
      %v1261 = vsub.s32 0, %v1260
      %v1262 = vrot.slane %v1257, %v1261
      %v1264 = vadd.f32 %v1255, %v1262
      %v1265 = vadd.f32 %v1256, %v1262
      %v1266 = vmax.f32 %v1264, 0.0
      %v1267 = vmax.f32 %v1265, 0.0
      %v1268 = vpack.c.bf16 %v1267, %v1266
      %v1270 = vunpack.c.l.b16 %v1268
      %v1271 = vunpack.c.h.b16 %v1268
      %v1272 = vpack.c.b16 %v1270, %v1270
      %v1273 = vpack.c.b16 %v1271, %v1271
      %1276 = vst [vmem:[%s331] sm:$0xf] %v1272
      %1277 = vst [vmem:[%s331 + $0x4] sm:$0xf] %v1273
      %s1278 = smul.u32 2, %s17
      %p1279 = scmp.lt.s32.totalorder %s1278, 3
      %s1280 = scalar_select %p1279, %s1278, 3
      %s1281 = smul.addr %s1280, 4
      %s1282 = scalar_lea.vmem %s6, %s1281
      // Predicated region
      $region45: #{mnist_feature_extractor.4} parent=43 // pred_check
        %p1283 = pneg %p181
      $region46: #{mnist_feature_extractor.4} parent=43 // pred_check_branch
        %1285 = sbr.rel (%p1283) target = $region48
      $region47: #{mnist_feature_extractor.4} parent=43 // pred_region
        %s1286 = smul.u32 2, %s17
      $region48: #{mnist_feature_extractor.4} parent=43 // pred_fallthru
        _
    $region44: #{mnist_feature_extractor.4} parent=5 // pred_fallthru
      _
    %p1287 = scmp.le.s32.totalorder 2, %s12
    // Predicated region
    $region49: #{mnist_feature_extractor.4} parent=5 // pred_check
      %p1288 = pneg %p1287
    $region50: #{mnist_feature_extractor.4} parent=5 // pred_check_branch
      %1290 = sbr.rel (%p1288) target = $region52
    $region51: #{mnist_feature_extractor.4} parent=5 // pred_region
      %s1291 = ssub.s32 %s12, 2
      // Predicated region
      $region53: #{mnist_feature_extractor.4} parent=51 // pred_check
        %p1292 = pneg %p187
      $region54: #{mnist_feature_extractor.4} parent=51 // pred_check_branch
        %1294 = sbr.rel (%p1292) target = $region56
      $region55: #{mnist_feature_extractor.4} parent=51 // pred_region
        %s1295 = smul.u32 2, %s18
        %p1296 = scmp.lt.s32.totalorder %s1295, 3
        %s1297 = scalar_select %p1296, %s1295, 3
        %s1298 = smul.addr %s1297, 4
        %s1299 = scalar_lea.vmem %s6, %s1298
      $region56: #{mnist_feature_extractor.4} parent=51 // pred_fallthru
        _
    $region52: #{mnist_feature_extractor.4} parent=5 // pred_fallthru
      _
  $region6: #{mnist_feature_extractor.4} parent=0 // loop_footer
    %s16 = sadd.s32 1, %s12
  $region7: #{mnist_feature_extractor.4} parent=0 // loop_footer_branch
    %11 = sbr.rel target = $region3
  $region8: #{mnist_feature_extractor.4} parent=0 // loop_exit
    _

// kernel: tile.28
$region0: #{tile.28}
  #allocation0 [shape = 's32[1]{0}', space=sflag, size = 0x4, scoped, tag = 'scoped memory for tile.28']
  %s0 = inlined_call_operand.vmem [shape: f32[64], index: 0, kind: input, shape index: {}]
  %s1 = inlined_call_operand.vmem [shape: f32[2,64], index: 1, kind: output, shape index: {}]
  // Predicated region
  $region2: #{tile.28} parent=0 // pred_check
    _
  $region3: #{tile.28} parent=0 // pred_check_branch
    %3 = sbr.rel (0) target = $region5
  $region4: #{tile.28} parent=0 // pred_region
    _
  $region5: #{tile.28} parent=0 // pred_fallthru
    _
  %v4 = vld [vmem:[%s0] ss:$0 sm:$0xff]
  %5 = vst [vmem:[%s1] sm:$0x3] %v4

// kernel: tile.29
$region0: #{tile.29}
  %s0 = inlined_call_operand.vmem [shape: f32[2,64], index: 0, kind: input, shape index: {}]
  %s1 = inlined_call_operand.vmem [shape: f32[1,128], index: 1, kind: output, shape index: {}]
  $region1: #{tile.29} parent=0
    #allocation0 [shape = 'u8[4096]{0}', space=vmem, size = 0x1000, scoped, tag = 'scoped mem for output reshape']
    #allocation1 [shape = 'u8[4096]{0}', space=vmem, size = 0x1000, scoped, tag = 'scoped mem for input reshape']
    %s3 = sshll.u32 1, 2
    %s4 = ssub.s32 %s3, 1
    %v5 = vld [vmem:[%s0] sm:%s4]
    %6 = vst [vmem:[#allocation1] sm:%s4] %v5
    %v7 = vld [vmem:[#allocation1] sm:$0x1]
    %vm8 = vcmask 523264
    %9 = vst.msk [vmem:[#allocation0] sm:$0x1] %vm8, %v7
    %s10 = scalar_lea.vmem [#allocation1], 1
    %v11 = vld [vmem:[%s10] sm:$0x1]
    %12 = vrot.lane.b32.xlu0 %v11, 64
    %v13 = vpop.permute.xlu0 %12
    %vm14 = vcmask 1048064
    %15 = vst.msk [vmem:[#allocation0] sm:$0x1] %vm14, %v13
    %s17 = sshll.u32 1, 1
    %s18 = ssub.s32 %s17, 1
    %v20 = vld [vmem:[#allocation0] sm:%s18]
    %s21 = sshll.u32 1, 1
    %s22 = ssub.s32 %s21, 1
    %23 = vst [vmem:[%s1] sm:%s22] %v20

// kernel: mnist_feature_extractor.5
$region0: #{mnist_feature_extractor.5}
  #allocation0 [shape = 'u32[]', space=smem, size = 0x4, offset = 0x4, fixed_abs, tag = 'smem constant byte address 0x4 - core index']
  #allocation1 [shape = 'u32[144,128]{1,0:T(1,128)}', space=vmem, size = 0x12000, scoped, tag = 'internal scratch']
  %s0 = inlined_call_operand.vmem [shape: bf16[9,576], index: 0, kind: input, shape index: {}]
  %s1 = inlined_call_operand.vmem [shape: bf16[9,576], index: 1, kind: input, shape index: {}]
  %s2 = inlined_call_operand.vmem [shape: bf16[9,576], index: 2, kind: input, shape index: {}]
  %s3 = inlined_call_operand.vmem [shape: bf16[9,576], index: 3, kind: input, shape index: {}]
  %s4 = inlined_call_operand.vmem [shape: bf16[576,128], index: 4, kind: input, shape index: {}]
  %s5 = inlined_call_operand.vmem [shape: f32[1,128], index: 5, kind: input, shape index: {}]
  %s6 = inlined_call_operand.vmem [shape: f32[9,128], index: 6, kind: output, shape index: {}]
  %s7 = sld [smem:[#allocation0]]
  $region57: #{mnist_feature_extractor.5} parent=0
    _
  %s9 = ssub.s32 1, %s7
  %s10 = scalar_select 0, %s9, %s7
  loop: start=0, step=1, limit=4
  $region2: #{mnist_feature_extractor.5} parent=0 // loop_pre_header
    _
  $region3: #{mnist_feature_extractor.5} parent=0 // loop_header
    %s12 = sphi 0, %s16
    %p13 = scmp.ge.s32.totalorder %s12, 4
    %s22 = sphi 0, %s24
    %s25 = sphi 0, %s22
    %s26 = sphi 0, %s25
    %s42 = sphi 0, %s26
    %s48 = sphi 0, %s50
    %s51 = sphi 0, %s48
    %s52 = sphi 0, %s51
    %s68 = sphi 0, %s52
    %s74 = sphi 0, %s76
    %s77 = sphi 0, %s74
    %s78 = sphi 0, %s77
    %s94 = sphi 0, %s78
    %s100 = sphi 0, %s102
    %s103 = sphi 0, %s100
    %s104 = sphi 0, %s103
    %s120 = sphi 0, %s104
    %s124 = sphi 0, %s124
    %s126 = sphi 0, %s124
    %s127 = sphi 0, %s126
    %s141 = sphi 0, %s127
    %s145 = sphi 0, %s145
    %s147 = sphi 0, %s145
    %s148 = sphi 0, %s147
    %s162 = sphi 0, %s148
    %s168 = sphi 0, %s170
    %s171 = sphi 0, %s168
    %s172 = sphi 0, %s171
    %s188 = sphi 0, %s172
  $region4: #{mnist_feature_extractor.5} parent=0 // loop_header_branch
    %15 = sbr.rel (%p13) target = $region8
  $region5: #{mnist_feature_extractor.5} parent=0 // loop_body
    %s17 = ssub.s32 %s12, 1
    %s18 = ssub.s32 %s12, 2
    %s19 = sadd.s32 %s12, 1
    %s20 = ssub.s32 %s12, %s19
    %p21 = scmp.eq.s32.totalorder %s20, 0
    %s23 = sadd.s32 %s22, 1
    %s24 = scalar_select %p21, %s22, %s23
    %p27 = pneg %p21
    %p28 = scmp.eq.s32.totalorder %s12, 1
    %p29 = por %p27, %p28
    %p30 = scmp.ne.s32.totalorder %s22, %s25
    %p31 = scmp.eq.s32.totalorder %s12, 0
    %p32 = por %p30, %p31
    %p33 = scmp.ne.s32.totalorder %s22, %s25
    %p34 = scmp.eq.s32.totalorder %s17, 1
    %p35 = por %p33, %p34
    %p36 = scmp.ne.s32.totalorder %s25, %s26
    %p37 = scmp.eq.s32.totalorder %s17, 0
    %p38 = por %p36, %p37
    %p39 = scmp.ne.s32.totalorder %s25, %s26
    %p40 = scmp.eq.s32.totalorder %s18, 1
    %p41 = por %p39, %p40
    %p43 = scmp.ne.s32.totalorder %s26, %s42
    %p44 = scmp.eq.s32.totalorder %s18, 0
    %p45 = por %p43, %p44
    %s46 = ssub.s32 %s12, %s19
    %p47 = scmp.eq.s32.totalorder %s46, 0
    %s49 = sadd.s32 %s48, 1
    %s50 = scalar_select %p47, %s48, %s49
    %p53 = pneg %p47
    %p54 = scmp.eq.s32.totalorder %s12, 1
    %p55 = por %p53, %p54
    %p56 = scmp.ne.s32.totalorder %s48, %s51
    %p57 = scmp.eq.s32.totalorder %s12, 0
    %p58 = por %p56, %p57
    %p59 = scmp.ne.s32.totalorder %s48, %s51
    %p60 = scmp.eq.s32.totalorder %s17, 1
    %p61 = por %p59, %p60
    %p62 = scmp.ne.s32.totalorder %s51, %s52
    %p63 = scmp.eq.s32.totalorder %s17, 0
    %p64 = por %p62, %p63
    %p65 = scmp.ne.s32.totalorder %s51, %s52
    %p66 = scmp.eq.s32.totalorder %s18, 1
    %p67 = por %p65, %p66
    %p69 = scmp.ne.s32.totalorder %s52, %s68
    %p70 = scmp.eq.s32.totalorder %s18, 0
    %p71 = por %p69, %p70
    %s72 = ssub.s32 %s12, %s19
    %p73 = scmp.eq.s32.totalorder %s72, 0
    %s75 = sadd.s32 %s74, 1
    %s76 = scalar_select %p73, %s74, %s75
    %p79 = pneg %p73
    %p80 = scmp.eq.s32.totalorder %s12, 1
    %p81 = por %p79, %p80
    %p82 = scmp.ne.s32.totalorder %s74, %s77
    %p83 = scmp.eq.s32.totalorder %s12, 0
    %p84 = por %p82, %p83
    %p85 = scmp.ne.s32.totalorder %s74, %s77
    %p86 = scmp.eq.s32.totalorder %s17, 1
    %p87 = por %p85, %p86
    %p88 = scmp.ne.s32.totalorder %s77, %s78
    %p89 = scmp.eq.s32.totalorder %s17, 0
    %p90 = por %p88, %p89
    %p91 = scmp.ne.s32.totalorder %s77, %s78
    %p92 = scmp.eq.s32.totalorder %s18, 1
    %p93 = por %p91, %p92
    %p95 = scmp.ne.s32.totalorder %s78, %s94
    %p96 = scmp.eq.s32.totalorder %s18, 0
    %p97 = por %p95, %p96
    %s98 = ssub.s32 %s12, %s19
    %p99 = scmp.eq.s32.totalorder %s98, 0
    %s101 = sadd.s32 %s100, 1
    %s102 = scalar_select %p99, %s100, %s101
    %p105 = pneg %p99
    %p106 = scmp.eq.s32.totalorder %s12, 1
    %p107 = por %p105, %p106
    %p108 = scmp.ne.s32.totalorder %s100, %s103
    %p109 = scmp.eq.s32.totalorder %s12, 0
    %p110 = por %p108, %p109
    %p111 = scmp.ne.s32.totalorder %s100, %s103
    %p112 = scmp.eq.s32.totalorder %s17, 1
    %p113 = por %p111, %p112
    %p114 = scmp.ne.s32.totalorder %s103, %s104
    %p115 = scmp.eq.s32.totalorder %s17, 0
    %p116 = por %p114, %p115
    %p117 = scmp.ne.s32.totalorder %s103, %s104
    %p118 = scmp.eq.s32.totalorder %s18, 1
    %p119 = por %p117, %p118
    %p121 = scmp.ne.s32.totalorder %s104, %s120
    %p122 = scmp.eq.s32.totalorder %s18, 0
    %p123 = por %p121, %p122
    %s125 = sadd.s32 %s124, 1
    %p128 = scmp.eq.s32.totalorder %s12, 1
    %p129 = scmp.ne.s32.totalorder %s124, %s126
    %p130 = scmp.eq.s32.totalorder %s12, 0
    %p131 = por %p129, %p130
    %p132 = scmp.ne.s32.totalorder %s124, %s126
    %p133 = scmp.eq.s32.totalorder %s17, 1
    %p134 = por %p132, %p133
    %p135 = scmp.ne.s32.totalorder %s126, %s127
    %p136 = scmp.eq.s32.totalorder %s17, 0
    %p137 = por %p135, %p136
    %p138 = scmp.ne.s32.totalorder %s126, %s127
    %p139 = scmp.eq.s32.totalorder %s18, 1
    %p140 = por %p138, %p139
    %p142 = scmp.ne.s32.totalorder %s127, %s141
    %p143 = scmp.eq.s32.totalorder %s18, 0
    %p144 = por %p142, %p143
    %s146 = sadd.s32 %s145, 1
    %p149 = scmp.eq.s32.totalorder %s12, 1
    %p150 = scmp.ne.s32.totalorder %s145, %s147
    %p151 = scmp.eq.s32.totalorder %s12, 0
    %p152 = por %p150, %p151
    %p153 = scmp.ne.s32.totalorder %s145, %s147
    %p154 = scmp.eq.s32.totalorder %s17, 1
    %p155 = por %p153, %p154
    %p156 = scmp.ne.s32.totalorder %s147, %s148
    %p157 = scmp.eq.s32.totalorder %s17, 0
    %p158 = por %p156, %p157
    %p159 = scmp.ne.s32.totalorder %s147, %s148
    %p160 = scmp.eq.s32.totalorder %s18, 1
    %p161 = por %p159, %p160
    %p163 = scmp.ne.s32.totalorder %s148, %s162
    %p164 = scmp.eq.s32.totalorder %s18, 0
    %p165 = por %p163, %p164
    %s166 = ssub.s32 %s12, %s19
    %p167 = scmp.eq.s32.totalorder %s166, 0
    %s169 = sadd.s32 %s168, 1
    %s170 = scalar_select %p167, %s168, %s169
    %p173 = pneg %p167
    %p174 = scmp.eq.s32.totalorder %s12, 1
    %p175 = por %p173, %p174
    %p176 = scmp.ne.s32.totalorder %s168, %s171
    %p177 = scmp.eq.s32.totalorder %s12, 0
    %p178 = por %p176, %p177
    %p179 = scmp.ne.s32.totalorder %s168, %s171
    %p180 = scmp.eq.s32.totalorder %s17, 1
    %p181 = por %p179, %p180
    %p182 = scmp.ne.s32.totalorder %s171, %s172
    %p183 = scmp.eq.s32.totalorder %s17, 0
    %p184 = por %p182, %p183
    %p185 = scmp.ne.s32.totalorder %s171, %s172
    %p186 = scmp.eq.s32.totalorder %s18, 1
    %p187 = por %p185, %p186
    %p189 = scmp.ne.s32.totalorder %s172, %s188
    %p190 = scmp.eq.s32.totalorder %s18, 0
    %p191 = por %p189, %p190
    %p192 = scmp.le.s32.totalorder 1, %s12
    %p193 = scmp.lt.s32.totalorder %s12, 3
    %p194 = pnand %p192, %p193
    %p195 = pneg %p194
    // Predicated region
    $region9: #{mnist_feature_extractor.5} parent=5 // pred_check
      _
    $region10: #{mnist_feature_extractor.5} parent=5 // pred_check_branch
      %197 = sbr.rel (%p194) target = $region12
    $region11: #{mnist_feature_extractor.5} parent=5 // pred_region
      %s198 = ssub.s32 %s12, 1
      // Predicated region
      $region13: #{mnist_feature_extractor.5} parent=11 // pred_check
        %p199 = pneg %p137
      $region14: #{mnist_feature_extractor.5} parent=11 // pred_check_branch
        %201 = sbr.rel (%p199) target = $region16
      $region15: #{mnist_feature_extractor.5} parent=11 // pred_region
        _
      $region16: #{mnist_feature_extractor.5} parent=11 // pred_fallthru
        _
      // Predicated region
      $region17: #{mnist_feature_extractor.5} parent=11 // pred_check
        %p202 = pneg %p158
      $region18: #{mnist_feature_extractor.5} parent=11 // pred_check_branch
        %204 = sbr.rel (%p202) target = $region20
      $region19: #{mnist_feature_extractor.5} parent=11 // pred_region
        _
      $region20: #{mnist_feature_extractor.5} parent=11 // pred_fallthru
        _
    $region12: #{mnist_feature_extractor.5} parent=5 // pred_fallthru
      _
    %p205 = scmp.lt.s32.totalorder %s12, 2
    // Predicated region
    $region21: #{mnist_feature_extractor.5} parent=5 // pred_check
      %p206 = pneg %p205
    $region22: #{mnist_feature_extractor.5} parent=5 // pred_check_branch
      %208 = sbr.rel (%p206) target = $region24
    $region23: #{mnist_feature_extractor.5} parent=5 // pred_region
      // Predicated region
      $region25: #{mnist_feature_extractor.5} parent=23 // pred_check
        %p209 = pneg %p32
      $region26: #{mnist_feature_extractor.5} parent=23 // pred_check_branch
        %211 = sbr.rel (%p209) target = $region28
      $region27: #{mnist_feature_extractor.5} parent=23 // pred_region
        %p212 = scmp.lt.s32.totalorder %s12, 1
        %s213 = scalar_select %p212, %s12, 1
        %s214 = smul.addr %s213, 5
        %s215 = smul.addr %s214, 4
        %s216 = scalar_lea.vmem %s0, %s215
      $region28: #{mnist_feature_extractor.5} parent=23 // pred_fallthru
        _
      // Predicated region
      $region29: #{mnist_feature_extractor.5} parent=23 // pred_check
        %p217 = pneg %p58
      $region30: #{mnist_feature_extractor.5} parent=23 // pred_check_branch
        %219 = sbr.rel (%p217) target = $region32
      $region31: #{mnist_feature_extractor.5} parent=23 // pred_region
        %p220 = scmp.lt.s32.totalorder %s12, 1
        %s221 = scalar_select %p220, %s12, 1
        %s222 = smul.addr %s221, 5
        %s223 = smul.addr %s222, 4
        %s224 = scalar_lea.vmem %s1, %s223
      $region32: #{mnist_feature_extractor.5} parent=23 // pred_fallthru
        _
      // Predicated region
      $region33: #{mnist_feature_extractor.5} parent=23 // pred_check
        %p225 = pneg %p84
      $region34: #{mnist_feature_extractor.5} parent=23 // pred_check_branch
        %227 = sbr.rel (%p225) target = $region36
      $region35: #{mnist_feature_extractor.5} parent=23 // pred_region
        %p228 = scmp.lt.s32.totalorder %s12, 1
        %s229 = scalar_select %p228, %s12, 1
        %s230 = smul.addr %s229, 5
        %s231 = smul.addr %s230, 4
        %s232 = scalar_lea.vmem %s2, %s231
      $region36: #{mnist_feature_extractor.5} parent=23 // pred_fallthru
        _
      // Predicated region
      $region37: #{mnist_feature_extractor.5} parent=23 // pred_check
        %p233 = pneg %p110
      $region38: #{mnist_feature_extractor.5} parent=23 // pred_check_branch
        %235 = sbr.rel (%p233) target = $region40
      $region39: #{mnist_feature_extractor.5} parent=23 // pred_region
        %p236 = scmp.lt.s32.totalorder %s12, 1
        %s237 = scalar_select %p236, %s12, 1
        %s238 = smul.addr %s237, 5
        %s239 = smul.addr %s238, 4
        %s240 = scalar_lea.vmem %s3, %s239
      $region40: #{mnist_feature_extractor.5} parent=23 // pred_fallthru
        _
    $region24: #{mnist_feature_extractor.5} parent=5 // pred_fallthru
      _
    %p241 = scmp.le.s32.totalorder 1, %s12
    %p242 = scmp.lt.s32.totalorder %s12, 3
    %p243 = pnand %p241, %p242
    %p244 = pneg %p243
    // Predicated region
    $region41: #{mnist_feature_extractor.5} parent=5 // pred_check
      _
    $region42: #{mnist_feature_extractor.5} parent=5 // pred_check_branch
      %246 = sbr.rel (%p243) target = $region44
    $region43: #{mnist_feature_extractor.5} parent=5 // pred_region
      %s247 = ssub.s32 %s12, 1
      %p248 = scmp.lt.s32.totalorder %s17, 1
      %s249 = scalar_select %p248, %s17, 1
      %s250 = smul.addr %s249, 5
      %s251 = smul.addr %s250, 4
      %s252 = scalar_lea.vmem %s0, %s251
      %p253 = pneg %p38
      %p254 = pneg %p35
      %p255 = scmp.lt.s32.totalorder %s17, 1
      %s256 = scalar_select %p255, %s17, 1
      %s257 = smul.addr %s256, 5
      %s258 = smul.addr %s257, 4
      %s259 = scalar_lea.vmem %s1, %s258
      %p260 = pneg %p64
      %p261 = pneg %p61
      %p262 = scmp.lt.s32.totalorder %s17, 1
      %s263 = scalar_select %p262, %s17, 1
      %s264 = smul.addr %s263, 5
      %s265 = smul.addr %s264, 4
      %s266 = scalar_lea.vmem %s2, %s265
      %p267 = pneg %p90
      %p268 = pneg %p87
      %p269 = scmp.lt.s32.totalorder %s17, 1
      %s270 = scalar_select %p269, %s17, 1
      %s271 = smul.addr %s270, 5
      %s272 = smul.addr %s271, 4
      %s273 = scalar_lea.vmem %s3, %s272
      %p274 = pneg %p116
      %p275 = pneg %p113
      %p276 = pneg %p137
      %p277 = pneg %p134
      %p278 = pneg %p158
      %p279 = pneg %p155
      %p280 = pneg %p184
      %p281 = pneg %p181
      %p282 = scmp.lt.s32.totalorder %s17, 1
      %s283 = scalar_select %p282, %s17, 1
      %s284 = smul.addr %s283, 8
      %s285 = scalar_lea.vmem %s6, %s284
      %p286 = scmp.lt.s32.totalorder %s17, 1
      %s287 = scalar_select %p286, %s17, 1
      %s288 = smul.addr %s287, 5
      %s289 = smul.addr %s288, 4
      %s290 = scalar_lea.vmem %s0, %s289
      %p291 = scmp.lt.s32.totalorder %s17, 1
      %s292 = scalar_select %p291, %s17, 1
      %s293 = smul.addr %s292, 5
      %s294 = smul.addr %s293, 4
      %s295 = scalar_lea.vmem %s1, %s294
      %p296 = scmp.lt.s32.totalorder %s17, 1
      %s297 = scalar_select %p296, %s17, 1
      %s298 = smul.addr %s297, 5
      %s299 = smul.addr %s298, 4
      %s300 = scalar_lea.vmem %s2, %s299
      %p301 = scmp.lt.s32.totalorder %s17, 1
      %s302 = scalar_select %p301, %s17, 1
      %s303 = smul.addr %s302, 5
      %s304 = smul.addr %s303, 4
      %s305 = scalar_lea.vmem %s3, %s304
      %p306 = scmp.lt.s32.totalorder %s17, 1
      %s307 = scalar_select %p306, %s17, 1
      %s308 = smul.addr %s307, 8
      %s309 = scalar_lea.vmem %s6, %s308
      %v311 = vld [vmem:[%s4] sm:$0xf]
      %v312 = vld [vmem:[%s4 + $0x4] sm:$0xf]
      %v313 = vld [vmem:[%s4 + $0x8] sm:$0xf]
      %v314 = vld [vmem:[%s4 + $0xc] sm:$0xf]
      %v315 = vld [vmem:[%s4 + $0x10] sm:$0xf]
      %v316 = vld [vmem:[%s4 + $0x14] sm:$0xf]
      %v317 = vld [vmem:[%s4 + $0x18] sm:$0xf]
      %v318 = vld [vmem:[%s4 + $0x1c] sm:$0xf]
      %v319 = vld [vmem:[%s4 + $0x20] sm:$0xf]
      %v320 = vld [vmem:[%s4 + $0x24] sm:$0xf]
      %v321 = vld [vmem:[%s4 + $0x28] sm:$0xf]
      %v322 = vld [vmem:[%s4 + $0x2c] sm:$0xf]
      %v323 = vld [vmem:[%s4 + $0x30] sm:$0xf]
      %v324 = vld [vmem:[%s4 + $0x34] sm:$0xf]
      %v325 = vld [vmem:[%s4 + $0x38] sm:$0xf]
      %v326 = vld [vmem:[%s4 + $0x3c] sm:$0xf]
      %v327 = vld [vmem:[%s4 + $0x40] sm:$0xf]
      %v328 = vld [vmem:[%s4 + $0x44] sm:$0xf]
      %v329 = vld [vmem:[%s4 + $0x48] sm:$0xf]
      %v330 = vld [vmem:[%s4 + $0x4c] sm:$0xf]
      %v331 = vld [vmem:[%s4 + $0x50] sm:$0xf]
      %v332 = vld [vmem:[%s4 + $0x54] sm:$0xf]
      %v333 = vld [vmem:[%s4 + $0x58] sm:$0xf]
      %v334 = vld [vmem:[%s4 + $0x5c] sm:$0xf]
      %v335 = vld [vmem:[%s4 + $0x60] sm:$0xf]
      %v336 = vld [vmem:[%s4 + $0x64] sm:$0xf]
      %v337 = vld [vmem:[%s4 + $0x68] sm:$0xf]
      %v338 = vld [vmem:[%s4 + $0x6c] sm:$0xf]
      %v339 = vld [vmem:[%s4 + $0x70] sm:$0xf]
      %v340 = vld [vmem:[%s4 + $0x74] sm:$0xf]
      %v341 = vld [vmem:[%s4 + $0x78] sm:$0xf]
      %v342 = vld [vmem:[%s4 + $0x7c] sm:$0xf]
      %v343 = vld [vmem:[%s4 + $0x80] sm:$0xf]
      %v344 = vld [vmem:[%s4 + $0x84] sm:$0xf]
      %v345 = vld [vmem:[%s4 + $0x88] sm:$0xf]
      %v346 = vld [vmem:[%s4 + $0x8c] sm:$0xf]
      %v347 = vld [vmem:[%s4 + $0x90] sm:$0xf]
      %v348 = vld [vmem:[%s4 + $0x94] sm:$0xf]
      %v349 = vld [vmem:[%s4 + $0x98] sm:$0xf]
      %v350 = vld [vmem:[%s4 + $0x9c] sm:$0xf]
      %v351 = vld [vmem:[%s4 + $0xa0] sm:$0xf]
      %v352 = vld [vmem:[%s4 + $0xa4] sm:$0xf]
      %v353 = vld [vmem:[%s4 + $0xa8] sm:$0xf]
      %v354 = vld [vmem:[%s4 + $0xac] sm:$0xf]
      %v355 = vld [vmem:[%s4 + $0xb0] sm:$0xf]
      %v356 = vld [vmem:[%s4 + $0xb4] sm:$0xf]
      %v357 = vld [vmem:[%s4 + $0xb8] sm:$0xf]
      %v358 = vld [vmem:[%s4 + $0xbc] sm:$0xf]
      %v359 = vld [vmem:[%s4 + $0xc0] sm:$0xf]
      %v360 = vld [vmem:[%s4 + $0xc4] sm:$0xf]
      %v361 = vld [vmem:[%s4 + $0xc8] sm:$0xf]
      %v362 = vld [vmem:[%s4 + $0xcc] sm:$0xf]
      %v363 = vld [vmem:[%s4 + $0xd0] sm:$0xf]
      %v364 = vld [vmem:[%s4 + $0xd4] sm:$0xf]
      %v365 = vld [vmem:[%s4 + $0xd8] sm:$0xf]
      %v366 = vld [vmem:[%s4 + $0xdc] sm:$0xf]
      %v367 = vld [vmem:[%s4 + $0xe0] sm:$0xf]
      %v368 = vld [vmem:[%s4 + $0xe4] sm:$0xf]
      %v369 = vld [vmem:[%s4 + $0xe8] sm:$0xf]
      %v370 = vld [vmem:[%s4 + $0xec] sm:$0xf]
      %v371 = vld [vmem:[%s4 + $0xf0] sm:$0xf]
      %v372 = vld [vmem:[%s4 + $0xf4] sm:$0xf]
      %v373 = vld [vmem:[%s4 + $0xf8] sm:$0xf]
      %v374 = vld [vmem:[%s4 + $0xfc] sm:$0xf]
      %v375 = vld [vmem:[%s4 + $0x100] sm:$0xf]
      %v376 = vld [vmem:[%s4 + $0x104] sm:$0xf]
      %v377 = vld [vmem:[%s4 + $0x108] sm:$0xf]
      %v378 = vld [vmem:[%s4 + $0x10c] sm:$0xf]
      %v379 = vld [vmem:[%s4 + $0x110] sm:$0xf]
      %v380 = vld [vmem:[%s4 + $0x114] sm:$0xf]
      %v381 = vld [vmem:[%s4 + $0x118] sm:$0xf]
      %v382 = vld [vmem:[%s4 + $0x11c] sm:$0xf]
      %v383 = vld [vmem:[%s290] sm:$0xff]
      %v384 = vld [vmem:[%s290 + $0x8] sm:$0xff]
      %v385 = vld [vmem:[%s290 + $0x10] sm:$0xf]
      %v389 = vunpack.c.l.b16 %v383
      %v390 = vunpack.c.h.b16 %v383
      %v391 = vunpack.c.l.b16 %v384
      %v392 = vunpack.c.h.b16 %v384
      %v393 = vunpack.c.l.b16 %v385
      %v394 = vpack.c.b16 %v389, %v389
      %v395 = vpack.c.b16 %v390, %v390
      %v396 = vpack.c.b16 %v391, %v391
      %v397 = vpack.c.b16 %v392, %v392
      %v398 = vpack.c.b16 %v393, %v393
      %v475 = vunpack.c.l.b16 %v311
      %v476 = vunpack.c.l.b16 %v312
      %v477 = vunpack.c.l.b16 %v313
      %v478 = vunpack.c.l.b16 %v314
      %v479 = vunpack.c.l.b16 %v315
      %v480 = vunpack.c.l.b16 %v316
      %v481 = vunpack.c.l.b16 %v317
      %v482 = vunpack.c.l.b16 %v318
      %v483 = vunpack.c.l.b16 %v319
      %v484 = vunpack.c.l.b16 %v320
      %v485 = vunpack.c.l.b16 %v321
      %v486 = vunpack.c.l.b16 %v322
      %v487 = vunpack.c.l.b16 %v323
      %v488 = vunpack.c.l.b16 %v324
      %v489 = vunpack.c.l.b16 %v325
      %v490 = vunpack.c.l.b16 %v326
      %v491 = vunpack.c.l.b16 %v327
      %v492 = vunpack.c.l.b16 %v328
      %v493 = vunpack.c.l.b16 %v329
      %v494 = vunpack.c.l.b16 %v330
      %v495 = vunpack.c.l.b16 %v331
      %v496 = vunpack.c.l.b16 %v332
      %v497 = vunpack.c.l.b16 %v333
      %v498 = vunpack.c.l.b16 %v334
      %v499 = vunpack.c.l.b16 %v335
      %v500 = vunpack.c.l.b16 %v336
      %v501 = vunpack.c.l.b16 %v337
      %v502 = vunpack.c.l.b16 %v338
      %v503 = vunpack.c.l.b16 %v339
      %v504 = vunpack.c.l.b16 %v340
      %v505 = vunpack.c.l.b16 %v341
      %v506 = vunpack.c.l.b16 %v342
      %v507 = vunpack.c.l.b16 %v343
      %v508 = vunpack.c.l.b16 %v344
      %v509 = vunpack.c.l.b16 %v345
      %v510 = vunpack.c.l.b16 %v346
      %v511 = vunpack.c.l.b16 %v347
      %v512 = vunpack.c.l.b16 %v348
      %v513 = vunpack.c.l.b16 %v349
      %v514 = vunpack.c.l.b16 %v350
      %v515 = vunpack.c.l.b16 %v351
      %v516 = vunpack.c.l.b16 %v352
      %v517 = vunpack.c.l.b16 %v353
      %v518 = vunpack.c.l.b16 %v354
      %v519 = vunpack.c.l.b16 %v355
      %v520 = vunpack.c.l.b16 %v356
      %v521 = vunpack.c.l.b16 %v357
      %v522 = vunpack.c.l.b16 %v358
      %v523 = vunpack.c.l.b16 %v359
      %v524 = vunpack.c.l.b16 %v360
      %v525 = vunpack.c.l.b16 %v361
      %v526 = vunpack.c.l.b16 %v362
      %v527 = vunpack.c.l.b16 %v363
      %v528 = vunpack.c.l.b16 %v364
      %v529 = vunpack.c.l.b16 %v365
      %v530 = vunpack.c.l.b16 %v366
      %v531 = vunpack.c.l.b16 %v367
      %v532 = vunpack.c.l.b16 %v368
      %v533 = vunpack.c.l.b16 %v369
      %v534 = vunpack.c.l.b16 %v370
      %v535 = vunpack.c.l.b16 %v371
      %v536 = vunpack.c.l.b16 %v372
      %v537 = vunpack.c.l.b16 %v373
      %v538 = vunpack.c.l.b16 %v374
      %v539 = vunpack.c.l.b16 %v375
      %v540 = vunpack.c.l.b16 %v376
      %v541 = vunpack.c.l.b16 %v377
      %v542 = vunpack.c.l.b16 %v378
      %v543 = vunpack.c.l.b16 %v379
      %v544 = vunpack.c.l.b16 %v380
      %v545 = vunpack.c.l.b16 %v381
      %v546 = vunpack.c.l.b16 %v382
      %v547 = vpack.c.b16 %v476, %v475
      %v548 = vpack.c.b16 %v478, %v477
      %v549 = vpack.c.b16 %v480, %v479
      %v550 = vpack.c.b16 %v482, %v481
      %v551 = vpack.c.b16 %v484, %v483
      %v552 = vpack.c.b16 %v486, %v485
      %v553 = vpack.c.b16 %v488, %v487
      %v554 = vpack.c.b16 %v490, %v489
      %v555 = vpack.c.b16 %v492, %v491
      %v556 = vpack.c.b16 %v494, %v493
      %v557 = vpack.c.b16 %v496, %v495
      %v558 = vpack.c.b16 %v498, %v497
      %v559 = vpack.c.b16 %v500, %v499
      %v560 = vpack.c.b16 %v502, %v501
      %v561 = vpack.c.b16 %v504, %v503
      %v562 = vpack.c.b16 %v506, %v505
      %v563 = vpack.c.b16 %v508, %v507
      %v564 = vpack.c.b16 %v510, %v509
      %v565 = vpack.c.b16 %v512, %v511
      %v566 = vpack.c.b16 %v514, %v513
      %v567 = vpack.c.b16 %v516, %v515
      %v568 = vpack.c.b16 %v518, %v517
      %v569 = vpack.c.b16 %v520, %v519
      %v570 = vpack.c.b16 %v522, %v521
      %v571 = vpack.c.b16 %v524, %v523
      %v572 = vpack.c.b16 %v526, %v525
      %v573 = vpack.c.b16 %v528, %v527
      %v574 = vpack.c.b16 %v530, %v529
      %v575 = vpack.c.b16 %v532, %v531
      %v576 = vpack.c.b16 %v534, %v533
      %v577 = vpack.c.b16 %v536, %v535
      %v578 = vpack.c.b16 %v538, %v537
      %v579 = vpack.c.b16 %v540, %v539
      %v580 = vpack.c.b16 %v542, %v541
      %v581 = vpack.c.b16 %v544, %v543
      %v582 = vpack.c.b16 %v546, %v545
      %vm619 = vcmask 523264
      %v621 = vsel %vm619, %v398, 0
      %623 = vmatprep.subr.bf16.mxu0 0
      %624 = vmatpush1.bf16.msra.mxu0 %v554
      %625 = vmatprep.subr.bf16.mxu0 0
      %626 = vmatpush1.bf16.msra.mxu0 %v553
      %627 = vmatprep.subr.bf16.mxu0 0
      %628 = vmatpush1.bf16.msra.mxu0 %v552
      %629 = vmatprep.subr.bf16.mxu0 0
      %630 = vmatpush1.bf16.msra.mxu0 %v551
      %631 = vmatprep.subr.bf16.mxu0 0
      %632 = vmatpush1.bf16.msra.mxu0 %v550
      %633 = vmatprep.subr.bf16.mxu0 0
      %634 = vmatpush1.bf16.msra.mxu0 %v549
      %635 = vmatprep.subr.bf16.mxu0 0
      %636 = vmatpush1.bf16.msra.mxu0 %v548
      %637 = vmatprep.subr.bf16.mxu0 0
      %638 = vmatpush1.bf16.msra.mxu0 %v547
      %639 = vmatprep.subr.bf16.mxu0 0
      %640 = vmatpush2.bf16.msra.mxu0 %v562
      %641 = vmatprep.subr.bf16.mxu0 0
      %642 = vmatpush2.bf16.msra.mxu0 %v561
      %643 = vmatprep.subr.bf16.mxu0 0
      %644 = vmatpush2.bf16.msra.mxu0 %v560
      %645 = vmatprep.subr.bf16.mxu0 0
      %646 = vmatpush2.bf16.msra.mxu0 %v559
      %647 = vmatprep.subr.bf16.mxu0 0
      %648 = vmatpush2.bf16.msra.mxu0 %v558
      %649 = vmatprep.subr.bf16.mxu0 0
      %650 = vmatpush2.bf16.msra.mxu0 %v557
      %651 = vmatprep.subr.bf16.mxu0 0
      %652 = vmatpush2.bf16.msra.mxu0 %v556
      %653 = vmatprep.subr.bf16.mxu0 0
      %654 = vmatpush2.bf16.msra.mxu0 %v555
      %655 = vmatprep.mubr.bf16.mxu0 %v395
      %656 = vmatmul.mubr.bf16.gmra.mxu0 %v394
      %v657 = vpop.f32.mrf.mxu0
      %v658 = vadd.f32 0.0, %v657
      %v659 = vpop.f32.mrf.mxu0
      %v660 = vpop.f32.mrf.mxu0
      %v661 = vpop.f32.mrf.mxu0
      %662 = vdwg.mxu0
      %663 = vmatprep.subr.bf16.mxu0 0
      %664 = vmatpush1.bf16.msra.mxu0 %v570
      %665 = vmatprep.subr.bf16.mxu0 0
      %666 = vmatpush1.bf16.msra.mxu0 %v569
      %667 = vmatprep.subr.bf16.mxu0 0
      %668 = vmatpush1.bf16.msra.mxu0 %v568
      %669 = vmatprep.subr.bf16.mxu0 0
      %670 = vmatpush1.bf16.msra.mxu0 %v567
      %671 = vmatprep.subr.bf16.mxu0 0
      %672 = vmatpush1.bf16.msra.mxu0 %v566
      %673 = vmatprep.subr.bf16.mxu0 0
      %674 = vmatpush1.bf16.msra.mxu0 %v565
      %675 = vmatprep.subr.bf16.mxu0 0
      %676 = vmatpush1.bf16.msra.mxu0 %v564
      %677 = vmatprep.subr.bf16.mxu0 0
      %678 = vmatpush1.bf16.msra.mxu0 %v563
      %679 = vmatprep.subr.bf16.mxu0 0
      %680 = vmatpush2.bf16.msra.mxu0 %v578
      %681 = vmatprep.subr.bf16.mxu0 0
      %682 = vmatpush2.bf16.msra.mxu0 %v577
      %683 = vmatprep.subr.bf16.mxu0 0
      %684 = vmatpush2.bf16.msra.mxu0 %v576
      %685 = vmatprep.subr.bf16.mxu0 0
      %686 = vmatpush2.bf16.msra.mxu0 %v575
      %687 = vmatprep.subr.bf16.mxu0 0
      %688 = vmatpush2.bf16.msra.mxu0 %v574
      %689 = vmatprep.subr.bf16.mxu0 0
      %690 = vmatpush2.bf16.msra.mxu0 %v573
      %691 = vmatprep.subr.bf16.mxu0 0
      %692 = vmatpush2.bf16.msra.mxu0 %v572
      %693 = vmatprep.subr.bf16.mxu0 0
      %694 = vmatpush2.bf16.msra.mxu0 %v571
      %695 = vmatprep.mubr.bf16.mxu0 %v397
      %696 = vmatmul.mubr.bf16.gmra.mxu0 %v396
      %v697 = vpop.f32.mrf.mxu0
      %v698 = vadd.f32 %v658, %v697
      %v699 = vpop.f32.mrf.mxu0
      %v700 = vpop.f32.mrf.mxu0
      %v701 = vpop.f32.mrf.mxu0
      %702 = vdwg.mxu0
      %703 = vmatprep.subr.bf16.mxu0 0
      %704 = vmatpush1.bf16.msra.mxu0 0
      %705 = vmatprep.subr.bf16.mxu0 0
      %706 = vmatpush1.bf16.msra.mxu0 0
      %707 = vmatprep.subr.bf16.mxu0 0
      %708 = vmatpush1.bf16.msra.mxu0 0
      %709 = vmatprep.subr.bf16.mxu0 0
      %710 = vmatpush1.bf16.msra.mxu0 0
      %711 = vmatprep.subr.bf16.mxu0 0
      %712 = vmatpush1.bf16.msra.mxu0 %v582
      %713 = vmatprep.subr.bf16.mxu0 0
      %714 = vmatpush1.bf16.msra.mxu0 %v581
      %715 = vmatprep.subr.bf16.mxu0 0
      %716 = vmatpush1.bf16.msra.mxu0 %v580
      %717 = vmatprep.subr.bf16.mxu0 0
      %718 = vmatpush1.bf16.msra.mxu0 %v579
      %719 = vmatprep.subr.bf16.mxu0 0
      %720 = vmatpush2.bf16.msra.mxu0 0
      %721 = vmatprep.subr.bf16.mxu0 0
      %722 = vmatpush2.bf16.msra.mxu0 0
      %723 = vmatprep.subr.bf16.mxu0 0
      %724 = vmatpush2.bf16.msra.mxu0 0
      %725 = vmatprep.subr.bf16.mxu0 0
      %726 = vmatpush2.bf16.msra.mxu0 0
      %727 = vmatprep.subr.bf16.mxu0 0
      %728 = vmatpush2.bf16.msra.mxu0 0
      %729 = vmatprep.subr.bf16.mxu0 0
      %730 = vmatpush2.bf16.msra.mxu0 0
      %731 = vmatprep.subr.bf16.mxu0 0
      %732 = vmatpush2.bf16.msra.mxu0 0
      %733 = vmatprep.subr.bf16.mxu0 0
      %734 = vmatpush2.bf16.msra.mxu0 0
      %735 = vmatprep.mubr.bf16.mxu0 0
      %736 = vmatmul.mubr.bf16.gmra.mxu0 %v621
      %v737 = vpop.f32.mrf.mxu0
      %v738 = vadd.f32 %v698, %v737
      %v739 = vpop.f32.mrf.mxu0
      %v740 = vpop.f32.mrf.mxu0
      %v741 = vpop.f32.mrf.mxu0
      %742 = vdwg.mxu0
      %v743 = vld [vmem:[%s295] sm:$0xff]
      %v744 = vld [vmem:[%s295 + $0x8] sm:$0xff]
      %v745 = vld [vmem:[%s295 + $0x10] sm:$0xf]
      %v749 = vunpack.c.l.b16 %v743
      %v750 = vunpack.c.h.b16 %v743
      %v751 = vunpack.c.l.b16 %v744
      %v752 = vunpack.c.h.b16 %v744
      %v753 = vunpack.c.l.b16 %v745
      %v754 = vpack.c.b16 %v749, %v749
      %v755 = vpack.c.b16 %v750, %v750
      %v756 = vpack.c.b16 %v751, %v751
      %v757 = vpack.c.b16 %v752, %v752
      %v758 = vpack.c.b16 %v753, %v753
      %v764 = vsel %vm619, %v758, 0
      %766 = vmatprep.subr.bf16.mxu0 0
      %767 = vmatpush1.bf16.msra.mxu0 %v554
      %768 = vmatprep.subr.bf16.mxu0 0
      %769 = vmatpush1.bf16.msra.mxu0 %v553
      %770 = vmatprep.subr.bf16.mxu0 0
      %771 = vmatpush1.bf16.msra.mxu0 %v552
      %772 = vmatprep.subr.bf16.mxu0 0
      %773 = vmatpush1.bf16.msra.mxu0 %v551
      %774 = vmatprep.subr.bf16.mxu0 0
      %775 = vmatpush1.bf16.msra.mxu0 %v550
      %776 = vmatprep.subr.bf16.mxu0 0
      %777 = vmatpush1.bf16.msra.mxu0 %v549
      %778 = vmatprep.subr.bf16.mxu0 0
      %779 = vmatpush1.bf16.msra.mxu0 %v548
      %780 = vmatprep.subr.bf16.mxu0 0
      %781 = vmatpush1.bf16.msra.mxu0 %v547
      %782 = vmatprep.subr.bf16.mxu0 0
      %783 = vmatpush2.bf16.msra.mxu0 %v562
      %784 = vmatprep.subr.bf16.mxu0 0
      %785 = vmatpush2.bf16.msra.mxu0 %v561
      %786 = vmatprep.subr.bf16.mxu0 0
      %787 = vmatpush2.bf16.msra.mxu0 %v560
      %788 = vmatprep.subr.bf16.mxu0 0
      %789 = vmatpush2.bf16.msra.mxu0 %v559
      %790 = vmatprep.subr.bf16.mxu0 0
      %791 = vmatpush2.bf16.msra.mxu0 %v558
      %792 = vmatprep.subr.bf16.mxu0 0
      %793 = vmatpush2.bf16.msra.mxu0 %v557
      %794 = vmatprep.subr.bf16.mxu0 0
      %795 = vmatpush2.bf16.msra.mxu0 %v556
      %796 = vmatprep.subr.bf16.mxu0 0
      %797 = vmatpush2.bf16.msra.mxu0 %v555
      %798 = vmatprep.mubr.bf16.mxu0 %v755
      %799 = vmatmul.mubr.bf16.gmra.mxu0 %v754
      %v800 = vpop.f32.mrf.mxu0
      %v801 = vadd.f32 0.0, %v800
      %v802 = vpop.f32.mrf.mxu0
      %v803 = vpop.f32.mrf.mxu0
      %v804 = vpop.f32.mrf.mxu0
      %805 = vdwg.mxu0
      %806 = vmatprep.subr.bf16.mxu0 0
      %807 = vmatpush1.bf16.msra.mxu0 %v570
      %808 = vmatprep.subr.bf16.mxu0 0
      %809 = vmatpush1.bf16.msra.mxu0 %v569
      %810 = vmatprep.subr.bf16.mxu0 0
      %811 = vmatpush1.bf16.msra.mxu0 %v568
      %812 = vmatprep.subr.bf16.mxu0 0
      %813 = vmatpush1.bf16.msra.mxu0 %v567
      %814 = vmatprep.subr.bf16.mxu0 0
      %815 = vmatpush1.bf16.msra.mxu0 %v566
      %816 = vmatprep.subr.bf16.mxu0 0
      %817 = vmatpush1.bf16.msra.mxu0 %v565
      %818 = vmatprep.subr.bf16.mxu0 0
      %819 = vmatpush1.bf16.msra.mxu0 %v564
      %820 = vmatprep.subr.bf16.mxu0 0
      %821 = vmatpush1.bf16.msra.mxu0 %v563
      %822 = vmatprep.subr.bf16.mxu0 0
      %823 = vmatpush2.bf16.msra.mxu0 %v578
      %824 = vmatprep.subr.bf16.mxu0 0
      %825 = vmatpush2.bf16.msra.mxu0 %v577
      %826 = vmatprep.subr.bf16.mxu0 0
      %827 = vmatpush2.bf16.msra.mxu0 %v576
      %828 = vmatprep.subr.bf16.mxu0 0
      %829 = vmatpush2.bf16.msra.mxu0 %v575
      %830 = vmatprep.subr.bf16.mxu0 0
      %831 = vmatpush2.bf16.msra.mxu0 %v574
      %832 = vmatprep.subr.bf16.mxu0 0
      %833 = vmatpush2.bf16.msra.mxu0 %v573
      %834 = vmatprep.subr.bf16.mxu0 0
      %835 = vmatpush2.bf16.msra.mxu0 %v572
      %836 = vmatprep.subr.bf16.mxu0 0
      %837 = vmatpush2.bf16.msra.mxu0 %v571
      %838 = vmatprep.mubr.bf16.mxu0 %v757
      %839 = vmatmul.mubr.bf16.gmra.mxu0 %v756
      %v840 = vpop.f32.mrf.mxu0
      %v841 = vadd.f32 %v801, %v840
      %v842 = vpop.f32.mrf.mxu0
      %v843 = vpop.f32.mrf.mxu0
      %v844 = vpop.f32.mrf.mxu0
      %845 = vdwg.mxu0
      %846 = vmatprep.subr.bf16.mxu0 0
      %847 = vmatpush1.bf16.msra.mxu0 0
      %848 = vmatprep.subr.bf16.mxu0 0
      %849 = vmatpush1.bf16.msra.mxu0 0
      %850 = vmatprep.subr.bf16.mxu0 0
      %851 = vmatpush1.bf16.msra.mxu0 0
      %852 = vmatprep.subr.bf16.mxu0 0
      %853 = vmatpush1.bf16.msra.mxu0 0
      %854 = vmatprep.subr.bf16.mxu0 0
      %855 = vmatpush1.bf16.msra.mxu0 %v582
      %856 = vmatprep.subr.bf16.mxu0 0
      %857 = vmatpush1.bf16.msra.mxu0 %v581
      %858 = vmatprep.subr.bf16.mxu0 0
      %859 = vmatpush1.bf16.msra.mxu0 %v580
      %860 = vmatprep.subr.bf16.mxu0 0
      %861 = vmatpush1.bf16.msra.mxu0 %v579
      %862 = vmatprep.subr.bf16.mxu0 0
      %863 = vmatpush2.bf16.msra.mxu0 0
      %864 = vmatprep.subr.bf16.mxu0 0
      %865 = vmatpush2.bf16.msra.mxu0 0
      %866 = vmatprep.subr.bf16.mxu0 0
      %867 = vmatpush2.bf16.msra.mxu0 0
      %868 = vmatprep.subr.bf16.mxu0 0
      %869 = vmatpush2.bf16.msra.mxu0 0
      %870 = vmatprep.subr.bf16.mxu0 0
      %871 = vmatpush2.bf16.msra.mxu0 0
      %872 = vmatprep.subr.bf16.mxu0 0
      %873 = vmatpush2.bf16.msra.mxu0 0
      %874 = vmatprep.subr.bf16.mxu0 0
      %875 = vmatpush2.bf16.msra.mxu0 0
      %876 = vmatprep.subr.bf16.mxu0 0
      %877 = vmatpush2.bf16.msra.mxu0 0
      %878 = vmatprep.mubr.bf16.mxu0 0
      %879 = vmatmul.mubr.bf16.gmra.mxu0 %v764
      %v880 = vpop.f32.mrf.mxu0
      %v881 = vadd.f32 %v841, %v880
      %v882 = vpop.f32.mrf.mxu0
      %v883 = vpop.f32.mrf.mxu0
      %v884 = vpop.f32.mrf.mxu0
      %885 = vdwg.mxu0
      %v886 = vmax.f32 %v738, %v881
      %v887 = vld [vmem:[%s300] sm:$0xff]
      %v888 = vld [vmem:[%s300 + $0x8] sm:$0xff]
      %v889 = vld [vmem:[%s300 + $0x10] sm:$0xf]
      %v893 = vunpack.c.l.b16 %v887
      %v894 = vunpack.c.h.b16 %v887
      %v895 = vunpack.c.l.b16 %v888
      %v896 = vunpack.c.h.b16 %v888
      %v897 = vunpack.c.l.b16 %v889
      %v898 = vpack.c.b16 %v893, %v893
      %v899 = vpack.c.b16 %v894, %v894
      %v900 = vpack.c.b16 %v895, %v895
      %v901 = vpack.c.b16 %v896, %v896
      %v902 = vpack.c.b16 %v897, %v897
      %v908 = vsel %vm619, %v902, 0
      %910 = vmatprep.subr.bf16.mxu0 0
      %911 = vmatpush1.bf16.msra.mxu0 %v554
      %912 = vmatprep.subr.bf16.mxu0 0
      %913 = vmatpush1.bf16.msra.mxu0 %v553
      %914 = vmatprep.subr.bf16.mxu0 0
      %915 = vmatpush1.bf16.msra.mxu0 %v552
      %916 = vmatprep.subr.bf16.mxu0 0
      %917 = vmatpush1.bf16.msra.mxu0 %v551
      %918 = vmatprep.subr.bf16.mxu0 0
      %919 = vmatpush1.bf16.msra.mxu0 %v550
      %920 = vmatprep.subr.bf16.mxu0 0
      %921 = vmatpush1.bf16.msra.mxu0 %v549
      %922 = vmatprep.subr.bf16.mxu0 0
      %923 = vmatpush1.bf16.msra.mxu0 %v548
      %924 = vmatprep.subr.bf16.mxu0 0
      %925 = vmatpush1.bf16.msra.mxu0 %v547
      %926 = vmatprep.subr.bf16.mxu0 0
      %927 = vmatpush2.bf16.msra.mxu0 %v562
      %928 = vmatprep.subr.bf16.mxu0 0
      %929 = vmatpush2.bf16.msra.mxu0 %v561
      %930 = vmatprep.subr.bf16.mxu0 0
      %931 = vmatpush2.bf16.msra.mxu0 %v560
      %932 = vmatprep.subr.bf16.mxu0 0
      %933 = vmatpush2.bf16.msra.mxu0 %v559
      %934 = vmatprep.subr.bf16.mxu0 0
      %935 = vmatpush2.bf16.msra.mxu0 %v558
      %936 = vmatprep.subr.bf16.mxu0 0
      %937 = vmatpush2.bf16.msra.mxu0 %v557
      %938 = vmatprep.subr.bf16.mxu0 0
      %939 = vmatpush2.bf16.msra.mxu0 %v556
      %940 = vmatprep.subr.bf16.mxu0 0
      %941 = vmatpush2.bf16.msra.mxu0 %v555
      %942 = vmatprep.mubr.bf16.mxu0 %v899
      %943 = vmatmul.mubr.bf16.gmra.mxu0 %v898
      %v944 = vpop.f32.mrf.mxu0
      %v945 = vadd.f32 0.0, %v944
      %v946 = vpop.f32.mrf.mxu0
      %v947 = vpop.f32.mrf.mxu0
      %v948 = vpop.f32.mrf.mxu0
      %949 = vdwg.mxu0
      %950 = vmatprep.subr.bf16.mxu0 0
      %951 = vmatpush1.bf16.msra.mxu0 %v570
      %952 = vmatprep.subr.bf16.mxu0 0
      %953 = vmatpush1.bf16.msra.mxu0 %v569
      %954 = vmatprep.subr.bf16.mxu0 0
      %955 = vmatpush1.bf16.msra.mxu0 %v568
      %956 = vmatprep.subr.bf16.mxu0 0
      %957 = vmatpush1.bf16.msra.mxu0 %v567
      %958 = vmatprep.subr.bf16.mxu0 0
      %959 = vmatpush1.bf16.msra.mxu0 %v566
      %960 = vmatprep.subr.bf16.mxu0 0
      %961 = vmatpush1.bf16.msra.mxu0 %v565
      %962 = vmatprep.subr.bf16.mxu0 0
      %963 = vmatpush1.bf16.msra.mxu0 %v564
      %964 = vmatprep.subr.bf16.mxu0 0
      %965 = vmatpush1.bf16.msra.mxu0 %v563
      %966 = vmatprep.subr.bf16.mxu0 0
      %967 = vmatpush2.bf16.msra.mxu0 %v578
      %968 = vmatprep.subr.bf16.mxu0 0
      %969 = vmatpush2.bf16.msra.mxu0 %v577
      %970 = vmatprep.subr.bf16.mxu0 0
      %971 = vmatpush2.bf16.msra.mxu0 %v576
      %972 = vmatprep.subr.bf16.mxu0 0
      %973 = vmatpush2.bf16.msra.mxu0 %v575
      %974 = vmatprep.subr.bf16.mxu0 0
      %975 = vmatpush2.bf16.msra.mxu0 %v574
      %976 = vmatprep.subr.bf16.mxu0 0
      %977 = vmatpush2.bf16.msra.mxu0 %v573
      %978 = vmatprep.subr.bf16.mxu0 0
      %979 = vmatpush2.bf16.msra.mxu0 %v572
      %980 = vmatprep.subr.bf16.mxu0 0
      %981 = vmatpush2.bf16.msra.mxu0 %v571
      %982 = vmatprep.mubr.bf16.mxu0 %v901
      %983 = vmatmul.mubr.bf16.gmra.mxu0 %v900
      %v984 = vpop.f32.mrf.mxu0
      %v985 = vadd.f32 %v945, %v984
      %v986 = vpop.f32.mrf.mxu0
      %v987 = vpop.f32.mrf.mxu0
      %v988 = vpop.f32.mrf.mxu0
      %989 = vdwg.mxu0
      %990 = vmatprep.subr.bf16.mxu0 0
      %991 = vmatpush1.bf16.msra.mxu0 0
      %992 = vmatprep.subr.bf16.mxu0 0
      %993 = vmatpush1.bf16.msra.mxu0 0
      %994 = vmatprep.subr.bf16.mxu0 0
      %995 = vmatpush1.bf16.msra.mxu0 0
      %996 = vmatprep.subr.bf16.mxu0 0
      %997 = vmatpush1.bf16.msra.mxu0 0
      %998 = vmatprep.subr.bf16.mxu0 0
      %999 = vmatpush1.bf16.msra.mxu0 %v582
      %1000 = vmatprep.subr.bf16.mxu0 0
      %1001 = vmatpush1.bf16.msra.mxu0 %v581
      %1002 = vmatprep.subr.bf16.mxu0 0
      %1003 = vmatpush1.bf16.msra.mxu0 %v580
      %1004 = vmatprep.subr.bf16.mxu0 0
      %1005 = vmatpush1.bf16.msra.mxu0 %v579
      %1006 = vmatprep.subr.bf16.mxu0 0
      %1007 = vmatpush2.bf16.msra.mxu0 0
      %1008 = vmatprep.subr.bf16.mxu0 0
      %1009 = vmatpush2.bf16.msra.mxu0 0
      %1010 = vmatprep.subr.bf16.mxu0 0
      %1011 = vmatpush2.bf16.msra.mxu0 0
      %1012 = vmatprep.subr.bf16.mxu0 0
      %1013 = vmatpush2.bf16.msra.mxu0 0
      %1014 = vmatprep.subr.bf16.mxu0 0
      %1015 = vmatpush2.bf16.msra.mxu0 0
      %1016 = vmatprep.subr.bf16.mxu0 0
      %1017 = vmatpush2.bf16.msra.mxu0 0
      %1018 = vmatprep.subr.bf16.mxu0 0
      %1019 = vmatpush2.bf16.msra.mxu0 0
      %1020 = vmatprep.subr.bf16.mxu0 0
      %1021 = vmatpush2.bf16.msra.mxu0 0
      %1022 = vmatprep.mubr.bf16.mxu0 0
      %1023 = vmatmul.mubr.bf16.gmra.mxu0 %v908
      %v1024 = vpop.f32.mrf.mxu0
      %v1025 = vadd.f32 %v985, %v1024
      %v1026 = vpop.f32.mrf.mxu0
      %v1027 = vpop.f32.mrf.mxu0
      %v1028 = vpop.f32.mrf.mxu0
      %1029 = vdwg.mxu0
      %v1030 = vmax.f32 %v886, %v1025
      %v1031 = vld [vmem:[%s305] sm:$0xff]
      %v1032 = vld [vmem:[%s305 + $0x8] sm:$0xff]
      %v1033 = vld [vmem:[%s305 + $0x10] sm:$0xf]
      %v1037 = vunpack.c.l.b16 %v1031
      %v1038 = vunpack.c.h.b16 %v1031
      %v1039 = vunpack.c.l.b16 %v1032
      %v1040 = vunpack.c.h.b16 %v1032
      %v1041 = vunpack.c.l.b16 %v1033
      %v1042 = vpack.c.b16 %v1037, %v1037
      %v1043 = vpack.c.b16 %v1038, %v1038
      %v1044 = vpack.c.b16 %v1039, %v1039
      %v1045 = vpack.c.b16 %v1040, %v1040
      %v1046 = vpack.c.b16 %v1041, %v1041
      %v1052 = vsel %vm619, %v1046, 0
      %1054 = vmatprep.subr.bf16.mxu0 0
      %1055 = vmatpush1.bf16.msra.mxu0 %v554
      %1056 = vmatprep.subr.bf16.mxu0 0
      %1057 = vmatpush1.bf16.msra.mxu0 %v553
      %1058 = vmatprep.subr.bf16.mxu0 0
      %1059 = vmatpush1.bf16.msra.mxu0 %v552
      %1060 = vmatprep.subr.bf16.mxu0 0
      %1061 = vmatpush1.bf16.msra.mxu0 %v551
      %1062 = vmatprep.subr.bf16.mxu0 0
      %1063 = vmatpush1.bf16.msra.mxu0 %v550
      %1064 = vmatprep.subr.bf16.mxu0 0
      %1065 = vmatpush1.bf16.msra.mxu0 %v549
      %1066 = vmatprep.subr.bf16.mxu0 0
      %1067 = vmatpush1.bf16.msra.mxu0 %v548
      %1068 = vmatprep.subr.bf16.mxu0 0
      %1069 = vmatpush1.bf16.msra.mxu0 %v547
      %1070 = vmatprep.subr.bf16.mxu0 0
      %1071 = vmatpush2.bf16.msra.mxu0 %v562
      %1072 = vmatprep.subr.bf16.mxu0 0
      %1073 = vmatpush2.bf16.msra.mxu0 %v561
      %1074 = vmatprep.subr.bf16.mxu0 0
      %1075 = vmatpush2.bf16.msra.mxu0 %v560
      %1076 = vmatprep.subr.bf16.mxu0 0
      %1077 = vmatpush2.bf16.msra.mxu0 %v559
      %1078 = vmatprep.subr.bf16.mxu0 0
      %1079 = vmatpush2.bf16.msra.mxu0 %v558
      %1080 = vmatprep.subr.bf16.mxu0 0
      %1081 = vmatpush2.bf16.msra.mxu0 %v557
      %1082 = vmatprep.subr.bf16.mxu0 0
      %1083 = vmatpush2.bf16.msra.mxu0 %v556
      %1084 = vmatprep.subr.bf16.mxu0 0
      %1085 = vmatpush2.bf16.msra.mxu0 %v555
      %1086 = vmatprep.mubr.bf16.mxu0 %v1043
      %1087 = vmatmul.mubr.bf16.gmra.mxu0 %v1042
      %v1088 = vpop.f32.mrf.mxu0
      %v1089 = vadd.f32 0.0, %v1088
      %v1090 = vpop.f32.mrf.mxu0
      %v1091 = vpop.f32.mrf.mxu0
      %v1092 = vpop.f32.mrf.mxu0
      %1093 = vdwg.mxu0
      %1094 = vmatprep.subr.bf16.mxu0 0
      %1095 = vmatpush1.bf16.msra.mxu0 %v570
      %1096 = vmatprep.subr.bf16.mxu0 0
      %1097 = vmatpush1.bf16.msra.mxu0 %v569
      %1098 = vmatprep.subr.bf16.mxu0 0
      %1099 = vmatpush1.bf16.msra.mxu0 %v568
      %1100 = vmatprep.subr.bf16.mxu0 0
      %1101 = vmatpush1.bf16.msra.mxu0 %v567
      %1102 = vmatprep.subr.bf16.mxu0 0
      %1103 = vmatpush1.bf16.msra.mxu0 %v566
      %1104 = vmatprep.subr.bf16.mxu0 0
      %1105 = vmatpush1.bf16.msra.mxu0 %v565
      %1106 = vmatprep.subr.bf16.mxu0 0
      %1107 = vmatpush1.bf16.msra.mxu0 %v564
      %1108 = vmatprep.subr.bf16.mxu0 0
      %1109 = vmatpush1.bf16.msra.mxu0 %v563
      %1110 = vmatprep.subr.bf16.mxu0 0
      %1111 = vmatpush2.bf16.msra.mxu0 %v578
      %1112 = vmatprep.subr.bf16.mxu0 0
      %1113 = vmatpush2.bf16.msra.mxu0 %v577
      %1114 = vmatprep.subr.bf16.mxu0 0
      %1115 = vmatpush2.bf16.msra.mxu0 %v576
      %1116 = vmatprep.subr.bf16.mxu0 0
      %1117 = vmatpush2.bf16.msra.mxu0 %v575
      %1118 = vmatprep.subr.bf16.mxu0 0
      %1119 = vmatpush2.bf16.msra.mxu0 %v574
      %1120 = vmatprep.subr.bf16.mxu0 0
      %1121 = vmatpush2.bf16.msra.mxu0 %v573
      %1122 = vmatprep.subr.bf16.mxu0 0
      %1123 = vmatpush2.bf16.msra.mxu0 %v572
      %1124 = vmatprep.subr.bf16.mxu0 0
      %1125 = vmatpush2.bf16.msra.mxu0 %v571
      %1126 = vmatprep.mubr.bf16.mxu0 %v1045
      %1127 = vmatmul.mubr.bf16.gmra.mxu0 %v1044
      %v1128 = vpop.f32.mrf.mxu0
      %v1129 = vadd.f32 %v1089, %v1128
      %v1130 = vpop.f32.mrf.mxu0
      %v1131 = vpop.f32.mrf.mxu0
      %v1132 = vpop.f32.mrf.mxu0
      %1133 = vdwg.mxu0
      %1134 = vmatprep.subr.bf16.mxu0 0
      %1135 = vmatpush1.bf16.msra.mxu0 0
      %1136 = vmatprep.subr.bf16.mxu0 0
      %1137 = vmatpush1.bf16.msra.mxu0 0
      %1138 = vmatprep.subr.bf16.mxu0 0
      %1139 = vmatpush1.bf16.msra.mxu0 0
      %1140 = vmatprep.subr.bf16.mxu0 0
      %1141 = vmatpush1.bf16.msra.mxu0 0
      %1142 = vmatprep.subr.bf16.mxu0 0
      %1143 = vmatpush1.bf16.msra.mxu0 %v582
      %1144 = vmatprep.subr.bf16.mxu0 0
      %1145 = vmatpush1.bf16.msra.mxu0 %v581
      %1146 = vmatprep.subr.bf16.mxu0 0
      %1147 = vmatpush1.bf16.msra.mxu0 %v580
      %1148 = vmatprep.subr.bf16.mxu0 0
      %1149 = vmatpush1.bf16.msra.mxu0 %v579
      %1150 = vmatprep.subr.bf16.mxu0 0
      %1151 = vmatpush2.bf16.msra.mxu0 0
      %1152 = vmatprep.subr.bf16.mxu0 0
      %1153 = vmatpush2.bf16.msra.mxu0 0
      %1154 = vmatprep.subr.bf16.mxu0 0
      %1155 = vmatpush2.bf16.msra.mxu0 0
      %1156 = vmatprep.subr.bf16.mxu0 0
      %1157 = vmatpush2.bf16.msra.mxu0 0
      %1158 = vmatprep.subr.bf16.mxu0 0
      %1159 = vmatpush2.bf16.msra.mxu0 0
      %1160 = vmatprep.subr.bf16.mxu0 0
      %1161 = vmatpush2.bf16.msra.mxu0 0
      %1162 = vmatprep.subr.bf16.mxu0 0
      %1163 = vmatpush2.bf16.msra.mxu0 0
      %1164 = vmatprep.subr.bf16.mxu0 0
      %1165 = vmatpush2.bf16.msra.mxu0 0
      %1166 = vmatprep.mubr.bf16.mxu0 0
      %1167 = vmatmul.mubr.bf16.gmra.mxu0 %v1052
      %v1168 = vpop.f32.mrf.mxu0
      %v1169 = vadd.f32 %v1129, %v1168
      %v1170 = vpop.f32.mrf.mxu0
      %v1171 = vpop.f32.mrf.mxu0
      %v1172 = vpop.f32.mrf.mxu0
      %1173 = vdwg.mxu0
      %v1174 = vmax.f32 %v1030, %v1169
      %v1175 = vld [vmem:[%s5] sm:$0x1]
      %v1177 = vlaneseq
      %v1178 = vshrl.u32 %v1177, 7
      %v1179 = vsub.s32 0, %v1178
      %v1180 = vrot.slane %v1175, %v1179
      %v1182 = vadd.f32 %v1174, %v1180
      %v1183 = vmax.f32 %v1182, 0.0
      %1184 = vst [vmem:[%s309] sm:$0xff] %v1183
      %p1185 = scmp.lt.s32.totalorder %s17, 1
      %s1186 = scalar_select %p1185, %s17, 1
      %s1187 = smul.addr %s1186, 8
      %s1188 = scalar_lea.vmem %s6, %s1187
      // Predicated region
      $region45: #{mnist_feature_extractor.5} parent=43 // pred_check
        %p1189 = pneg %p181
      $region46: #{mnist_feature_extractor.5} parent=43 // pred_check_branch
        %1191 = sbr.rel (%p1189) target = $region48
      $region47: #{mnist_feature_extractor.5} parent=43 // pred_region
        _
      $region48: #{mnist_feature_extractor.5} parent=43 // pred_fallthru
        _
    $region44: #{mnist_feature_extractor.5} parent=5 // pred_fallthru
      _
    %p1192 = scmp.le.s32.totalorder 2, %s12
    // Predicated region
    $region49: #{mnist_feature_extractor.5} parent=5 // pred_check
      %p1193 = pneg %p1192
    $region50: #{mnist_feature_extractor.5} parent=5 // pred_check_branch
      %1195 = sbr.rel (%p1193) target = $region52
    $region51: #{mnist_feature_extractor.5} parent=5 // pred_region
      %s1196 = ssub.s32 %s12, 2
      // Predicated region
      $region53: #{mnist_feature_extractor.5} parent=51 // pred_check
        %p1197 = pneg %p187
      $region54: #{mnist_feature_extractor.5} parent=51 // pred_check_branch
        %1199 = sbr.rel (%p1197) target = $region56
      $region55: #{mnist_feature_extractor.5} parent=51 // pred_region
        %p1200 = scmp.lt.s32.totalorder %s18, 1
        %s1201 = scalar_select %p1200, %s18, 1
        %s1202 = smul.addr %s1201, 8
        %s1203 = scalar_lea.vmem %s6, %s1202
      $region56: #{mnist_feature_extractor.5} parent=51 // pred_fallthru
        _
    $region52: #{mnist_feature_extractor.5} parent=5 // pred_fallthru
      _
  $region6: #{mnist_feature_extractor.5} parent=0 // loop_footer
    %s16 = sadd.s32 1, %s12
  $region7: #{mnist_feature_extractor.5} parent=0 // loop_footer_branch
    %11 = sbr.rel target = $region3
  $region8: #{mnist_feature_extractor.5} parent=0 // loop_exit
    _

</llo_original>
